<compile_context>
chip_gen: v7x
topology: tpu7x:2x2x1
jax: 0.10.0
libtpu: 0.0.40
codegen_flags: <defaults>
</compile_context>

<pallas_src>
import jax
import jax.numpy as jnp
from jax import lax
from jax.experimental import pallas as pl
from jax.experimental.pallas import tpu as pltpu


def _layernorm(x, gamma, beta, eps=1e-5):
    # LayerNorm over the last (channel) axis, matching torch.nn.LayerNorm(C)
    # (biased variance).  Centered value hoisted and reused.
    mean = jnp.mean(x, axis=-1, keepdims=True)
    xc = x - mean
    var = jnp.mean(xc * xc, axis=-1, keepdims=True)
    return xc * lax.rsqrt(var + eps) * gamma + beta


def mixffn_kernel(x_ref, w1_ref, b1_ref, wc_ref, bc_ref,
                  g1_ref, be1_ref, g2_ref, be2_ref, g3_ref, be3_ref,
                  w2_ref, b2_ref, o_ref):
    # Hoist all per-channel vectors once (f32) -- JAX does not CSE broadcasts.
    b1 = b1_ref[...].astype(jnp.float32)
    bc = bc_ref[...].astype(jnp.float32)
    g1 = g1_ref[...].astype(jnp.float32)
    be1 = be1_ref[...].astype(jnp.float32)
    g2 = g2_ref[...].astype(jnp.float32)
    be2 = be2_ref[...].astype(jnp.float32)
    g3 = g3_ref[...].astype(jnp.float32)
    be3 = be3_ref[...].astype(jnp.float32)
    b2 = b2_ref[...].astype(jnp.float32)

    x = x_ref[...]                                            # (TM, Fp), MXU dtype

    # lp1: Linear(F -> C), f32 accumulation on the MXU.
    ident = jnp.dot(x, w1_ref[...], preferred_element_type=jnp.float32) + b1

    # MIX_BLOCK: 1x1 conv == per-token linear over channels; keep only two
    # live (TM, C) f32 intermediates (ident, y).
    y = jnp.dot(ident.astype(wc_ref.dtype), wc_ref[...],
                preferred_element_type=jnp.float32) + bc
    y = y + ident                              # identity + conv(X)
    y = _layernorm(y, g1, be1) + ident         # ln1 then + identity
    y = _layernorm(y, g2, be2) + ident         # ln2 then + identity
    y = _layernorm(y, g3, be3) + ident         # ln3 then + identity

    # exact GELU (torch.nn.GELU default, erf based), f32 on the VPU.
    y = 0.5 * y * (1.0 + lax.erf(y * jnp.float32(0.7071067811865476)))

    # lp2: Linear(C -> F)
    out = jnp.dot(y.astype(w2_ref.dtype), w2_ref[...],
                  preferred_element_type=jnp.float32) + b2
    o_ref[...] = out.astype(o_ref.dtype)


def _round_up(v, m):
    return ((v + m - 1) // m) * m


def mixffn_pallas(x, params, *, tm=256, compute_dtype=jnp.bfloat16):
    """x: (B, N, F) with N = resolution**2. Returns (B, N, F)."""
    B, N, F = x.shape
    M = B * N
    C = params["w1"].shape[1]

    # --- lane-dense feature padding (F -> multiple of 128), exact (zeros) ---
    LANE = 128
    Fp = _round_up(F, LANE)
    pad_f = Fp - F

    # --- token tile selection ---
    tm_eff = min(tm, M)
    tm_eff = max(8, (tm_eff // 8) * 8)
    if pl.cdiv(M, tm_eff) < 2 and M >= 16:
        # keep >= 2 grid steps so dimension_semantics=("parallel",) can shard
        # across both TensorCores on v7x.
        tm_eff = max(8, _round_up((M + 1) // 2, 8))
    grid_m = pl.cdiv(M, tm_eff)
    Mp = grid_m * tm_eff

    # --- prepare operands (wrapper-level pad + dtype cast for the MXU) ---
    x2 = x.reshape(M, F)
    if pad_f or Mp != M:
        x2 = jnp.pad(x2, ((0, Mp - M), (0, pad_f)))
    x2 = x2.astype(compute_dtype)

    w1 = params["w1"]
    w2 = params["w2"]
    b2 = params["b2"]
    if pad_f:
        w1 = jnp.pad(w1, ((0, pad_f), (0, 0)))     # extra input rows are zero
        w2 = jnp.pad(w2, ((0, 0), (0, pad_f)))     # extra output cols are zero
        b2 = jnp.pad(b2, ((0, 0), (0, pad_f)))
    w1 = w1.astype(compute_dtype)
    wc = params["wc"].astype(compute_dtype)
    w2 = w2.astype(compute_dtype)

    # --- VMEM budget (weights single-buffered, in/out double-buffered, plus
    #     the live f32 intermediates), with 2x headroom ---
    bpe_cd = jnp.dtype(compute_dtype).itemsize
    bpe_io = jnp.dtype(x.dtype).itemsize
    weight_bytes = (Fp * C + C * C + C * Fp) * bpe_cd + (8 * C + Fp) * 4
    io_bytes = 2 * tm_eff * Fp * (bpe_cd + bpe_io)
    interm_bytes = 4 * tm_eff * C * 4
    vmem_limit = int(min(96 * 2**20,
                         max(16 * 2**20,
                             2 * (weight_bytes + io_bytes + interm_bytes))))

    def run(single_buffer_weights):
        if single_buffer_weights:
            def const_spec(shape):
                nd = len(shape)
                return pl.BlockSpec(shape, lambda i: (0,) * nd,
                                    pipeline_mode=pl.Buffered(1))
        else:
            def const_spec(shape):
                nd = len(shape)
                return pl.BlockSpec(shape, lambda i: (0,) * nd)

        in_specs = [
            pl.BlockSpec((tm_eff, Fp), lambda i: (i, 0)),   # x tile
            const_spec((Fp, C)), const_spec((1, C)),        # lp1
            const_spec((C, C)), const_spec((1, C)),         # 1x1 conv
            const_spec((1, C)), const_spec((1, C)),         # ln1 gamma/beta
            const_spec((1, C)), const_spec((1, C)),         # ln2
            const_spec((1, C)), const_spec((1, C)),         # ln3
            const_spec((C, Fp)), const_spec((1, Fp)),       # lp2
        ]

        return pl.pallas_call(
            mixffn_kernel,
            out_shape=jax.ShapeDtypeStruct((Mp, Fp), x.dtype),
            grid=(grid_m,),
            in_specs=in_specs,
            out_specs=pl.BlockSpec((tm_eff, Fp), lambda i: (i, 0)),
            compiler_params=pltpu.CompilerParams(
                dimension_semantics=("parallel",),
                vmem_limit_bytes=vmem_limit,
            ),
        )(x2,
          w1, params["b1"],
          wc, params["bc"],
          params["g1"], params["be1"],
          params["g2"], params["be2"],
          params["g3"], params["be3"],
          w2, b2)

    try:
        out = run(True)
    except Exception:
        # Fallback for jax builds where pipeline_mode=pl.Buffered(1) is not
        # accepted by the classic pallas_call pipeline.
        out = run(False)

    return out[:M, :F].reshape(B, N, F)


def mixffn_reference(x, p, compute_dtype=jnp.float32):
    """Pure-JAX reference matching the PyTorch forward semantics.

    compute_dtype controls the matmul operand dtype (f32 accumulation),
    mirroring the kernel's bf16-MXU / f32-accumulate path when set to bf16.
    """
    cd = compute_dtype

    def mm(a, w):
        return jnp.dot(a.astype(cd), w.astype(cd),
                       preferred_element_type=jnp.float32)

    h = mm(x, p["w1"]) + p["b1"]
    ident = h
    y = mm(h, p["wc"]) + p["bc"] + ident
    y = _layernorm(y, p["g1"], p["be1"]) + ident
    y = _layernorm(y, p["g2"], p["be2"]) + ident
    y = _layernorm(y, p["g3"], p["be3"]) + ident
    y = 0.5 * y * (1.0 + lax.erf(y * jnp.float32(0.7071067811865476)))
    return mm(y, p["w2"]) + p["b2"]


def make_params(key, in_features, mlp_ratio):
    F = in_features
    C = in_features * mlp_ratio
    ks = jax.random.split(key, 12)
    scale1 = 1.0 / jnp.sqrt(F)
    scalec = 1.0 / jnp.sqrt(C)
    # Weights stored as (in, out): y = x @ W + b (transposed vs. torch storage).
    return {
        "w1": jax.random.normal(ks[0], (F, C), jnp.float32) * scale1,
        "b1": jax.random.normal(ks[1], (1, C), jnp.float32) * 0.05,
        "wc": jax.random.normal(ks[2], (C, C), jnp.float32) * scalec,   # conv 1x1
        "bc": jax.random.normal(ks[3], (1, C), jnp.float32) * 0.05,
        "g1": 1.0 + 0.1 * jax.random.normal(ks[4], (1, C), jnp.float32),
        "be1": 0.1 * jax.random.normal(ks[5], (1, C), jnp.float32),
        "g2": 1.0 + 0.1 * jax.random.normal(ks[6], (1, C), jnp.float32),
        "be2": 0.1 * jax.random.normal(ks[7], (1, C), jnp.float32),
        "g3": 1.0 + 0.1 * jax.random.normal(ks[8], (1, C), jnp.float32),
        "be3": 0.1 * jax.random.normal(ks[9], (1, C), jnp.float32),
        "w2": jax.random.normal(ks[10], (C, F), jnp.float32) * scalec,
        "b2": jax.random.normal(ks[11], (1, F), jnp.float32) * 0.05,
    }


if __name__ == "__main__":
    key = jax.random.PRNGKey(0)
    batch, resolution, in_features, mlp_ratio = 2, 8, 32, 4
    N = resolution * resolution            # tokens per image = h*w
    k_x, k_p = jax.random.split(key)

    x = jax.random.normal(k_x, (batch, N, in_features), jnp.float32)
    params = make_params(k_p, in_features, mlp_ratio)

    # 1) f32 path: exact check of the fused kernel's semantics.
    out_f32 = jax.block_until_ready(
        mixffn_pallas(x, params, compute_dtype=jnp.float32))
    ref_f32 = mixffn_reference(x, params, compute_dtype=jnp.float32)
    assert out_f32.shape == (batch, N, in_features)
    assert jnp.allclose(out_f32, ref_f32, rtol=1e-4, atol=1e-4), \
        "f32 path mismatch vs reference"

    # 2) default bf16-MXU path (the perf configuration): check against a
    #    matched bf16-matmul reference (tight) and full-f32 semantics (loose).
    out_bf = jax.block_until_ready(mixffn_pallas(x, params))
    ref_bf = mixffn_reference(x, params, compute_dtype=jnp.bfloat16)
    assert out_bf.shape == (batch, N, in_features)
    assert jnp.allclose(out_bf, ref_bf, rtol=2e-3, atol=2e-3), \
        "bf16 path mismatch vs matched bf16 reference"
    assert jnp.allclose(out_bf, ref_f32, rtol=1e-1, atol=2e-1), \
        "bf16 path drifted too far from f32 semantics"

    print("KERNEL_OK")
</pallas_src>

<mosaic_0001>
module attributes {stable_mosaic.version = 11 : i64} {
  func.func @mixffn_kernel(%arg0: i32, %arg1: memref<64x128xf32, #tpu.memory_space<vmem>>, %arg2: memref<128x128xf32, #tpu.memory_space<vmem>>, %arg3: memref<1x128xf32, #tpu.memory_space<vmem>>, %arg4: memref<128x128xf32, #tpu.memory_space<vmem>>, %arg5: memref<1x128xf32, #tpu.memory_space<vmem>>, %arg6: memref<1x128xf32, #tpu.memory_space<vmem>>, %arg7: memref<1x128xf32, #tpu.memory_space<vmem>>, %arg8: memref<1x128xf32, #tpu.memory_space<vmem>>, %arg9: memref<1x128xf32, #tpu.memory_space<vmem>>, %arg10: memref<1x128xf32, #tpu.memory_space<vmem>>, %arg11: memref<1x128xf32, #tpu.memory_space<vmem>>, %arg12: memref<128x128xf32, #tpu.memory_space<vmem>>, %arg13: memref<1x128xf32, #tpu.memory_space<vmem>>, %arg14: memref<64x128xf32, #tpu.memory_space<vmem>>) attributes {dimension_semantics = [#tpu.dimension_semantics<parallel>], iteration_bounds = array<i64: 2>, scalar_prefetch = 0 : i64, scratch_operands = 0 : i64, tpu.core_type = #tpu.core_type<tc>, window_params = [{transform_indices = @transform_0, window_bounds = array<i64: 64, 128>}, {pipeline_mode = #tpu.pipeline_mode<synchronous>, transform_indices = @transform_1, window_bounds = array<i64: 128, 128>}, {pipeline_mode = #tpu.pipeline_mode<synchronous>, transform_indices = @transform_2, window_bounds = array<i64: 1, 128>}, {pipeline_mode = #tpu.pipeline_mode<synchronous>, transform_indices = @transform_3, window_bounds = array<i64: 128, 128>}, {pipeline_mode = #tpu.pipeline_mode<synchronous>, transform_indices = @transform_4, window_bounds = array<i64: 1, 128>}, {pipeline_mode = #tpu.pipeline_mode<synchronous>, transform_indices = @transform_5, window_bounds = array<i64: 1, 128>}, {pipeline_mode = #tpu.pipeline_mode<synchronous>, transform_indices = @transform_6, window_bounds = array<i64: 1, 128>}, {pipeline_mode = #tpu.pipeline_mode<synchronous>, transform_indices = @transform_7, window_bounds = array<i64: 1, 128>}, {pipeline_mode = #tpu.pipeline_mode<synchronous>, transform_indices = @transform_8, window_bounds = array<i64: 1, 128>}, {pipeline_mode = #tpu.pipeline_mode<synchronous>, transform_indices = @transform_9, window_bounds = array<i64: 1, 128>}, {pipeline_mode = #tpu.pipeline_mode<synchronous>, transform_indices = @transform_10, window_bounds = array<i64: 1, 128>}, {pipeline_mode = #tpu.pipeline_mode<synchronous>, transform_indices = @transform_11, window_bounds = array<i64: 128, 128>}, {pipeline_mode = #tpu.pipeline_mode<synchronous>, transform_indices = @transform_12, window_bounds = array<i64: 1, 128>}, {transform_indices = @transform_13, window_bounds = array<i64: 64, 128>}]} {
    %c0 = arith.constant 0 : index
    %c0_0 = arith.constant 0 : index
    %0 = vector.load %arg3[%c0, %c0_0] : memref<1x128xf32, #tpu.memory_space<vmem>>, vector<1x128xf32>
    %c0_1 = arith.constant 0 : index
    %c0_2 = arith.constant 0 : index
    %1 = vector.load %arg5[%c0_1, %c0_2] : memref<1x128xf32, #tpu.memory_space<vmem>>, vector<1x128xf32>
    %c0_3 = arith.constant 0 : index
    %c0_4 = arith.constant 0 : index
    %2 = vector.load %arg6[%c0_3, %c0_4] : memref<1x128xf32, #tpu.memory_space<vmem>>, vector<1x128xf32>
    %c0_5 = arith.constant 0 : index
    %c0_6 = arith.constant 0 : index
    %3 = vector.load %arg7[%c0_5, %c0_6] : memref<1x128xf32, #tpu.memory_space<vmem>>, vector<1x128xf32>
    %c0_7 = arith.constant 0 : index
    %c0_8 = arith.constant 0 : index
    %4 = vector.load %arg8[%c0_7, %c0_8] : memref<1x128xf32, #tpu.memory_space<vmem>>, vector<1x128xf32>
    %c0_9 = arith.constant 0 : index
    %c0_10 = arith.constant 0 : index
    %5 = vector.load %arg9[%c0_9, %c0_10] : memref<1x128xf32, #tpu.memory_space<vmem>>, vector<1x128xf32>
    %c0_11 = arith.constant 0 : index
    %c0_12 = arith.constant 0 : index
    %6 = vector.load %arg10[%c0_11, %c0_12] : memref<1x128xf32, #tpu.memory_space<vmem>>, vector<1x128xf32>
    %c0_13 = arith.constant 0 : index
    %c0_14 = arith.constant 0 : index
    %7 = vector.load %arg11[%c0_13, %c0_14] : memref<1x128xf32, #tpu.memory_space<vmem>>, vector<1x128xf32>
    %c0_15 = arith.constant 0 : index
    %c0_16 = arith.constant 0 : index
    %8 = vector.load %arg13[%c0_15, %c0_16] : memref<1x128xf32, #tpu.memory_space<vmem>>, vector<1x128xf32>
    %c0_17 = arith.constant 0 : index
    %c0_18 = arith.constant 0 : index
    %9 = vector.load %arg1[%c0_17, %c0_18] : memref<64x128xf32, #tpu.memory_space<vmem>>, vector<64x128xf32>
    %c0_19 = arith.constant 0 : index
    %c0_20 = arith.constant 0 : index
    %10 = vector.load %arg2[%c0_19, %c0_20] : memref<128x128xf32, #tpu.memory_space<vmem>>, vector<128x128xf32>
    %cst = arith.constant dense<0.000000e+00> : vector<64x128xf32>
    %11 = tpu.matmul %9, %10, %cst {dimension_numbers = #tpu.dot_dimension_numbers<[1], [0], [0], [1], [0, 0, 1, 1], [], []>} : vector<64x128xf32>, vector<128x128xf32>, vector<64x128xf32> -> vector<64x128xf32>
    %12 = vector.broadcast %0 : vector<1x128xf32> to vector<64x128xf32>
    %13 = arith.addf %11, %12 : vector<64x128xf32>
    %c0_21 = arith.constant 0 : index
    %c0_22 = arith.constant 0 : index
    %14 = vector.load %arg4[%c0_21, %c0_22] : memref<128x128xf32, #tpu.memory_space<vmem>>, vector<128x128xf32>
    %cst_23 = arith.constant dense<0.000000e+00> : vector<64x128xf32>
    %15 = tpu.matmul %13, %14, %cst_23 {dimension_numbers = #tpu.dot_dimension_numbers<[1], [0], [0], [1], [0, 0, 1, 1], [], []>} : vector<64x128xf32>, vector<128x128xf32>, vector<64x128xf32> -> vector<64x128xf32>
    %16 = vector.broadcast %1 : vector<1x128xf32> to vector<64x128xf32>
    %17 = arith.addf %15, %16 : vector<64x128xf32>
    %18 = arith.addf %17, %13 : vector<64x128xf32>
    %cst_24 = arith.constant dense<0.000000e+00> : vector<64xf32>
    %19 = vector.multi_reduction <add>, %18, %cst_24 [1] : vector<64x128xf32> to vector<64xf32>
    %20 = vector.shape_cast %19 : vector<64xf32> to vector<64x1xf32>
    %cst_25 = arith.constant 1.280000e+02 : f32
    %21 = vector.broadcast %cst_25 : f32 to vector<64x1xf32>
    %22 = arith.divf %20, %21 : vector<64x1xf32>
    %23 = vector.broadcast %22 : vector<64x1xf32> to vector<64x128xf32>
    %24 = arith.subf %18, %23 : vector<64x128xf32>
    %25 = arith.mulf %24, %24 : vector<64x128xf32>
    %cst_26 = arith.constant dense<0.000000e+00> : vector<64xf32>
    %26 = vector.multi_reduction <add>, %25, %cst_26 [1] : vector<64x128xf32> to vector<64xf32>
    %27 = vector.shape_cast %26 : vector<64xf32> to vector<64x1xf32>
    %cst_27 = arith.constant 1.280000e+02 : f32
    %28 = vector.broadcast %cst_27 : f32 to vector<64x1xf32>
    %29 = arith.divf %27, %28 : vector<64x1xf32>
    %cst_28 = arith.constant 9.99999974E-6 : f32
    %30 = vector.broadcast %cst_28 : f32 to vector<64x1xf32>
    %31 = arith.addf %29, %30 : vector<64x1xf32>
    %32 = math.rsqrt %31 : vector<64x1xf32>
    %33 = vector.broadcast %32 : vector<64x1xf32> to vector<64x128xf32>
    %34 = arith.mulf %24, %33 : vector<64x128xf32>
    %35 = vector.broadcast %2 : vector<1x128xf32> to vector<64x128xf32>
    %36 = arith.mulf %34, %35 : vector<64x128xf32>
    %37 = vector.broadcast %3 : vector<1x128xf32> to vector<64x128xf32>
    %38 = arith.addf %36, %37 : vector<64x128xf32>
    %39 = arith.addf %38, %13 : vector<64x128xf32>
    %cst_29 = arith.constant dense<0.000000e+00> : vector<64xf32>
    %40 = vector.multi_reduction <add>, %39, %cst_29 [1] : vector<64x128xf32> to vector<64xf32>
    %41 = vector.shape_cast %40 : vector<64xf32> to vector<64x1xf32>
    %cst_30 = arith.constant 1.280000e+02 : f32
    %42 = vector.broadcast %cst_30 : f32 to vector<64x1xf32>
    %43 = arith.divf %41, %42 : vector<64x1xf32>
    %44 = vector.broadcast %43 : vector<64x1xf32> to vector<64x128xf32>
    %45 = arith.subf %39, %44 : vector<64x128xf32>
    %46 = arith.mulf %45, %45 : vector<64x128xf32>
    %cst_31 = arith.constant dense<0.000000e+00> : vector<64xf32>
    %47 = vector.multi_reduction <add>, %46, %cst_31 [1] : vector<64x128xf32> to vector<64xf32>
    %48 = vector.shape_cast %47 : vector<64xf32> to vector<64x1xf32>
    %cst_32 = arith.constant 1.280000e+02 : f32
    %49 = vector.broadcast %cst_32 : f32 to vector<64x1xf32>
    %50 = arith.divf %48, %49 : vector<64x1xf32>
    %cst_33 = arith.constant 9.99999974E-6 : f32
    %51 = vector.broadcast %cst_33 : f32 to vector<64x1xf32>
    %52 = arith.addf %50, %51 : vector<64x1xf32>
    %53 = math.rsqrt %52 : vector<64x1xf32>
    %54 = vector.broadcast %53 : vector<64x1xf32> to vector<64x128xf32>
    %55 = arith.mulf %45, %54 : vector<64x128xf32>
    %56 = vector.broadcast %4 : vector<1x128xf32> to vector<64x128xf32>
    %57 = arith.mulf %55, %56 : vector<64x128xf32>
    %58 = vector.broadcast %5 : vector<1x128xf32> to vector<64x128xf32>
    %59 = arith.addf %57, %58 : vector<64x128xf32>
    %60 = arith.addf %59, %13 : vector<64x128xf32>
    %cst_34 = arith.constant dense<0.000000e+00> : vector<64xf32>
    %61 = vector.multi_reduction <add>, %60, %cst_34 [1] : vector<64x128xf32> to vector<64xf32>
    %62 = vector.shape_cast %61 : vector<64xf32> to vector<64x1xf32>
    %cst_35 = arith.constant 1.280000e+02 : f32
    %63 = vector.broadcast %cst_35 : f32 to vector<64x1xf32>
    %64 = arith.divf %62, %63 : vector<64x1xf32>
    %65 = vector.broadcast %64 : vector<64x1xf32> to vector<64x128xf32>
    %66 = arith.subf %60, %65 : vector<64x128xf32>
    %67 = arith.mulf %66, %66 : vector<64x128xf32>
    %cst_36 = arith.constant dense<0.000000e+00> : vector<64xf32>
    %68 = vector.multi_reduction <add>, %67, %cst_36 [1] : vector<64x128xf32> to vector<64xf32>
    %69 = vector.shape_cast %68 : vector<64xf32> to vector<64x1xf32>
    %cst_37 = arith.constant 1.280000e+02 : f32
    %70 = vector.broadcast %cst_37 : f32 to vector<64x1xf32>
    %71 = arith.divf %69, %70 : vector<64x1xf32>
    %cst_38 = arith.constant 9.99999974E-6 : f32
    %72 = vector.broadcast %cst_38 : f32 to vector<64x1xf32>
    %73 = arith.addf %71, %72 : vector<64x1xf32>
    %74 = math.rsqrt %73 : vector<64x1xf32>
    %75 = vector.broadcast %74 : vector<64x1xf32> to vector<64x128xf32>
    %76 = arith.mulf %66, %75 : vector<64x128xf32>
    %77 = vector.broadcast %6 : vector<1x128xf32> to vector<64x128xf32>
    %78 = arith.mulf %76, %77 : vector<64x128xf32>
    %79 = vector.broadcast %7 : vector<1x128xf32> to vector<64x128xf32>
    %80 = arith.addf %78, %79 : vector<64x128xf32>
    %81 = arith.addf %80, %13 : vector<64x128xf32>
    %cst_39 = arith.constant 5.000000e-01 : f32
    %82 = vector.broadcast %cst_39 : f32 to vector<64x128xf32>
    %83 = arith.mulf %82, %81 : vector<64x128xf32>
    %cst_40 = arith.constant 0.707106769 : f32
    %84 = vector.broadcast %cst_40 : f32 to vector<64x128xf32>
    %85 = arith.mulf %81, %84 : vector<64x128xf32>
    %86 = math.erf %85 : vector<64x128xf32>
    %cst_41 = arith.constant 1.000000e+00 : f32
    %87 = vector.broadcast %cst_41 : f32 to vector<64x128xf32>
    %88 = arith.addf %87, %86 : vector<64x128xf32>
    %89 = arith.mulf %83, %88 : vector<64x128xf32>
    %c0_42 = arith.constant 0 : index
    %c0_43 = arith.constant 0 : index
    %90 = vector.load %arg12[%c0_42, %c0_43] : memref<128x128xf32, #tpu.memory_space<vmem>>, vector<128x128xf32>
    %cst_44 = arith.constant dense<0.000000e+00> : vector<64x128xf32>
    %91 = tpu.matmul %89, %90, %cst_44 {dimension_numbers = #tpu.dot_dimension_numbers<[1], [0], [0], [1], [0, 0, 1, 1], [], []>} : vector<64x128xf32>, vector<128x128xf32>, vector<64x128xf32> -> vector<64x128xf32>
    %92 = vector.broadcast %8 : vector<1x128xf32> to vector<64x128xf32>
    %93 = arith.addf %91, %92 : vector<64x128xf32>
    %c0_45 = arith.constant 0 : index
    %c0_46 = arith.constant 0 : index
    %94 = vector.load %arg14[%c0_45, %c0_46] : memref<64x128xf32, #tpu.memory_space<vmem>>, vector<64x128xf32>
    tpu.vector_store %arg14[%c0_45, %c0_46], %93 {strides = array<i32>} : memref<64x128xf32, #tpu.memory_space<vmem>>, vector<64x128xf32>,
    return
  }
  func.func @transform_0(%arg0: i32) -> (i32, i32) {
    %c0_i32 = arith.constant 0 : i32
    %c0_i32_0 = arith.constant 0 : i32
    return %arg0, %c0_i32 : i32, i32
  }
  func.func @transform_1(%arg0: i32) -> (i32, i32) {
    %c0_i32 = arith.constant 0 : i32
    %c0_i32_0 = arith.constant 0 : i32
    %c0_i32_1 = arith.constant 0 : i32
    return %c0_i32, %c0_i32_0 : i32, i32
  }
  func.func @transform_2(%arg0: i32) -> (i32, i32) {
    %c0_i32 = arith.constant 0 : i32
    %c0_i32_0 = arith.constant 0 : i32
    %c0_i32_1 = arith.constant 0 : i32
    return %c0_i32, %c0_i32_0 : i32, i32
  }
  func.func @transform_3(%arg0: i32) -> (i32, i32) {
    %c0_i32 = arith.constant 0 : i32
    %c0_i32_0 = arith.constant 0 : i32
    %c0_i32_1 = arith.constant 0 : i32
    return %c0_i32, %c0_i32_0 : i32, i32
  }
  func.func @transform_4(%arg0: i32) -> (i32, i32) {
    %c0_i32 = arith.constant 0 : i32
    %c0_i32_0 = arith.constant 0 : i32
    %c0_i32_1 = arith.constant 0 : i32
    return %c0_i32, %c0_i32_0 : i32, i32
  }
  func.func @transform_5(%arg0: i32) -> (i32, i32) {
    %c0_i32 = arith.constant 0 : i32
    %c0_i32_0 = arith.constant 0 : i32
    %c0_i32_1 = arith.constant 0 : i32
    return %c0_i32, %c0_i32_0 : i32, i32
  }
  func.func @transform_6(%arg0: i32) -> (i32, i32) {
    %c0_i32 = arith.constant 0 : i32
    %c0_i32_0 = arith.constant 0 : i32
    %c0_i32_1 = arith.constant 0 : i32
    return %c0_i32, %c0_i32_0 : i32, i32
  }
  func.func @transform_7(%arg0: i32) -> (i32, i32) {
    %c0_i32 = arith.constant 0 : i32
    %c0_i32_0 = arith.constant 0 : i32
    %c0_i32_1 = arith.constant 0 : i32
    return %c0_i32, %c0_i32_0 : i32, i32
  }
  func.func @transform_8(%arg0: i32) -> (i32, i32) {
    %c0_i32 = arith.constant 0 : i32
    %c0_i32_0 = arith.constant 0 : i32
    %c0_i32_1 = arith.constant 0 : i32
    return %c0_i32, %c0_i32_0 : i32, i32
  }
  func.func @transform_9(%arg0: i32) -> (i32, i32) {
    %c0_i32 = arith.constant 0 : i32
    %c0_i32_0 = arith.constant 0 : i32
    %c0_i32_1 = arith.constant 0 : i32
    return %c0_i32, %c0_i32_0 : i32, i32
  }
  func.func @transform_10(%arg0: i32) -> (i32, i32) {
    %c0_i32 = arith.constant 0 : i32
    %c0_i32_0 = arith.constant 0 : i32
    %c0_i32_1 = arith.constant 0 : i32
    return %c0_i32, %c0_i32_0 : i32, i32
  }
  func.func @transform_11(%arg0: i32) -> (i32, i32) {
    %c0_i32 = arith.constant 0 : i32
    %c0_i32_0 = arith.constant 0 : i32
    %c0_i32_1 = arith.constant 0 : i32
    return %c0_i32, %c0_i32_0 : i32, i32
  }
  func.func @transform_12(%arg0: i32) -> (i32, i32) {
    %c0_i32 = arith.constant 0 : i32
    %c0_i32_0 = arith.constant 0 : i32
    %c0_i32_1 = arith.constant 0 : i32
    return %c0_i32, %c0_i32_0 : i32, i32
  }
  func.func @transform_13(%arg0: i32) -> (i32, i32) {
    %c0_i32 = arith.constant 0 : i32
    %c0_i32_0 = arith.constant 0 : i32
    return %arg0, %c0_i32 : i32, i32
  }
}

module attributes {stable_mosaic.version = 11 : i64} {
  func.func @mixffn_kernel(%arg0: i32, %arg1: memref<64x128xf32, #tpu.memory_space<vmem>>, %arg2: memref<128x128xf32, #tpu.memory_space<vmem>>, %arg3: memref<1x128xf32, #tpu.memory_space<vmem>>, %arg4: memref<128x128xf32, #tpu.memory_space<vmem>>, %arg5: memref<1x128xf32, #tpu.memory_space<vmem>>, %arg6: memref<1x128xf32, #tpu.memory_space<vmem>>, %arg7: memref<1x128xf32, #tpu.memory_space<vmem>>, %arg8: memref<1x128xf32, #tpu.memory_space<vmem>>, %arg9: memref<1x128xf32, #tpu.memory_space<vmem>>, %arg10: memref<1x128xf32, #tpu.memory_space<vmem>>, %arg11: memref<1x128xf32, #tpu.memory_space<vmem>>, %arg12: memref<128x128xf32, #tpu.memory_space<vmem>>, %arg13: memref<1x128xf32, #tpu.memory_space<vmem>>, %arg14: memref<64x128xf32, #tpu.memory_space<vmem>>) attributes {dimension_semantics = [#tpu.dimension_semantics<parallel>], iteration_bounds = array<i64: 2>, scalar_prefetch = 0 : i64, scratch_operands = 0 : i64, tpu.core_type = #tpu.core_type<tc>, window_params = [{transform_indices = @transform_0, window_bounds = array<i64: 64, 128>}, {pipeline_mode = #tpu.pipeline_mode<synchronous>, transform_indices = @transform_1, window_bounds = array<i64: 128, 128>}, {pipeline_mode = #tpu.pipeline_mode<synchronous>, transform_indices = @transform_2, window_bounds = array<i64: 1, 128>}, {pipeline_mode = #tpu.pipeline_mode<synchronous>, transform_indices = @transform_3, window_bounds = array<i64: 128, 128>}, {pipeline_mode = #tpu.pipeline_mode<synchronous>, transform_indices = @transform_4, window_bounds = array<i64: 1, 128>}, {pipeline_mode = #tpu.pipeline_mode<synchronous>, transform_indices = @transform_5, window_bounds = array<i64: 1, 128>}, {pipeline_mode = #tpu.pipeline_mode<synchronous>, transform_indices = @transform_6, window_bounds = array<i64: 1, 128>}, {pipeline_mode = #tpu.pipeline_mode<synchronous>, transform_indices = @transform_7, window_bounds = array<i64: 1, 128>}, {pipeline_mode = #tpu.pipeline_mode<synchronous>, transform_indices = @transform_8, window_bounds = array<i64: 1, 128>}, {pipeline_mode = #tpu.pipeline_mode<synchronous>, transform_indices = @transform_9, window_bounds = array<i64: 1, 128>}, {pipeline_mode = #tpu.pipeline_mode<synchronous>, transform_indices = @transform_10, window_bounds = array<i64: 1, 128>}, {pipeline_mode = #tpu.pipeline_mode<synchronous>, transform_indices = @transform_11, window_bounds = array<i64: 128, 128>}, {pipeline_mode = #tpu.pipeline_mode<synchronous>, transform_indices = @transform_12, window_bounds = array<i64: 1, 128>}, {transform_indices = @transform_13, window_bounds = array<i64: 64, 128>}]} {
    %c0 = arith.constant 0 : index
    %c0_0 = arith.constant 0 : index
    %0 = vector.load %arg3[%c0, %c0_0] : memref<1x128xf32, #tpu.memory_space<vmem>>, vector<1x128xf32>
    %c0_1 = arith.constant 0 : index
    %c0_2 = arith.constant 0 : index
    %1 = vector.load %arg5[%c0_1, %c0_2] : memref<1x128xf32, #tpu.memory_space<vmem>>, vector<1x128xf32>
    %c0_3 = arith.constant 0 : index
    %c0_4 = arith.constant 0 : index
    %2 = vector.load %arg6[%c0_3, %c0_4] : memref<1x128xf32, #tpu.memory_space<vmem>>, vector<1x128xf32>
    %c0_5 = arith.constant 0 : index
    %c0_6 = arith.constant 0 : index
    %3 = vector.load %arg7[%c0_5, %c0_6] : memref<1x128xf32, #tpu.memory_space<vmem>>, vector<1x128xf32>
    %c0_7 = arith.constant 0 : index
    %c0_8 = arith.constant 0 : index
    %4 = vector.load %arg8[%c0_7, %c0_8] : memref<1x128xf32, #tpu.memory_space<vmem>>, vector<1x128xf32>
    %c0_9 = arith.constant 0 : index
    %c0_10 = arith.constant 0 : index
    %5 = vector.load %arg9[%c0_9, %c0_10] : memref<1x128xf32, #tpu.memory_space<vmem>>, vector<1x128xf32>
    %c0_11 = arith.constant 0 : index
    %c0_12 = arith.constant 0 : index
    %6 = vector.load %arg10[%c0_11, %c0_12] : memref<1x128xf32, #tpu.memory_space<vmem>>, vector<1x128xf32>
    %c0_13 = arith.constant 0 : index
    %c0_14 = arith.constant 0 : index
    %7 = vector.load %arg11[%c0_13, %c0_14] : memref<1x128xf32, #tpu.memory_space<vmem>>, vector<1x128xf32>
    %c0_15 = arith.constant 0 : index
    %c0_16 = arith.constant 0 : index
    %8 = vector.load %arg13[%c0_15, %c0_16] : memref<1x128xf32, #tpu.memory_space<vmem>>, vector<1x128xf32>
    %c0_17 = arith.constant 0 : index
    %c0_18 = arith.constant 0 : index
    %9 = vector.load %arg1[%c0_17, %c0_18] : memref<64x128xf32, #tpu.memory_space<vmem>>, vector<64x128xf32>
    %c0_19 = arith.constant 0 : index
    %c0_20 = arith.constant 0 : index
    %10 = vector.load %arg2[%c0_19, %c0_20] : memref<128x128xf32, #tpu.memory_space<vmem>>, vector<128x128xf32>
    %cst = arith.constant dense<0.000000e+00> : vector<64x128xf32>
    %11 = tpu.matmul %9, %10, %cst {dimension_numbers = #tpu.dot_dimension_numbers<[1], [0], [0], [1], [0, 0, 1, 1], [], []>} : vector<64x128xf32>, vector<128x128xf32>, vector<64x128xf32> -> vector<64x128xf32>
    %12 = vector.broadcast %0 : vector<1x128xf32> to vector<64x128xf32>
    %13 = arith.addf %11, %12 : vector<64x128xf32>
    %c0_21 = arith.constant 0 : index
    %c0_22 = arith.constant 0 : index
    %14 = vector.load %arg4[%c0_21, %c0_22] : memref<128x128xf32, #tpu.memory_space<vmem>>, vector<128x128xf32>
    %cst_23 = arith.constant dense<0.000000e+00> : vector<64x128xf32>
    %15 = tpu.matmul %13, %14, %cst_23 {dimension_numbers = #tpu.dot_dimension_numbers<[1], [0], [0], [1], [0, 0, 1, 1], [], []>} : vector<64x128xf32>, vector<128x128xf32>, vector<64x128xf32> -> vector<64x128xf32>
    %16 = vector.broadcast %1 : vector<1x128xf32> to vector<64x128xf32>
    %17 = arith.addf %15, %16 : vector<64x128xf32>
    %18 = arith.addf %17, %13 : vector<64x128xf32>
    %cst_24 = arith.constant dense<0.000000e+00> : vector<64xf32>
    %19 = vector.multi_reduction <add>, %18, %cst_24 [1] : vector<64x128xf32> to vector<64xf32>
    %20 = vector.shape_cast %19 : vector<64xf32> to vector<64x1xf32>
    %cst_25 = arith.constant 1.280000e+02 : f32
    %21 = vector.broadcast %cst_25 : f32 to vector<64x1xf32>
    %22 = arith.divf %20, %21 : vector<64x1xf32>
    %23 = vector.broadcast %22 : vector<64x1xf32> to vector<64x128xf32>
    %24 = arith.subf %18, %23 : vector<64x128xf32>
    %25 = arith.mulf %24, %24 : vector<64x128xf32>
    %cst_26 = arith.constant dense<0.000000e+00> : vector<64xf32>
    %26 = vector.multi_reduction <add>, %25, %cst_26 [1] : vector<64x128xf32> to vector<64xf32>
    %27 = vector.shape_cast %26 : vector<64xf32> to vector<64x1xf32>
    %cst_27 = arith.constant 1.280000e+02 : f32
    %28 = vector.broadcast %cst_27 : f32 to vector<64x1xf32>
    %29 = arith.divf %27, %28 : vector<64x1xf32>
    %cst_28 = arith.constant 9.99999974E-6 : f32
    %30 = vector.broadcast %cst_28 : f32 to vector<64x1xf32>
    %31 = arith.addf %29, %30 : vector<64x1xf32>
    %32 = math.rsqrt %31 : vector<64x1xf32>
    %33 = vector.broadcast %32 : vector<64x1xf32> to vector<64x128xf32>
    %34 = arith.mulf %24, %33 : vector<64x128xf32>
    %35 = vector.broadcast %2 : vector<1x128xf32> to vector<64x128xf32>
    %36 = arith.mulf %34, %35 : vector<64x128xf32>
    %37 = vector.broadcast %3 : vector<1x128xf32> to vector<64x128xf32>
    %38 = arith.addf %36, %37 : vector<64x128xf32>
    %39 = arith.addf %38, %13 : vector<64x128xf32>
    %cst_29 = arith.constant dense<0.000000e+00> : vector<64xf32>
    %40 = vector.multi_reduction <add>, %39, %cst_29 [1] : vector<64x128xf32> to vector<64xf32>
    %41 = vector.shape_cast %40 : vector<64xf32> to vector<64x1xf32>
    %cst_30 = arith.constant 1.280000e+02 : f32
    %42 = vector.broadcast %cst_30 : f32 to vector<64x1xf32>
    %43 = arith.divf %41, %42 : vector<64x1xf32>
    %44 = vector.broadcast %43 : vector<64x1xf32> to vector<64x128xf32>
    %45 = arith.subf %39, %44 : vector<64x128xf32>
    %46 = arith.mulf %45, %45 : vector<64x128xf32>
    %cst_31 = arith.constant dense<0.000000e+00> : vector<64xf32>
    %47 = vector.multi_reduction <add>, %46, %cst_31 [1] : vector<64x128xf32> to vector<64xf32>
    %48 = vector.shape_cast %47 : vector<64xf32> to vector<64x1xf32>
    %cst_32 = arith.constant 1.280000e+02 : f32
    %49 = vector.broadcast %cst_32 : f32 to vector<64x1xf32>
    %50 = arith.divf %48, %49 : vector<64x1xf32>
    %cst_33 = arith.constant 9.99999974E-6 : f32
    %51 = vector.broadcast %cst_33 : f32 to vector<64x1xf32>
    %52 = arith.addf %50, %51 : vector<64x1xf32>
    %53 = math.rsqrt %52 : vector<64x1xf32>
    %54 = vector.broadcast %53 : vector<64x1xf32> to vector<64x128xf32>
    %55 = arith.mulf %45, %54 : vector<64x128xf32>
    %56 = vector.broadcast %4 : vector<1x128xf32> to vector<64x128xf32>
    %57 = arith.mulf %55, %56 : vector<64x128xf32>
    %58 = vector.broadcast %5 : vector<1x128xf32> to vector<64x128xf32>
    %59 = arith.addf %57, %58 : vector<64x128xf32>
    %60 = arith.addf %59, %13 : vector<64x128xf32>
    %cst_34 = arith.constant dense<0.000000e+00> : vector<64xf32>
    %61 = vector.multi_reduction <add>, %60, %cst_34 [1] : vector<64x128xf32> to vector<64xf32>
    %62 = vector.shape_cast %61 : vector<64xf32> to vector<64x1xf32>
    %cst_35 = arith.constant 1.280000e+02 : f32
    %63 = vector.broadcast %cst_35 : f32 to vector<64x1xf32>
    %64 = arith.divf %62, %63 : vector<64x1xf32>
    %65 = vector.broadcast %64 : vector<64x1xf32> to vector<64x128xf32>
    %66 = arith.subf %60, %65 : vector<64x128xf32>
    %67 = arith.mulf %66, %66 : vector<64x128xf32>
    %cst_36 = arith.constant dense<0.000000e+00> : vector<64xf32>
    %68 = vector.multi_reduction <add>, %67, %cst_36 [1] : vector<64x128xf32> to vector<64xf32>
    %69 = vector.shape_cast %68 : vector<64xf32> to vector<64x1xf32>
    %cst_37 = arith.constant 1.280000e+02 : f32
    %70 = vector.broadcast %cst_37 : f32 to vector<64x1xf32>
    %71 = arith.divf %69, %70 : vector<64x1xf32>
    %cst_38 = arith.constant 9.99999974E-6 : f32
    %72 = vector.broadcast %cst_38 : f32 to vector<64x1xf32>
    %73 = arith.addf %71, %72 : vector<64x1xf32>
    %74 = math.rsqrt %73 : vector<64x1xf32>
    %75 = vector.broadcast %74 : vector<64x1xf32> to vector<64x128xf32>
    %76 = arith.mulf %66, %75 : vector<64x128xf32>
    %77 = vector.broadcast %6 : vector<1x128xf32> to vector<64x128xf32>
    %78 = arith.mulf %76, %77 : vector<64x128xf32>
    %79 = vector.broadcast %7 : vector<1x128xf32> to vector<64x128xf32>
    %80 = arith.addf %78, %79 : vector<64x128xf32>
    %81 = arith.addf %80, %13 : vector<64x128xf32>
    %cst_39 = arith.constant 5.000000e-01 : f32
    %82 = vector.broadcast %cst_39 : f32 to vector<64x128xf32>
    %83 = arith.mulf %82, %81 : vector<64x128xf32>
    %cst_40 = arith.constant 0.707106769 : f32
    %84 = vector.broadcast %cst_40 : f32 to vector<64x128xf32>
    %85 = arith.mulf %81, %84 : vector<64x128xf32>
    %86 = math.erf %85 : vector<64x128xf32>
    %cst_41 = arith.constant 1.000000e+00 : f32
    %87 = vector.broadcast %cst_41 : f32 to vector<64x128xf32>
    %88 = arith.addf %87, %86 : vector<64x128xf32>
    %89 = arith.mulf %83, %88 : vector<64x128xf32>
    %c0_42 = arith.constant 0 : index
    %c0_43 = arith.constant 0 : index
    %90 = vector.load %arg12[%c0_42, %c0_43] : memref<128x128xf32, #tpu.memory_space<vmem>>, vector<128x128xf32>
    %cst_44 = arith.constant dense<0.000000e+00> : vector<64x128xf32>
    %91 = tpu.matmul %89, %90, %cst_44 {dimension_numbers = #tpu.dot_dimension_numbers<[1], [0], [0], [1], [0, 0, 1, 1], [], []>} : vector<64x128xf32>, vector<128x128xf32>, vector<64x128xf32> -> vector<64x128xf32>
    %92 = vector.broadcast %8 : vector<1x128xf32> to vector<64x128xf32>
    %93 = arith.addf %91, %92 : vector<64x128xf32>
    %c0_45 = arith.constant 0 : index
    %c0_46 = arith.constant 0 : index
    %94 = vector.load %arg14[%c0_45, %c0_46] : memref<64x128xf32, #tpu.memory_space<vmem>>, vector<64x128xf32>
    tpu.vector_store %arg14[%c0_45, %c0_46], %93 {strides = array<i32>} : memref<64x128xf32, #tpu.memory_space<vmem>>, vector<64x128xf32>,
    return
  }
  func.func @transform_0(%arg0: i32) -> (i32, i32) {
    %c0_i32 = arith.constant 0 : i32
    %c0_i32_0 = arith.constant 0 : i32
    return %arg0, %c0_i32 : i32, i32
  }
  func.func @transform_1(%arg0: i32) -> (i32, i32) {
    %c0_i32 = arith.constant 0 : i32
    %c0_i32_0 = arith.constant 0 : i32
    %c0_i32_1 = arith.constant 0 : i32
    return %c0_i32, %c0_i32_0 : i32, i32
  }
  func.func @transform_2(%arg0: i32) -> (i32, i32) {
    %c0_i32 = arith.constant 0 : i32
    %c0_i32_0 = arith.constant 0 : i32
    %c0_i32_1 = arith.constant 0 : i32
    return %c0_i32, %c0_i32_0 : i32, i32
  }
  func.func @transform_3(%arg0: i32) -> (i32, i32) {
    %c0_i32 = arith.constant 0 : i32
    %c0_i32_0 = arith.constant 0 : i32
    %c0_i32_1 = arith.constant 0 : i32
    return %c0_i32, %c0_i32_0 : i32, i32
  }
  func.func @transform_4(%arg0: i32) -> (i32, i32) {
    %c0_i32 = arith.constant 0 : i32
    %c0_i32_0 = arith.constant 0 : i32
    %c0_i32_1 = arith.constant 0 : i32
    return %c0_i32, %c0_i32_0 : i32, i32
  }
  func.func @transform_5(%arg0: i32) -> (i32, i32) {
    %c0_i32 = arith.constant 0 : i32
    %c0_i32_0 = arith.constant 0 : i32
    %c0_i32_1 = arith.constant 0 : i32
    return %c0_i32, %c0_i32_0 : i32, i32
  }
  func.func @transform_6(%arg0: i32) -> (i32, i32) {
    %c0_i32 = arith.constant 0 : i32
    %c0_i32_0 = arith.constant 0 : i32
    %c0_i32_1 = arith.constant 0 : i32
    return %c0_i32, %c0_i32_0 : i32, i32
  }
  func.func @transform_7(%arg0: i32) -> (i32, i32) {
    %c0_i32 = arith.constant 0 : i32
    %c0_i32_0 = arith.constant 0 : i32
    %c0_i32_1 = arith.constant 0 : i32
    return %c0_i32, %c0_i32_0 : i32, i32
  }
  func.func @transform_8(%arg0: i32) -> (i32, i32) {
    %c0_i32 = arith.constant 0 : i32
    %c0_i32_0 = arith.constant 0 : i32
    %c0_i32_1 = arith.constant 0 : i32
    return %c0_i32, %c0_i32_0 : i32, i32
  }
  func.func @transform_9(%arg0: i32) -> (i32, i32) {
    %c0_i32 = arith.constant 0 : i32
    %c0_i32_0 = arith.constant 0 : i32
    %c0_i32_1 = arith.constant 0 : i32
    return %c0_i32, %c0_i32_0 : i32, i32
  }
  func.func @transform_10(%arg0: i32) -> (i32, i32) {
    %c0_i32 = arith.constant 0 : i32
    %c0_i32_0 = arith.constant 0 : i32
    %c0_i32_1 = arith.constant 0 : i32
    return %c0_i32, %c0_i32_0 : i32, i32
  }
  func.func @transform_11(%arg0: i32) -> (i32, i32) {
    %c0_i32 = arith.constant 0 : i32
    %c0_i32_0 = arith.constant 0 : i32
    %c0_i32_1 = arith.constant 0 : i32
    return %c0_i32, %c0_i32_0 : i32, i32
  }
  func.func @transform_12(%arg0: i32) -> (i32, i32) {
    %c0_i32 = arith.constant 0 : i32
    %c0_i32_0 = arith.constant 0 : i32
    %c0_i32_1 = arith.constant 0 : i32
    return %c0_i32, %c0_i32_0 : i32, i32
  }
  func.func @transform_13(%arg0: i32) -> (i32, i32) {
    %c0_i32 = arith.constant 0 : i32
    %c0_i32_0 = arith.constant 0 : i32
    return %arg0, %c0_i32 : i32, i32
  }
}

</mosaic_0001>

<llo_original>
// kernel: tpu_custom_call.1
$region0: #{tpu_custom_call.1}
  #allocation0 [shape = 'u32[]', space=smem, size = 0x4, offset = 0x4, fixed_abs, tag = 'smem constant byte address 0x4 - core index']
  #allocation1 [shape = 'u32[144,128]{1,0:T(1,128)}', space=vmem, size = 0x12000, scoped, tag = 'internal scratch']
  %s0 = inlined_call_operand.hbm [shape: f32[128,128], index: 0, kind: input, shape index: {}]
  %s1 = inlined_call_operand.hbm [shape: f32[128,128], index: 1, kind: input, shape index: {}]
  %s2 = inlined_call_operand.vmem [shape: f32[1,128], index: 2, kind: input, shape index: {}]
  %s3 = inlined_call_operand.hbm [shape: f32[128,128], index: 3, kind: input, shape index: {}]
  %s4 = inlined_call_operand.vmem [shape: f32[1,128], index: 4, kind: input, shape index: {}]
  %s5 = inlined_call_operand.vmem [shape: f32[1,128], index: 5, kind: input, shape index: {}]
  %s6 = inlined_call_operand.vmem [shape: f32[1,128], index: 6, kind: input, shape index: {}]
  %s7 = inlined_call_operand.vmem [shape: f32[1,128], index: 7, kind: input, shape index: {}]
  %s8 = inlined_call_operand.vmem [shape: f32[1,128], index: 8, kind: input, shape index: {}]
  %s9 = inlined_call_operand.vmem [shape: f32[1,128], index: 9, kind: input, shape index: {}]
  %s10 = inlined_call_operand.vmem [shape: f32[1,128], index: 10, kind: input, shape index: {}]
  %s11 = inlined_call_operand.hbm [shape: f32[128,128], index: 11, kind: input, shape index: {}]
  %s12 = inlined_call_operand.vmem [shape: f32[1,128], index: 12, kind: input, shape index: {}]
  %s13 = inlined_call_operand.hbm [shape: f32[128,128], index: 13, kind: output, shape index: {}]
  %s14 = sld [smem:[#allocation0]]
  $region101: #{tpu_custom_call.1} parent=0
    _
  %s16 = ssub.s32 1, %s14
  %s17 = scalar_select 0, %s16, %s14
  $region1: #{tpu_custom_call.1} parent=0
    #allocation2 [shape = 'u8[65536]{0}', space=vmem, size = 0x10000, scoped, tag = 'input window, operand 0']
    #allocation3 [shape = 's32[2]{0}', space=sflag, size = 0x8, scoped, tag = 'scoped memory for tpu_custom_call.1']
    #allocation4 [shape = 's32[2]{0}', space=sflag, size = 0x8, scoped, tag = 'scoped memory for tpu_custom_call.1']
    #allocation5 [shape = 'u8[65536]{0}', space=vmem, size = 0x10000, scoped, tag = 'input window, operand 1, single buffered']
    #allocation6 [shape = 's32[1]{0}', space=sflag, size = 0x4, scoped, tag = 'scoped memory for tpu_custom_call.1']
    #allocation7 [shape = 'u8[65536]{0}', space=vmem, size = 0x10000, scoped, tag = 'input window, operand 3, single buffered']
    #allocation8 [shape = 'u8[65536]{0}', space=vmem, size = 0x10000, scoped, tag = 'input window, operand 11, single buffered']
    #allocation9 [shape = 's32[1]{0}', space=sflag, size = 0x4, scoped, tag = 'scoped memory for tpu_custom_call.1']
    #allocation10 [shape = 'u8[65536]{0}', space=vmem, size = 0x10000, scoped, tag = 'output window, operand 0']
    %18 = vsyncpa [#allocation3], 0
    %s19 = scalar_lea.sflag [#allocation3], 1
    %20 = vsyncpa %s19, 0
    %21 = vsyncpa [#allocation6], 0
    %22 = vsyncpa [#allocation9], 0
    %23 = vsyncpa [#allocation4], 0
    %s24 = scalar_lea.sflag [#allocation4], 1
    %25 = vsyncpa %s24, 0
    loop: start=0, step=1, limit=4
    $region2: #{tpu_custom_call.1} parent=1 // loop_pre_header
      _
    $region3: #{tpu_custom_call.1} parent=1 // loop_header
      %s27 = sphi 0, %s31
      %p28 = scmp.ge.s32.totalorder %s27, 4
      %s37 = sphi 0, %s39
      %s40 = sphi 0, %s37
      %s41 = sphi 0, %s40
      %s57 = sphi 0, %s41
      %s61 = sphi 0, %s61
      %s63 = sphi 0, %s61
      %s64 = sphi 0, %s63
      %s78 = sphi 0, %s64
      %s82 = sphi 0, %s82
      %s84 = sphi 0, %s82
      %s85 = sphi 0, %s84
      %s99 = sphi 0, %s85
      %s103 = sphi 0, %s103
      %s105 = sphi 0, %s103
      %s106 = sphi 0, %s105
      %s120 = sphi 0, %s106
      %s124 = sphi 0, %s124
      %s126 = sphi 0, %s124
      %s127 = sphi 0, %s126
      %s141 = sphi 0, %s127
      %s145 = sphi 0, %s145
      %s147 = sphi 0, %s145
      %s148 = sphi 0, %s147
      %s162 = sphi 0, %s148
      %s166 = sphi 0, %s166
      %s168 = sphi 0, %s166
      %s169 = sphi 0, %s168
      %s183 = sphi 0, %s169
      %s187 = sphi 0, %s187
      %s189 = sphi 0, %s187
      %s190 = sphi 0, %s189
      %s204 = sphi 0, %s190
      %s208 = sphi 0, %s208
      %s210 = sphi 0, %s208
      %s211 = sphi 0, %s210
      %s225 = sphi 0, %s211
      %s229 = sphi 0, %s229
      %s231 = sphi 0, %s229
      %s232 = sphi 0, %s231
      %s246 = sphi 0, %s232
      %s250 = sphi 0, %s250
      %s252 = sphi 0, %s250
      %s253 = sphi 0, %s252
      %s267 = sphi 0, %s253
      %s271 = sphi 0, %s271
      %s273 = sphi 0, %s271
      %s274 = sphi 0, %s273
      %s288 = sphi 0, %s274
      %s292 = sphi 0, %s292
      %s294 = sphi 0, %s292
      %s295 = sphi 0, %s294
      %s309 = sphi 0, %s295
      %s315 = sphi 0, %s317
      %s318 = sphi 0, %s315
      %s319 = sphi 0, %s318
      %s335 = sphi 0, %s319
    $region4: #{tpu_custom_call.1} parent=1 // loop_header_branch
      %30 = sbr.rel (%p28) target = $region8
    $region5: #{tpu_custom_call.1} parent=1 // loop_body
      %s32 = ssub.s32 %s27, 1
      %s33 = ssub.s32 %s27, 2
      %s34 = sadd.s32 %s27, 1
      %s35 = ssub.s32 %s27, %s34
      %p36 = scmp.eq.s32.totalorder %s35, 0
      %s38 = sadd.s32 %s37, 1
      %s39 = scalar_select %p36, %s37, %s38
      %p42 = pneg %p36
      %p43 = scmp.eq.s32.totalorder %s27, 1
      %p44 = por %p42, %p43
      %p45 = scmp.ne.s32.totalorder %s37, %s40
      %p46 = scmp.eq.s32.totalorder %s27, 0
      %p47 = por %p45, %p46
      %p48 = scmp.ne.s32.totalorder %s37, %s40
      %p49 = scmp.eq.s32.totalorder %s32, 1
      %p50 = por %p48, %p49
      %p51 = scmp.ne.s32.totalorder %s40, %s41
      %p52 = scmp.eq.s32.totalorder %s32, 0
      %p53 = por %p51, %p52
      %p54 = scmp.ne.s32.totalorder %s40, %s41
      %p55 = scmp.eq.s32.totalorder %s33, 1
      %p56 = por %p54, %p55
      %p58 = scmp.ne.s32.totalorder %s41, %s57
      %p59 = scmp.eq.s32.totalorder %s33, 0
      %p60 = por %p58, %p59
      %s62 = sadd.s32 %s61, 1
      %p65 = scmp.eq.s32.totalorder %s27, 1
      %p66 = scmp.ne.s32.totalorder %s61, %s63
      %p67 = scmp.eq.s32.totalorder %s27, 0
      %p68 = por %p66, %p67
      %p69 = scmp.ne.s32.totalorder %s61, %s63
      %p70 = scmp.eq.s32.totalorder %s32, 1
      %p71 = por %p69, %p70
      %p72 = scmp.ne.s32.totalorder %s63, %s64
      %p73 = scmp.eq.s32.totalorder %s32, 0
      %p74 = por %p72, %p73
      %p75 = scmp.ne.s32.totalorder %s63, %s64
      %p76 = scmp.eq.s32.totalorder %s33, 1
      %p77 = por %p75, %p76
      %p79 = scmp.ne.s32.totalorder %s64, %s78
      %p80 = scmp.eq.s32.totalorder %s33, 0
      %p81 = por %p79, %p80
      %s83 = sadd.s32 %s82, 1
      %p86 = scmp.eq.s32.totalorder %s27, 1
      %p87 = scmp.ne.s32.totalorder %s82, %s84
      %p88 = scmp.eq.s32.totalorder %s27, 0
      %p89 = por %p87, %p88
      %p90 = scmp.ne.s32.totalorder %s82, %s84
      %p91 = scmp.eq.s32.totalorder %s32, 1
      %p92 = por %p90, %p91
      %p93 = scmp.ne.s32.totalorder %s84, %s85
      %p94 = scmp.eq.s32.totalorder %s32, 0
      %p95 = por %p93, %p94
      %p96 = scmp.ne.s32.totalorder %s84, %s85
      %p97 = scmp.eq.s32.totalorder %s33, 1
      %p98 = por %p96, %p97
      %p100 = scmp.ne.s32.totalorder %s85, %s99
      %p101 = scmp.eq.s32.totalorder %s33, 0
      %p102 = por %p100, %p101
      %s104 = sadd.s32 %s103, 1
      %p107 = scmp.eq.s32.totalorder %s27, 1
      %p108 = scmp.ne.s32.totalorder %s103, %s105
      %p109 = scmp.eq.s32.totalorder %s27, 0
      %p110 = por %p108, %p109
      %p111 = scmp.ne.s32.totalorder %s103, %s105
      %p112 = scmp.eq.s32.totalorder %s32, 1
      %p113 = por %p111, %p112
      %p114 = scmp.ne.s32.totalorder %s105, %s106
      %p115 = scmp.eq.s32.totalorder %s32, 0
      %p116 = por %p114, %p115
      %p117 = scmp.ne.s32.totalorder %s105, %s106
      %p118 = scmp.eq.s32.totalorder %s33, 1
      %p119 = por %p117, %p118
      %p121 = scmp.ne.s32.totalorder %s106, %s120
      %p122 = scmp.eq.s32.totalorder %s33, 0
      %p123 = por %p121, %p122
      %s125 = sadd.s32 %s124, 1
      %p128 = scmp.eq.s32.totalorder %s27, 1
      %p129 = scmp.ne.s32.totalorder %s124, %s126
      %p130 = scmp.eq.s32.totalorder %s27, 0
      %p131 = por %p129, %p130
      %p132 = scmp.ne.s32.totalorder %s124, %s126
      %p133 = scmp.eq.s32.totalorder %s32, 1
      %p134 = por %p132, %p133
      %p135 = scmp.ne.s32.totalorder %s126, %s127
      %p136 = scmp.eq.s32.totalorder %s32, 0
      %p137 = por %p135, %p136
      %p138 = scmp.ne.s32.totalorder %s126, %s127
      %p139 = scmp.eq.s32.totalorder %s33, 1
      %p140 = por %p138, %p139
      %p142 = scmp.ne.s32.totalorder %s127, %s141
      %p143 = scmp.eq.s32.totalorder %s33, 0
      %p144 = por %p142, %p143
      %s146 = sadd.s32 %s145, 1
      %p149 = scmp.eq.s32.totalorder %s27, 1
      %p150 = scmp.ne.s32.totalorder %s145, %s147
      %p151 = scmp.eq.s32.totalorder %s27, 0
      %p152 = por %p150, %p151
      %p153 = scmp.ne.s32.totalorder %s145, %s147
      %p154 = scmp.eq.s32.totalorder %s32, 1
      %p155 = por %p153, %p154
      %p156 = scmp.ne.s32.totalorder %s147, %s148
      %p157 = scmp.eq.s32.totalorder %s32, 0
      %p158 = por %p156, %p157
      %p159 = scmp.ne.s32.totalorder %s147, %s148
      %p160 = scmp.eq.s32.totalorder %s33, 1
      %p161 = por %p159, %p160
      %p163 = scmp.ne.s32.totalorder %s148, %s162
      %p164 = scmp.eq.s32.totalorder %s33, 0
      %p165 = por %p163, %p164
      %s167 = sadd.s32 %s166, 1
      %p170 = scmp.eq.s32.totalorder %s27, 1
      %p171 = scmp.ne.s32.totalorder %s166, %s168
      %p172 = scmp.eq.s32.totalorder %s27, 0
      %p173 = por %p171, %p172
      %p174 = scmp.ne.s32.totalorder %s166, %s168
      %p175 = scmp.eq.s32.totalorder %s32, 1
      %p176 = por %p174, %p175
      %p177 = scmp.ne.s32.totalorder %s168, %s169
      %p178 = scmp.eq.s32.totalorder %s32, 0
      %p179 = por %p177, %p178
      %p180 = scmp.ne.s32.totalorder %s168, %s169
      %p181 = scmp.eq.s32.totalorder %s33, 1
      %p182 = por %p180, %p181
      %p184 = scmp.ne.s32.totalorder %s169, %s183
      %p185 = scmp.eq.s32.totalorder %s33, 0
      %p186 = por %p184, %p185
      %s188 = sadd.s32 %s187, 1
      %p191 = scmp.eq.s32.totalorder %s27, 1
      %p192 = scmp.ne.s32.totalorder %s187, %s189
      %p193 = scmp.eq.s32.totalorder %s27, 0
      %p194 = por %p192, %p193
      %p195 = scmp.ne.s32.totalorder %s187, %s189
      %p196 = scmp.eq.s32.totalorder %s32, 1
      %p197 = por %p195, %p196
      %p198 = scmp.ne.s32.totalorder %s189, %s190
      %p199 = scmp.eq.s32.totalorder %s32, 0
      %p200 = por %p198, %p199
      %p201 = scmp.ne.s32.totalorder %s189, %s190
      %p202 = scmp.eq.s32.totalorder %s33, 1
      %p203 = por %p201, %p202
      %p205 = scmp.ne.s32.totalorder %s190, %s204
      %p206 = scmp.eq.s32.totalorder %s33, 0
      %p207 = por %p205, %p206
      %s209 = sadd.s32 %s208, 1
      %p212 = scmp.eq.s32.totalorder %s27, 1
      %p213 = scmp.ne.s32.totalorder %s208, %s210
      %p214 = scmp.eq.s32.totalorder %s27, 0
      %p215 = por %p213, %p214
      %p216 = scmp.ne.s32.totalorder %s208, %s210
      %p217 = scmp.eq.s32.totalorder %s32, 1
      %p218 = por %p216, %p217
      %p219 = scmp.ne.s32.totalorder %s210, %s211
      %p220 = scmp.eq.s32.totalorder %s32, 0
      %p221 = por %p219, %p220
      %p222 = scmp.ne.s32.totalorder %s210, %s211
      %p223 = scmp.eq.s32.totalorder %s33, 1
      %p224 = por %p222, %p223
      %p226 = scmp.ne.s32.totalorder %s211, %s225
      %p227 = scmp.eq.s32.totalorder %s33, 0
      %p228 = por %p226, %p227
      %s230 = sadd.s32 %s229, 1
      %p233 = scmp.eq.s32.totalorder %s27, 1
      %p234 = scmp.ne.s32.totalorder %s229, %s231
      %p235 = scmp.eq.s32.totalorder %s27, 0
      %p236 = por %p234, %p235
      %p237 = scmp.ne.s32.totalorder %s229, %s231
      %p238 = scmp.eq.s32.totalorder %s32, 1
      %p239 = por %p237, %p238
      %p240 = scmp.ne.s32.totalorder %s231, %s232
      %p241 = scmp.eq.s32.totalorder %s32, 0
      %p242 = por %p240, %p241
      %p243 = scmp.ne.s32.totalorder %s231, %s232
      %p244 = scmp.eq.s32.totalorder %s33, 1
      %p245 = por %p243, %p244
      %p247 = scmp.ne.s32.totalorder %s232, %s246
      %p248 = scmp.eq.s32.totalorder %s33, 0
      %p249 = por %p247, %p248
      %s251 = sadd.s32 %s250, 1
      %p254 = scmp.eq.s32.totalorder %s27, 1
      %p255 = scmp.ne.s32.totalorder %s250, %s252
      %p256 = scmp.eq.s32.totalorder %s27, 0
      %p257 = por %p255, %p256
      %p258 = scmp.ne.s32.totalorder %s250, %s252
      %p259 = scmp.eq.s32.totalorder %s32, 1
      %p260 = por %p258, %p259
      %p261 = scmp.ne.s32.totalorder %s252, %s253
      %p262 = scmp.eq.s32.totalorder %s32, 0
      %p263 = por %p261, %p262
      %p264 = scmp.ne.s32.totalorder %s252, %s253
      %p265 = scmp.eq.s32.totalorder %s33, 1
      %p266 = por %p264, %p265
      %p268 = scmp.ne.s32.totalorder %s253, %s267
      %p269 = scmp.eq.s32.totalorder %s33, 0
      %p270 = por %p268, %p269
      %s272 = sadd.s32 %s271, 1
      %p275 = scmp.eq.s32.totalorder %s27, 1
      %p276 = scmp.ne.s32.totalorder %s271, %s273
      %p277 = scmp.eq.s32.totalorder %s27, 0
      %p278 = por %p276, %p277
      %p279 = scmp.ne.s32.totalorder %s271, %s273
      %p280 = scmp.eq.s32.totalorder %s32, 1
      %p281 = por %p279, %p280
      %p282 = scmp.ne.s32.totalorder %s273, %s274
      %p283 = scmp.eq.s32.totalorder %s32, 0
      %p284 = por %p282, %p283
      %p285 = scmp.ne.s32.totalorder %s273, %s274
      %p286 = scmp.eq.s32.totalorder %s33, 1
      %p287 = por %p285, %p286
      %p289 = scmp.ne.s32.totalorder %s274, %s288
      %p290 = scmp.eq.s32.totalorder %s33, 0
      %p291 = por %p289, %p290
      %s293 = sadd.s32 %s292, 1
      %p296 = scmp.eq.s32.totalorder %s27, 1
      %p297 = scmp.ne.s32.totalorder %s292, %s294
      %p298 = scmp.eq.s32.totalorder %s27, 0
      %p299 = por %p297, %p298
      %p300 = scmp.ne.s32.totalorder %s292, %s294
      %p301 = scmp.eq.s32.totalorder %s32, 1
      %p302 = por %p300, %p301
      %p303 = scmp.ne.s32.totalorder %s294, %s295
      %p304 = scmp.eq.s32.totalorder %s32, 0
      %p305 = por %p303, %p304
      %p306 = scmp.ne.s32.totalorder %s294, %s295
      %p307 = scmp.eq.s32.totalorder %s33, 1
      %p308 = por %p306, %p307
      %p310 = scmp.ne.s32.totalorder %s295, %s309
      %p311 = scmp.eq.s32.totalorder %s33, 0
      %p312 = por %p310, %p311
      %s313 = ssub.s32 %s27, %s34
      %p314 = scmp.eq.s32.totalorder %s313, 0
      %s316 = sadd.s32 %s315, 1
      %s317 = scalar_select %p314, %s315, %s316
      %p320 = pneg %p314
      %p321 = scmp.eq.s32.totalorder %s27, 1
      %p322 = por %p320, %p321
      %p323 = scmp.ne.s32.totalorder %s315, %s318
      %p324 = scmp.eq.s32.totalorder %s27, 0
      %p325 = por %p323, %p324
      %p326 = scmp.ne.s32.totalorder %s315, %s318
      %p327 = scmp.eq.s32.totalorder %s32, 1
      %p328 = por %p326, %p327
      %p329 = scmp.ne.s32.totalorder %s318, %s319
      %p330 = scmp.eq.s32.totalorder %s32, 0
      %p331 = por %p329, %p330
      %p332 = scmp.ne.s32.totalorder %s318, %s319
      %p333 = scmp.eq.s32.totalorder %s33, 1
      %p334 = por %p332, %p333
      %p336 = scmp.ne.s32.totalorder %s319, %s335
      %p337 = scmp.eq.s32.totalorder %s33, 0
      %p338 = por %p336, %p337
      %p339 = scmp.le.s32.totalorder 1, %s27
      %p340 = scmp.lt.s32.totalorder %s27, 3
      %p341 = pnand %p339, %p340
      %p342 = pneg %p341
      // Predicated region
      $region9: #{tpu_custom_call.1} parent=5 // pred_check
        _
      $region10: #{tpu_custom_call.1} parent=5 // pred_check_branch
        %344 = sbr.rel (%p341) target = $region12
      $region11: #{tpu_custom_call.1} parent=5 // pred_region
        %s345 = ssub.s32 %s27, 1
        // Predicated region
        $region13: #{tpu_custom_call.1} parent=11 // pred_check
          %p346 = pneg %p74
        $region14: #{tpu_custom_call.1} parent=11 // pred_check_branch
          %348 = sbr.rel (%p346) target = $region16
        $region15: #{tpu_custom_call.1} parent=11 // pred_region
          %s350 = ssub.s32 2048, 2048
          %351 = vsyncadd [#allocation6], %s350
          %s352 = sshll.u32 [#allocation5], 4
          %s353 = int_to_ptr.vmem [resolvable:$true] %s352
          %358 = dma.hbm_to_vmem [thread:$0]  %s1, 2048, %s353, [#allocation6], 128, 128, 8
        $region16: #{tpu_custom_call.1} parent=11 // pred_fallthru
          _
        // Predicated region
        $region17: #{tpu_custom_call.1} parent=11 // pred_check
          %p359 = pneg %p95
        $region18: #{tpu_custom_call.1} parent=11 // pred_check_branch
          %361 = sbr.rel (%p359) target = $region20
        $region19: #{tpu_custom_call.1} parent=11 // pred_region
          _
        $region20: #{tpu_custom_call.1} parent=11 // pred_fallthru
          _
        // Predicated region
        $region21: #{tpu_custom_call.1} parent=11 // pred_check
          %p362 = pneg %p116
        $region22: #{tpu_custom_call.1} parent=11 // pred_check_branch
          %364 = sbr.rel (%p362) target = $region24
        $region23: #{tpu_custom_call.1} parent=11 // pred_region
          %s366 = ssub.s32 2048, 2048
          %367 = vsyncadd [#allocation6], %s366
          %s368 = sshll.u32 [#allocation7], 4
          %s369 = int_to_ptr.vmem [resolvable:$true] %s368
          %374 = dma.hbm_to_vmem [thread:$0]  %s3, 2048, %s369, [#allocation6], 128, 128, 8
        $region24: #{tpu_custom_call.1} parent=11 // pred_fallthru
          _
        // Predicated region
        $region25: #{tpu_custom_call.1} parent=11 // pred_check
          %p375 = pneg %p137
        $region26: #{tpu_custom_call.1} parent=11 // pred_check_branch
          %377 = sbr.rel (%p375) target = $region28
        $region27: #{tpu_custom_call.1} parent=11 // pred_region
          _
        $region28: #{tpu_custom_call.1} parent=11 // pred_fallthru
          _
        // Predicated region
        $region29: #{tpu_custom_call.1} parent=11 // pred_check
          %p378 = pneg %p158
        $region30: #{tpu_custom_call.1} parent=11 // pred_check_branch
          %380 = sbr.rel (%p378) target = $region32
        $region31: #{tpu_custom_call.1} parent=11 // pred_region
          _
        $region32: #{tpu_custom_call.1} parent=11 // pred_fallthru
          _
        // Predicated region
        $region33: #{tpu_custom_call.1} parent=11 // pred_check
          %p381 = pneg %p179
        $region34: #{tpu_custom_call.1} parent=11 // pred_check_branch
          %383 = sbr.rel (%p381) target = $region36
        $region35: #{tpu_custom_call.1} parent=11 // pred_region
          _
        $region36: #{tpu_custom_call.1} parent=11 // pred_fallthru
          _
        // Predicated region
        $region37: #{tpu_custom_call.1} parent=11 // pred_check
          %p384 = pneg %p200
        $region38: #{tpu_custom_call.1} parent=11 // pred_check_branch
          %386 = sbr.rel (%p384) target = $region40
        $region39: #{tpu_custom_call.1} parent=11 // pred_region
          _
        $region40: #{tpu_custom_call.1} parent=11 // pred_fallthru
          _
        // Predicated region
        $region41: #{tpu_custom_call.1} parent=11 // pred_check
          %p387 = pneg %p221
        $region42: #{tpu_custom_call.1} parent=11 // pred_check_branch
          %389 = sbr.rel (%p387) target = $region44
        $region43: #{tpu_custom_call.1} parent=11 // pred_region
          _
        $region44: #{tpu_custom_call.1} parent=11 // pred_fallthru
          _
        // Predicated region
        $region45: #{tpu_custom_call.1} parent=11 // pred_check
          %p390 = pneg %p242
        $region46: #{tpu_custom_call.1} parent=11 // pred_check_branch
          %392 = sbr.rel (%p390) target = $region48
        $region47: #{tpu_custom_call.1} parent=11 // pred_region
          _
        $region48: #{tpu_custom_call.1} parent=11 // pred_fallthru
          _
        // Predicated region
        $region49: #{tpu_custom_call.1} parent=11 // pred_check
          %p393 = pneg %p263
        $region50: #{tpu_custom_call.1} parent=11 // pred_check_branch
          %395 = sbr.rel (%p393) target = $region52
        $region51: #{tpu_custom_call.1} parent=11 // pred_region
          _
        $region52: #{tpu_custom_call.1} parent=11 // pred_fallthru
          _
        // Predicated region
        $region53: #{tpu_custom_call.1} parent=11 // pred_check
          %p396 = pneg %p284
        $region54: #{tpu_custom_call.1} parent=11 // pred_check_branch
          %398 = sbr.rel (%p396) target = $region56
        $region55: #{tpu_custom_call.1} parent=11 // pred_region
          %s400 = ssub.s32 2048, 2048
          %401 = vsyncadd [#allocation9], %s400
          %s402 = sshll.u32 [#allocation8], 4
          %s403 = int_to_ptr.vmem [resolvable:$true] %s402
          %408 = dma.hbm_to_vmem [thread:$0]  %s11, 2048, %s403, [#allocation9], 128, 128, 8
        $region56: #{tpu_custom_call.1} parent=11 // pred_fallthru
          _
        // Predicated region
        $region57: #{tpu_custom_call.1} parent=11 // pred_check
          %p409 = pneg %p305
        $region58: #{tpu_custom_call.1} parent=11 // pred_check_branch
          %411 = sbr.rel (%p409) target = $region60
        $region59: #{tpu_custom_call.1} parent=11 // pred_region
          _
        $region60: #{tpu_custom_call.1} parent=11 // pred_fallthru
          _
      $region12: #{tpu_custom_call.1} parent=5 // pred_fallthru
        _
      %p412 = scmp.lt.s32.totalorder %s27, 2
      // Predicated region
      $region61: #{tpu_custom_call.1} parent=5 // pred_check
        %p413 = pneg %p412
      $region62: #{tpu_custom_call.1} parent=5 // pred_check_branch
        %415 = sbr.rel (%p413) target = $region64
      $region63: #{tpu_custom_call.1} parent=5 // pred_region
        // Predicated region
        $region65: #{tpu_custom_call.1} parent=63 // pred_check
          %p416 = pneg %p47
        $region66: #{tpu_custom_call.1} parent=63 // pred_check_branch
          %418 = sbr.rel (%p416) target = $region68
        $region67: #{tpu_custom_call.1} parent=63 // pred_region
          %s419 = sand.u32 %s37, 1
          %s420 = scalar_lea.sflag [#allocation3], %s419
          %s421 = sand.u32 %s37, 1
          %s422 = smul.addr %s421, 64
          %s423 = scalar_lea.vmem [#allocation2], %s422
          %s424 = smul.u32 8, %s27
          %s426 = ssub.s32 1024, 1024
          %427 = vsyncadd %s420, %s426
          %s428 = smul.addr %s424, 128
          %s429 = scalar_lea.hbm %s0, %s428
          %s430 = sshll.u32 %s423, 4
          %s431 = int_to_ptr.vmem [resolvable:$true] %s430
          %436 = dma.hbm_to_vmem [thread:$0]  %s429, 1024, %s431, %s420, 128, 128, 8
        $region68: #{tpu_custom_call.1} parent=63 // pred_fallthru
          _
      $region64: #{tpu_custom_call.1} parent=5 // pred_fallthru
        _
      %p437 = scmp.le.s32.totalorder 1, %s27
      %p438 = scmp.lt.s32.totalorder %s27, 3
      %p439 = pnand %p437, %p438
      %p440 = pneg %p439
      // Predicated region
      $region69: #{tpu_custom_call.1} parent=5 // pred_check
        _
      $region70: #{tpu_custom_call.1} parent=5 // pred_check_branch
        %442 = sbr.rel (%p439) target = $region72
      $region71: #{tpu_custom_call.1} parent=5 // pred_region
        %s443 = ssub.s32 %s27, 1
        %s444 = sand.u32 %s40, 1
        %s445 = scalar_lea.sflag [#allocation3], %s444
        %s446 = sand.u32 %s40, 1
        %s447 = smul.addr %s446, 64
        %s448 = scalar_lea.vmem [#allocation2], %s447
        // Predicated region
        $region73: #{tpu_custom_call.1} parent=71 // pred_check
          %p449 = pneg %p53
        $region74: #{tpu_custom_call.1} parent=71 // pred_check_branch
          %451 = sbr.rel (%p449) target = $region76
        $region75: #{tpu_custom_call.1} parent=71 // pred_region
          %452 = dma.done %s445, 1024
        $region76: #{tpu_custom_call.1} parent=71 // pred_fallthru
          _
        // Predicated region
        $region77: #{tpu_custom_call.1} parent=71 // pred_check
          %p453 = pneg %p74
        $region78: #{tpu_custom_call.1} parent=71 // pred_check_branch
          %455 = sbr.rel (%p453) target = $region80
        $region79: #{tpu_custom_call.1} parent=71 // pred_region
          %456 = dma.done [#allocation6], 2048
        $region80: #{tpu_custom_call.1} parent=71 // pred_fallthru
          _
        // Predicated region
        $region81: #{tpu_custom_call.1} parent=71 // pred_check
          %p457 = pneg %p116
        $region82: #{tpu_custom_call.1} parent=71 // pred_check_branch
          %459 = sbr.rel (%p457) target = $region84
        $region83: #{tpu_custom_call.1} parent=71 // pred_region
          %460 = dma.done [#allocation6], 2048
        $region84: #{tpu_custom_call.1} parent=71 // pred_fallthru
          _
        // Predicated region
        $region85: #{tpu_custom_call.1} parent=71 // pred_check
          %p461 = pneg %p284
        $region86: #{tpu_custom_call.1} parent=71 // pred_check_branch
          %463 = sbr.rel (%p461) target = $region88
        $region87: #{tpu_custom_call.1} parent=71 // pred_region
          %464 = dma.done [#allocation9], 2048
        $region88: #{tpu_custom_call.1} parent=71 // pred_fallthru
          _
        %s465 = sand.u32 %s40, 1
        %s466 = scalar_lea.sflag [#allocation3], %s465
        %s467 = sand.u32 %s40, 1
        %s468 = smul.addr %s467, 64
        %s469 = scalar_lea.vmem [#allocation2], %s468
        %p470 = pneg %p53
        %p471 = pneg %p50
        %p472 = pneg %p74
        %p473 = pneg %p71
        %p474 = pneg %p95
        %p475 = pneg %p92
        %p476 = pneg %p116
        %p477 = pneg %p113
        %p478 = pneg %p137
        %p479 = pneg %p134
        %p480 = pneg %p158
        %p481 = pneg %p155
        %p482 = pneg %p179
        %p483 = pneg %p176
        %p484 = pneg %p200
        %p485 = pneg %p197
        %p486 = pneg %p221
        %p487 = pneg %p218
        %p488 = pneg %p242
        %p489 = pneg %p239
        %p490 = pneg %p263
        %p491 = pneg %p260
        %p492 = pneg %p284
        %p493 = pneg %p281
        %p494 = pneg %p305
        %p495 = pneg %p302
        %p496 = pneg %p331
        %p497 = pneg %p328
        %s498 = sand.u32 %s318, 1
        %s499 = scalar_lea.sflag [#allocation4], %s498
        %s500 = sand.u32 %s318, 1
        %s501 = smul.addr %s500, 64
        %s502 = scalar_lea.vmem [#allocation10], %s501
        %s503 = smul.u32 8, %s32
        %s504 = smul.u32 8, %s32
        %v505 = vld [vmem:[%s2] sm:$0x1]
        %v506 = vld [vmem:[%s4] sm:$0x1]
        %v507 = vld [vmem:[%s5] sm:$0x1]
        %v508 = vld [vmem:[%s6] sm:$0x1]
        %v509 = vld [vmem:[%s7] sm:$0x1]
        %v510 = vld [vmem:[%s8] sm:$0x1]
        %v511 = vld [vmem:[%s9] sm:$0x1]
        %v512 = vld [vmem:[%s10] sm:$0x1]
        %v513 = vld [vmem:[%s12] sm:$0x1]
        %v514 = vld [vmem:[%s448] sm:$0xff]
        %v515 = vld [vmem:[%s448 + $0x8] sm:$0xff]
        %v516 = vld [vmem:[%s448 + $0x10] sm:$0xff]
        %v517 = vld [vmem:[%s448 + $0x18] sm:$0xff]
        %v518 = vld [vmem:[%s448 + $0x20] sm:$0xff]
        %v519 = vld [vmem:[%s448 + $0x28] sm:$0xff]
        %v520 = vld [vmem:[%s448 + $0x30] sm:$0xff]
        %v521 = vld [vmem:[%s448 + $0x38] sm:$0xff]
        %v522 = vld [vmem:[#allocation5] sm:$0xff]
        %v523 = vld [vmem:[#allocation5 + $0x8] sm:$0xff]
        %v524 = vld [vmem:[#allocation5 + $0x10] sm:$0xff]
        %v525 = vld [vmem:[#allocation5 + $0x18] sm:$0xff]
        %v526 = vld [vmem:[#allocation5 + $0x20] sm:$0xff]
        %v527 = vld [vmem:[#allocation5 + $0x28] sm:$0xff]
        %v528 = vld [vmem:[#allocation5 + $0x30] sm:$0xff]
        %v529 = vld [vmem:[#allocation5 + $0x38] sm:$0xff]
        %v530 = vld [vmem:[#allocation5 + $0x40] sm:$0xff]
        %v531 = vld [vmem:[#allocation5 + $0x48] sm:$0xff]
        %v532 = vld [vmem:[#allocation5 + $0x50] sm:$0xff]
        %v533 = vld [vmem:[#allocation5 + $0x58] sm:$0xff]
        %v534 = vld [vmem:[#allocation5 + $0x60] sm:$0xff]
        %v535 = vld [vmem:[#allocation5 + $0x68] sm:$0xff]
        %v536 = vld [vmem:[#allocation5 + $0x70] sm:$0xff]
        %v537 = vld [vmem:[#allocation5 + $0x78] sm:$0xff]
        %v539 = vlaneseq
        %v540 = vshrl.u32 %v539, 7
        %v541 = vsub.s32 0, %v540
        %v542 = vrot.slane %v505, %v541
        %544 = vmatprep.subr.mxu0 0.0
        %545 = vmatpush1.msra.mxu0 %v522
        %546 = vmatprep.subr.mxu0 0.0
        %547 = vmatpush1.msra.mxu0 %v523
        %548 = vmatprep.subr.mxu0 0.0
        %549 = vmatpush1.msra.mxu0 %v524
        %550 = vmatprep.subr.mxu0 0.0
        %551 = vmatpush1.msra.mxu0 %v525
        %552 = vmatprep.subr.mxu0 0.0
        %553 = vmatpush1.msra.mxu0 %v526
        %554 = vmatprep.subr.mxu0 0.0
        %555 = vmatpush1.msra.mxu0 %v527
        %556 = vmatprep.subr.mxu0 0.0
        %557 = vmatpush1.msra.mxu0 %v528
        %558 = vmatprep.subr.mxu0 0.0
        %559 = vmatpush1.msra.mxu0 %v529
        %560 = vmatprep.subr.mxu0 0.0
        %561 = vmatpush1.msra.mxu0 %v530
        %562 = vmatprep.subr.mxu0 0.0
        %563 = vmatpush1.msra.mxu0 %v531
        %564 = vmatprep.subr.mxu0 0.0
        %565 = vmatpush1.msra.mxu0 %v532
        %566 = vmatprep.subr.mxu0 0.0
        %567 = vmatpush1.msra.mxu0 %v533
        %568 = vmatprep.subr.mxu0 0.0
        %569 = vmatpush1.msra.mxu0 %v534
        %570 = vmatprep.subr.mxu0 0.0
        %571 = vmatpush1.msra.mxu0 %v535
        %572 = vmatprep.subr.mxu0 0.0
        %573 = vmatpush1.msra.mxu0 %v536
        %574 = vmatprep.subr.mxu0 0.0
        %575 = vmatpush1.msra.mxu0 %v537
        %576 = vmatprep.subr.mxu0 0.0
        %577 = vmatpush1.msra.mxu0 0.0
        %578 = vmatprep.subr.mxu0 0.0
        %579 = vmatpush1.msra.mxu0 0.0
        %580 = vmatprep.subr.mxu0 0.0
        %581 = vmatpush1.msra.mxu0 0.0
        %582 = vmatprep.subr.mxu0 0.0
        %583 = vmatpush1.msra.mxu0 0.0
        %584 = vmatprep.subr.mxu0 0.0
        %585 = vmatpush1.msra.mxu0 0.0
        %586 = vmatprep.subr.mxu0 0.0
        %587 = vmatpush1.msra.mxu0 0.0
        %588 = vmatprep.subr.mxu0 0.0
        %589 = vmatpush1.msra.mxu0 0.0
        %590 = vmatprep.subr.mxu0 0.0
        %591 = vmatpush1.msra.mxu0 0.0
        %592 = vmatprep.subr.mxu0 0.0
        %593 = vmatpush1.msra.mxu0 0.0
        %594 = vmatprep.subr.mxu0 0.0
        %595 = vmatpush1.msra.mxu0 0.0
        %596 = vmatprep.subr.mxu0 0.0
        %597 = vmatpush1.msra.mxu0 0.0
        %598 = vmatprep.subr.mxu0 0.0
        %599 = vmatpush1.msra.mxu0 0.0
        %600 = vmatprep.subr.mxu0 0.0
        %601 = vmatpush1.msra.mxu0 0.0
        %602 = vmatprep.subr.mxu0 0.0
        %603 = vmatpush1.msra.mxu0 0.0
        %604 = vmatprep.subr.mxu0 0.0
        %605 = vmatpush1.msra.mxu0 0.0
        %606 = vmatprep.subr.mxu0 0.0
        %607 = vmatpush1.msra.mxu0 0.0
        %608 = vmatprep.mubr.f32.mxu0 0.0
        %609 = vmatmul.mubr.f32.gmra.mrb[0].mxu0 %v514
        %v610 = vpop.f32.mrb[0].mxu0
        %v611 = vadd.f32 %v542, %v610
        %v612 = vpop.f32.mrb[0].mxu0
        %613 = vmatprep.mubr.f32.mxu0 0.0
        %614 = vmatmul.mubr.f32.gmra.mrb[0].mxu0 %v515
        %v615 = vpop.f32.mrb[0].mxu0
        %v616 = vadd.f32 %v542, %v615
        %v617 = vpop.f32.mrb[0].mxu0
        %618 = vmatprep.mubr.f32.mxu0 0.0
        %619 = vmatmul.mubr.f32.gmra.mrb[0].mxu0 %v516
        %v620 = vpop.f32.mrb[0].mxu0
        %v621 = vadd.f32 %v542, %v620
        %v622 = vpop.f32.mrb[0].mxu0
        %623 = vmatprep.mubr.f32.mxu0 0.0
        %624 = vmatmul.mubr.f32.gmra.mrb[0].mxu0 %v517
        %v625 = vpop.f32.mrb[0].mxu0
        %v626 = vadd.f32 %v542, %v625
        %v627 = vpop.f32.mrb[0].mxu0
        %628 = vmatprep.mubr.f32.mxu0 0.0
        %629 = vmatmul.mubr.f32.gmra.mrb[0].mxu0 %v518
        %v630 = vpop.f32.mrb[0].mxu0
        %v631 = vadd.f32 %v542, %v630
        %v632 = vpop.f32.mrb[0].mxu0
        %633 = vmatprep.mubr.f32.mxu0 0.0
        %634 = vmatmul.mubr.f32.gmra.mrb[0].mxu0 %v519
        %v635 = vpop.f32.mrb[0].mxu0
        %v636 = vadd.f32 %v542, %v635
        %v637 = vpop.f32.mrb[0].mxu0
        %638 = vmatprep.mubr.f32.mxu0 0.0
        %639 = vmatmul.mubr.f32.gmra.mrb[0].mxu0 %v520
        %v640 = vpop.f32.mrb[0].mxu0
        %v641 = vadd.f32 %v542, %v640
        %v642 = vpop.f32.mrb[0].mxu0
        %643 = vmatprep.mubr.f32.mxu0 0.0
        %644 = vmatmul.mubr.f32.gmra.mrb[0].mxu0 %v521
        %v645 = vpop.f32.mrb[0].mxu0
        %v646 = vadd.f32 %v542, %v645
        %v647 = vpop.f32.mrb[0].mxu0
        %648 = vdwg.mxu0
        %v649 = vld [vmem:[#allocation7] sm:$0xff]
        %v650 = vld [vmem:[#allocation7 + $0x8] sm:$0xff]
        %v651 = vld [vmem:[#allocation7 + $0x10] sm:$0xff]
        %v652 = vld [vmem:[#allocation7 + $0x18] sm:$0xff]
        %v653 = vld [vmem:[#allocation7 + $0x20] sm:$0xff]
        %v654 = vld [vmem:[#allocation7 + $0x28] sm:$0xff]
        %v655 = vld [vmem:[#allocation7 + $0x30] sm:$0xff]
        %v656 = vld [vmem:[#allocation7 + $0x38] sm:$0xff]
        %v657 = vld [vmem:[#allocation7 + $0x40] sm:$0xff]
        %v658 = vld [vmem:[#allocation7 + $0x48] sm:$0xff]
        %v659 = vld [vmem:[#allocation7 + $0x50] sm:$0xff]
        %v660 = vld [vmem:[#allocation7 + $0x58] sm:$0xff]
        %v661 = vld [vmem:[#allocation7 + $0x60] sm:$0xff]
        %v662 = vld [vmem:[#allocation7 + $0x68] sm:$0xff]
        %v663 = vld [vmem:[#allocation7 + $0x70] sm:$0xff]
        %v664 = vld [vmem:[#allocation7 + $0x78] sm:$0xff]
        %v666 = vlaneseq
        %v667 = vshrl.u32 %v666, 7
        %v668 = vsub.s32 0, %v667
        %v669 = vrot.slane %v506, %v668
        %671 = vmatprep.subr.mxu0 0.0
        %672 = vmatpush1.msra.mxu0 %v649
        %673 = vmatprep.subr.mxu0 0.0
        %674 = vmatpush1.msra.mxu0 %v650
        %675 = vmatprep.subr.mxu0 0.0
        %676 = vmatpush1.msra.mxu0 %v651
        %677 = vmatprep.subr.mxu0 0.0
        %678 = vmatpush1.msra.mxu0 %v652
        %679 = vmatprep.subr.mxu0 0.0
        %680 = vmatpush1.msra.mxu0 %v653
        %681 = vmatprep.subr.mxu0 0.0
        %682 = vmatpush1.msra.mxu0 %v654
        %683 = vmatprep.subr.mxu0 0.0
        %684 = vmatpush1.msra.mxu0 %v655
        %685 = vmatprep.subr.mxu0 0.0
        %686 = vmatpush1.msra.mxu0 %v656
        %687 = vmatprep.subr.mxu0 0.0
        %688 = vmatpush1.msra.mxu0 %v657
        %689 = vmatprep.subr.mxu0 0.0
        %690 = vmatpush1.msra.mxu0 %v658
        %691 = vmatprep.subr.mxu0 0.0
        %692 = vmatpush1.msra.mxu0 %v659
        %693 = vmatprep.subr.mxu0 0.0
        %694 = vmatpush1.msra.mxu0 %v660
        %695 = vmatprep.subr.mxu0 0.0
        %696 = vmatpush1.msra.mxu0 %v661
        %697 = vmatprep.subr.mxu0 0.0
        %698 = vmatpush1.msra.mxu0 %v662
        %699 = vmatprep.subr.mxu0 0.0
        %700 = vmatpush1.msra.mxu0 %v663
        %701 = vmatprep.subr.mxu0 0.0
        %702 = vmatpush1.msra.mxu0 %v664
        %703 = vmatprep.subr.mxu0 0.0
        %704 = vmatpush1.msra.mxu0 0.0
        %705 = vmatprep.subr.mxu0 0.0
        %706 = vmatpush1.msra.mxu0 0.0
        %707 = vmatprep.subr.mxu0 0.0
        %708 = vmatpush1.msra.mxu0 0.0
        %709 = vmatprep.subr.mxu0 0.0
        %710 = vmatpush1.msra.mxu0 0.0
        %711 = vmatprep.subr.mxu0 0.0
        %712 = vmatpush1.msra.mxu0 0.0
        %713 = vmatprep.subr.mxu0 0.0
        %714 = vmatpush1.msra.mxu0 0.0
        %715 = vmatprep.subr.mxu0 0.0
        %716 = vmatpush1.msra.mxu0 0.0
        %717 = vmatprep.subr.mxu0 0.0
        %718 = vmatpush1.msra.mxu0 0.0
        %719 = vmatprep.subr.mxu0 0.0
        %720 = vmatpush1.msra.mxu0 0.0
        %721 = vmatprep.subr.mxu0 0.0
        %722 = vmatpush1.msra.mxu0 0.0
        %723 = vmatprep.subr.mxu0 0.0
        %724 = vmatpush1.msra.mxu0 0.0
        %725 = vmatprep.subr.mxu0 0.0
        %726 = vmatpush1.msra.mxu0 0.0
        %727 = vmatprep.subr.mxu0 0.0
        %728 = vmatpush1.msra.mxu0 0.0
        %729 = vmatprep.subr.mxu0 0.0
        %730 = vmatpush1.msra.mxu0 0.0
        %731 = vmatprep.subr.mxu0 0.0
        %732 = vmatpush1.msra.mxu0 0.0
        %733 = vmatprep.subr.mxu0 0.0
        %734 = vmatpush1.msra.mxu0 0.0
        %735 = vmatprep.mubr.f32.mxu0 0.0
        %736 = vmatmul.mubr.f32.gmra.mrb[0].mxu0 %v611
        %v737 = vpop.f32.mrb[0].mxu0
        %v738 = vadd.f32 %v669, %v737
        %v739 = vpop.f32.mrb[0].mxu0
        %740 = vmatprep.mubr.f32.mxu0 0.0
        %741 = vmatmul.mubr.f32.gmra.mrb[0].mxu0 %v616
        %v742 = vpop.f32.mrb[0].mxu0
        %v743 = vadd.f32 %v669, %v742
        %v744 = vpop.f32.mrb[0].mxu0
        %745 = vmatprep.mubr.f32.mxu0 0.0
        %746 = vmatmul.mubr.f32.gmra.mrb[0].mxu0 %v621
        %v747 = vpop.f32.mrb[0].mxu0
        %v748 = vadd.f32 %v669, %v747
        %v749 = vpop.f32.mrb[0].mxu0
        %750 = vmatprep.mubr.f32.mxu0 0.0
        %751 = vmatmul.mubr.f32.gmra.mrb[0].mxu0 %v626
        %v752 = vpop.f32.mrb[0].mxu0
        %v753 = vadd.f32 %v669, %v752
        %v754 = vpop.f32.mrb[0].mxu0
        %755 = vmatprep.mubr.f32.mxu0 0.0
        %756 = vmatmul.mubr.f32.gmra.mrb[0].mxu0 %v631
        %v757 = vpop.f32.mrb[0].mxu0
        %v758 = vadd.f32 %v669, %v757
        %v759 = vpop.f32.mrb[0].mxu0
        %760 = vmatprep.mubr.f32.mxu0 0.0
        %761 = vmatmul.mubr.f32.gmra.mrb[0].mxu0 %v636
        %v762 = vpop.f32.mrb[0].mxu0
        %v763 = vadd.f32 %v669, %v762
        %v764 = vpop.f32.mrb[0].mxu0
        %765 = vmatprep.mubr.f32.mxu0 0.0
        %766 = vmatmul.mubr.f32.gmra.mrb[0].mxu0 %v641
        %v767 = vpop.f32.mrb[0].mxu0
        %v768 = vadd.f32 %v669, %v767
        %v769 = vpop.f32.mrb[0].mxu0
        %770 = vmatprep.mubr.f32.mxu0 0.0
        %771 = vmatmul.mubr.f32.gmra.mrb[0].mxu0 %v646
        %v772 = vpop.f32.mrb[0].mxu0
        %v773 = vadd.f32 %v669, %v772
        %v774 = vpop.f32.mrb[0].mxu0
        %775 = vdwg.mxu0
        %v776 = vadd.f32 %v738, %v611
        %v777 = vadd.f32 %v743, %v616
        %v778 = vadd.f32 %v748, %v621
        %v779 = vadd.f32 %v753, %v626
        %v780 = vadd.f32 %v758, %v631
        %v781 = vadd.f32 %v763, %v636
        %v782 = vadd.f32 %v768, %v641
        %v783 = vadd.f32 %v773, %v646
        %784 = vadd.xlane.f32.xlu0 %v776
        %v785 = vpop.xlane.xlu0 %784
        %786 = vadd.xlane.f32.xlu0 %v777
        %v787 = vpop.xlane.xlu0 %786
        %788 = vadd.xlane.f32.xlu0 %v778
        %v789 = vpop.xlane.xlu0 %788
        %790 = vadd.xlane.f32.xlu0 %v779
        %v791 = vpop.xlane.xlu0 %790
        %792 = vadd.xlane.f32.xlu0 %v780
        %v793 = vpop.xlane.xlu0 %792
        %794 = vadd.xlane.f32.xlu0 %v781
        %v795 = vpop.xlane.xlu0 %794
        %796 = vadd.xlane.f32.xlu0 %v782
        %v797 = vpop.xlane.xlu0 %796
        %798 = vadd.xlane.f32.xlu0 %v783
        %v799 = vpop.xlane.xlu0 %798
        %v800 = vrcp.pop 128.0
        %v801 = vmul.f32 %v785, %v800
        %v802 = vmul.f32 %v787, %v800
        %v803 = vmul.f32 %v789, %v800
        %v804 = vmul.f32 %v791, %v800
        %v805 = vmul.f32 %v793, %v800
        %v806 = vmul.f32 %v795, %v800
        %v807 = vmul.f32 %v797, %v800
        %v808 = vmul.f32 %v799, %v800
        %v809 = vsub.f32 %v776, %v801
        %v810 = vsub.f32 %v777, %v802
        %v811 = vsub.f32 %v778, %v803
        %v812 = vsub.f32 %v779, %v804
        %v813 = vsub.f32 %v780, %v805
        %v814 = vsub.f32 %v781, %v806
        %v815 = vsub.f32 %v782, %v807
        %v816 = vsub.f32 %v783, %v808
        %v817 = vmul.f32 %v809, %v809
        %v818 = vmul.f32 %v810, %v810
        %v819 = vmul.f32 %v811, %v811
        %v820 = vmul.f32 %v812, %v812
        %v821 = vmul.f32 %v813, %v813
        %v822 = vmul.f32 %v814, %v814
        %v823 = vmul.f32 %v815, %v815
        %v824 = vmul.f32 %v816, %v816
        %825 = vadd.xlane.f32.xlu0 %v817
        %v826 = vpop.xlane.xlu0 %825
        %827 = vadd.xlane.f32.xlu0 %v818
        %v828 = vpop.xlane.xlu0 %827
        %829 = vadd.xlane.f32.xlu0 %v819
        %v830 = vpop.xlane.xlu0 %829
        %831 = vadd.xlane.f32.xlu0 %v820
        %v832 = vpop.xlane.xlu0 %831
        %833 = vadd.xlane.f32.xlu0 %v821
        %v834 = vpop.xlane.xlu0 %833
        %835 = vadd.xlane.f32.xlu0 %v822
        %v836 = vpop.xlane.xlu0 %835
        %837 = vadd.xlane.f32.xlu0 %v823
        %v838 = vpop.xlane.xlu0 %837
        %839 = vadd.xlane.f32.xlu0 %v824
        %v840 = vpop.xlane.xlu0 %839
        %v841 = vmul.f32 %v826, %v800
        %v842 = vmul.f32 %v828, %v800
        %v843 = vmul.f32 %v830, %v800
        %v844 = vmul.f32 %v832, %v800
        %v845 = vmul.f32 %v834, %v800
        %v846 = vmul.f32 %v836, %v800
        %v847 = vmul.f32 %v838, %v800
        %v848 = vmul.f32 %v840, %v800
        %v849 = vadd.f32 %v841, 1e-05
        %v850 = vadd.f32 %v842, 1e-05
        %v851 = vadd.f32 %v843, 1e-05
        %v852 = vadd.f32 %v844, 1e-05
        %v853 = vadd.f32 %v845, 1e-05
        %v854 = vadd.f32 %v846, 1e-05
        %v855 = vadd.f32 %v847, 1e-05
        %v856 = vadd.f32 %v848, 1e-05
        %v857 = vrsqrt.pop %v849
        %v858 = vrsqrt.pop %v850
        %v859 = vrsqrt.pop %v851
        %v860 = vrsqrt.pop %v852
        %v861 = vrsqrt.pop %v853
        %v862 = vrsqrt.pop %v854
        %v863 = vrsqrt.pop %v855
        %v864 = vrsqrt.pop %v856
        %v865 = vmul.f32 %v809, %v857
        %v866 = vmul.f32 %v810, %v858
        %v867 = vmul.f32 %v811, %v859
        %v868 = vmul.f32 %v812, %v860
        %v869 = vmul.f32 %v813, %v861
        %v870 = vmul.f32 %v814, %v862
        %v871 = vmul.f32 %v815, %v863
        %v872 = vmul.f32 %v816, %v864
        %v874 = vlaneseq
        %v875 = vshrl.u32 %v874, 7
        %v876 = vsub.s32 0, %v875
        %v877 = vrot.slane %v507, %v876
        %v879 = vmul.f32 %v865, %v877
        %v880 = vmul.f32 %v866, %v877
        %v881 = vmul.f32 %v867, %v877
        %v882 = vmul.f32 %v868, %v877
        %v883 = vmul.f32 %v869, %v877
        %v884 = vmul.f32 %v870, %v877
        %v885 = vmul.f32 %v871, %v877
        %v886 = vmul.f32 %v872, %v877
        %v888 = vlaneseq
        %v889 = vshrl.u32 %v888, 7
        %v890 = vsub.s32 0, %v889
        %v891 = vrot.slane %v508, %v890
        %v893 = vadd.f32 %v879, %v891
        %v894 = vadd.f32 %v880, %v891
        %v895 = vadd.f32 %v881, %v891
        %v896 = vadd.f32 %v882, %v891
        %v897 = vadd.f32 %v883, %v891
        %v898 = vadd.f32 %v884, %v891
        %v899 = vadd.f32 %v885, %v891
        %v900 = vadd.f32 %v886, %v891
        %v901 = vadd.f32 %v893, %v611
        %v902 = vadd.f32 %v894, %v616
        %v903 = vadd.f32 %v895, %v621
        %v904 = vadd.f32 %v896, %v626
        %v905 = vadd.f32 %v897, %v631
        %v906 = vadd.f32 %v898, %v636
        %v907 = vadd.f32 %v899, %v641
        %v908 = vadd.f32 %v900, %v646
        %909 = vadd.xlane.f32.xlu0 %v901
        %v910 = vpop.xlane.xlu0 %909
        %911 = vadd.xlane.f32.xlu0 %v902
        %v912 = vpop.xlane.xlu0 %911
        %913 = vadd.xlane.f32.xlu0 %v903
        %v914 = vpop.xlane.xlu0 %913
        %915 = vadd.xlane.f32.xlu0 %v904
        %v916 = vpop.xlane.xlu0 %915
        %917 = vadd.xlane.f32.xlu0 %v905
        %v918 = vpop.xlane.xlu0 %917
        %919 = vadd.xlane.f32.xlu0 %v906
        %v920 = vpop.xlane.xlu0 %919
        %921 = vadd.xlane.f32.xlu0 %v907
        %v922 = vpop.xlane.xlu0 %921
        %923 = vadd.xlane.f32.xlu0 %v908
        %v924 = vpop.xlane.xlu0 %923
        %v925 = vmul.f32 %v910, %v800
        %v926 = vmul.f32 %v912, %v800
        %v927 = vmul.f32 %v914, %v800
        %v928 = vmul.f32 %v916, %v800
        %v929 = vmul.f32 %v918, %v800
        %v930 = vmul.f32 %v920, %v800
        %v931 = vmul.f32 %v922, %v800
        %v932 = vmul.f32 %v924, %v800
        %v933 = vsub.f32 %v901, %v925
        %v934 = vsub.f32 %v902, %v926
        %v935 = vsub.f32 %v903, %v927
        %v936 = vsub.f32 %v904, %v928
        %v937 = vsub.f32 %v905, %v929
        %v938 = vsub.f32 %v906, %v930
        %v939 = vsub.f32 %v907, %v931
        %v940 = vsub.f32 %v908, %v932
        %v941 = vmul.f32 %v933, %v933
        %v942 = vmul.f32 %v934, %v934
        %v943 = vmul.f32 %v935, %v935
        %v944 = vmul.f32 %v936, %v936
        %v945 = vmul.f32 %v937, %v937
        %v946 = vmul.f32 %v938, %v938
        %v947 = vmul.f32 %v939, %v939
        %v948 = vmul.f32 %v940, %v940
        %949 = vadd.xlane.f32.xlu0 %v941
        %v950 = vpop.xlane.xlu0 %949
        %951 = vadd.xlane.f32.xlu0 %v942
        %v952 = vpop.xlane.xlu0 %951
        %953 = vadd.xlane.f32.xlu0 %v943
        %v954 = vpop.xlane.xlu0 %953
        %955 = vadd.xlane.f32.xlu0 %v944
        %v956 = vpop.xlane.xlu0 %955
        %957 = vadd.xlane.f32.xlu0 %v945
        %v958 = vpop.xlane.xlu0 %957
        %959 = vadd.xlane.f32.xlu0 %v946
        %v960 = vpop.xlane.xlu0 %959
        %961 = vadd.xlane.f32.xlu0 %v947
        %v962 = vpop.xlane.xlu0 %961
        %963 = vadd.xlane.f32.xlu0 %v948
        %v964 = vpop.xlane.xlu0 %963
        %v965 = vmul.f32 %v950, %v800
        %v966 = vmul.f32 %v952, %v800
        %v967 = vmul.f32 %v954, %v800
        %v968 = vmul.f32 %v956, %v800
        %v969 = vmul.f32 %v958, %v800
        %v970 = vmul.f32 %v960, %v800
        %v971 = vmul.f32 %v962, %v800
        %v972 = vmul.f32 %v964, %v800
        %v973 = vadd.f32 %v965, 1e-05
        %v974 = vadd.f32 %v966, 1e-05
        %v975 = vadd.f32 %v967, 1e-05
        %v976 = vadd.f32 %v968, 1e-05
        %v977 = vadd.f32 %v969, 1e-05
        %v978 = vadd.f32 %v970, 1e-05
        %v979 = vadd.f32 %v971, 1e-05
        %v980 = vadd.f32 %v972, 1e-05
        %v981 = vrsqrt.pop %v973
        %v982 = vrsqrt.pop %v974
        %v983 = vrsqrt.pop %v975
        %v984 = vrsqrt.pop %v976
        %v985 = vrsqrt.pop %v977
        %v986 = vrsqrt.pop %v978
        %v987 = vrsqrt.pop %v979
        %v988 = vrsqrt.pop %v980
        %v989 = vmul.f32 %v933, %v981
        %v990 = vmul.f32 %v934, %v982
        %v991 = vmul.f32 %v935, %v983
        %v992 = vmul.f32 %v936, %v984
        %v993 = vmul.f32 %v937, %v985
        %v994 = vmul.f32 %v938, %v986
        %v995 = vmul.f32 %v939, %v987
        %v996 = vmul.f32 %v940, %v988
        %v998 = vlaneseq
        %v999 = vshrl.u32 %v998, 7
        %v1000 = vsub.s32 0, %v999
        %v1001 = vrot.slane %v509, %v1000
        %v1003 = vmul.f32 %v989, %v1001
        %v1004 = vmul.f32 %v990, %v1001
        %v1005 = vmul.f32 %v991, %v1001
        %v1006 = vmul.f32 %v992, %v1001
        %v1007 = vmul.f32 %v993, %v1001
        %v1008 = vmul.f32 %v994, %v1001
        %v1009 = vmul.f32 %v995, %v1001
        %v1010 = vmul.f32 %v996, %v1001
        %v1012 = vlaneseq
        %v1013 = vshrl.u32 %v1012, 7
        %v1014 = vsub.s32 0, %v1013
        %v1015 = vrot.slane %v510, %v1014
        %v1017 = vadd.f32 %v1003, %v1015
        %v1018 = vadd.f32 %v1004, %v1015
        %v1019 = vadd.f32 %v1005, %v1015
        %v1020 = vadd.f32 %v1006, %v1015
        %v1021 = vadd.f32 %v1007, %v1015
        %v1022 = vadd.f32 %v1008, %v1015
        %v1023 = vadd.f32 %v1009, %v1015
        %v1024 = vadd.f32 %v1010, %v1015
        %v1025 = vadd.f32 %v1017, %v611
        %v1026 = vadd.f32 %v1018, %v616
        %v1027 = vadd.f32 %v1019, %v621
        %v1028 = vadd.f32 %v1020, %v626
        %v1029 = vadd.f32 %v1021, %v631
        %v1030 = vadd.f32 %v1022, %v636
        %v1031 = vadd.f32 %v1023, %v641
        %v1032 = vadd.f32 %v1024, %v646
        %1033 = vadd.xlane.f32.xlu0 %v1025
        %v1034 = vpop.xlane.xlu0 %1033
        %1035 = vadd.xlane.f32.xlu0 %v1026
        %v1036 = vpop.xlane.xlu0 %1035
        %1037 = vadd.xlane.f32.xlu0 %v1027
        %v1038 = vpop.xlane.xlu0 %1037
        %1039 = vadd.xlane.f32.xlu0 %v1028
        %v1040 = vpop.xlane.xlu0 %1039
        %1041 = vadd.xlane.f32.xlu0 %v1029
        %v1042 = vpop.xlane.xlu0 %1041
        %1043 = vadd.xlane.f32.xlu0 %v1030
        %v1044 = vpop.xlane.xlu0 %1043
        %1045 = vadd.xlane.f32.xlu0 %v1031
        %v1046 = vpop.xlane.xlu0 %1045
        %1047 = vadd.xlane.f32.xlu0 %v1032
        %v1048 = vpop.xlane.xlu0 %1047
        %v1049 = vmul.f32 %v1034, %v800
        %v1050 = vmul.f32 %v1036, %v800
        %v1051 = vmul.f32 %v1038, %v800
        %v1052 = vmul.f32 %v1040, %v800
        %v1053 = vmul.f32 %v1042, %v800
        %v1054 = vmul.f32 %v1044, %v800
        %v1055 = vmul.f32 %v1046, %v800
        %v1056 = vmul.f32 %v1048, %v800
        %v1057 = vsub.f32 %v1025, %v1049
        %v1058 = vsub.f32 %v1026, %v1050
        %v1059 = vsub.f32 %v1027, %v1051
        %v1060 = vsub.f32 %v1028, %v1052
        %v1061 = vsub.f32 %v1029, %v1053
        %v1062 = vsub.f32 %v1030, %v1054
        %v1063 = vsub.f32 %v1031, %v1055
        %v1064 = vsub.f32 %v1032, %v1056
        %v1065 = vmul.f32 %v1057, %v1057
        %v1066 = vmul.f32 %v1058, %v1058
        %v1067 = vmul.f32 %v1059, %v1059
        %v1068 = vmul.f32 %v1060, %v1060
        %v1069 = vmul.f32 %v1061, %v1061
        %v1070 = vmul.f32 %v1062, %v1062
        %v1071 = vmul.f32 %v1063, %v1063
        %v1072 = vmul.f32 %v1064, %v1064
        %1073 = vadd.xlane.f32.xlu0 %v1065
        %v1074 = vpop.xlane.xlu0 %1073
        %1075 = vadd.xlane.f32.xlu0 %v1066
        %v1076 = vpop.xlane.xlu0 %1075
        %1077 = vadd.xlane.f32.xlu0 %v1067
        %v1078 = vpop.xlane.xlu0 %1077
        %1079 = vadd.xlane.f32.xlu0 %v1068
        %v1080 = vpop.xlane.xlu0 %1079
        %1081 = vadd.xlane.f32.xlu0 %v1069
        %v1082 = vpop.xlane.xlu0 %1081
        %1083 = vadd.xlane.f32.xlu0 %v1070
        %v1084 = vpop.xlane.xlu0 %1083
        %1085 = vadd.xlane.f32.xlu0 %v1071
        %v1086 = vpop.xlane.xlu0 %1085
        %1087 = vadd.xlane.f32.xlu0 %v1072
        %v1088 = vpop.xlane.xlu0 %1087
        %v1089 = vmul.f32 %v1074, %v800
        %v1090 = vmul.f32 %v1076, %v800
        %v1091 = vmul.f32 %v1078, %v800
        %v1092 = vmul.f32 %v1080, %v800
        %v1093 = vmul.f32 %v1082, %v800
        %v1094 = vmul.f32 %v1084, %v800
        %v1095 = vmul.f32 %v1086, %v800
        %v1096 = vmul.f32 %v1088, %v800
        %v1097 = vadd.f32 %v1089, 1e-05
        %v1098 = vadd.f32 %v1090, 1e-05
        %v1099 = vadd.f32 %v1091, 1e-05
        %v1100 = vadd.f32 %v1092, 1e-05
        %v1101 = vadd.f32 %v1093, 1e-05
        %v1102 = vadd.f32 %v1094, 1e-05
        %v1103 = vadd.f32 %v1095, 1e-05
        %v1104 = vadd.f32 %v1096, 1e-05
        %v1105 = vrsqrt.pop %v1097
        %v1106 = vrsqrt.pop %v1098
        %v1107 = vrsqrt.pop %v1099
        %v1108 = vrsqrt.pop %v1100
        %v1109 = vrsqrt.pop %v1101
        %v1110 = vrsqrt.pop %v1102
        %v1111 = vrsqrt.pop %v1103
        %v1112 = vrsqrt.pop %v1104
        %v1113 = vmul.f32 %v1057, %v1105
        %v1114 = vmul.f32 %v1058, %v1106
        %v1115 = vmul.f32 %v1059, %v1107
        %v1116 = vmul.f32 %v1060, %v1108
        %v1117 = vmul.f32 %v1061, %v1109
        %v1118 = vmul.f32 %v1062, %v1110
        %v1119 = vmul.f32 %v1063, %v1111
        %v1120 = vmul.f32 %v1064, %v1112
        %v1122 = vlaneseq
        %v1123 = vshrl.u32 %v1122, 7
        %v1124 = vsub.s32 0, %v1123
        %v1125 = vrot.slane %v511, %v1124
        %v1127 = vmul.f32 %v1113, %v1125
        %v1128 = vmul.f32 %v1114, %v1125
        %v1129 = vmul.f32 %v1115, %v1125
        %v1130 = vmul.f32 %v1116, %v1125
        %v1131 = vmul.f32 %v1117, %v1125
        %v1132 = vmul.f32 %v1118, %v1125
        %v1133 = vmul.f32 %v1119, %v1125
        %v1134 = vmul.f32 %v1120, %v1125
        %v1136 = vlaneseq
        %v1137 = vshrl.u32 %v1136, 7
        %v1138 = vsub.s32 0, %v1137
        %v1139 = vrot.slane %v512, %v1138
        %v1141 = vadd.f32 %v1127, %v1139
        %v1142 = vadd.f32 %v1128, %v1139
        %v1143 = vadd.f32 %v1129, %v1139
        %v1144 = vadd.f32 %v1130, %v1139
        %v1145 = vadd.f32 %v1131, %v1139
        %v1146 = vadd.f32 %v1132, %v1139
        %v1147 = vadd.f32 %v1133, %v1139
        %v1148 = vadd.f32 %v1134, %v1139
        %v1149 = vadd.f32 %v1141, %v611
        %v1150 = vadd.f32 %v1142, %v616
        %v1151 = vadd.f32 %v1143, %v621
        %v1152 = vadd.f32 %v1144, %v626
        %v1153 = vadd.f32 %v1145, %v631
        %v1154 = vadd.f32 %v1146, %v636
        %v1155 = vadd.f32 %v1147, %v641
        %v1156 = vadd.f32 %v1148, %v646
        %v1157 = vmul.f32 %v1149, 0.5
        %v1158 = vmul.f32 %v1150, 0.5
        %v1159 = vmul.f32 %v1151, 0.5
        %v1160 = vmul.f32 %v1152, 0.5
        %v1161 = vmul.f32 %v1153, 0.5
        %v1162 = vmul.f32 %v1154, 0.5
        %v1163 = vmul.f32 %v1155, 0.5
        %v1164 = vmul.f32 %v1156, 0.5
        %v1165 = vmul.f32 %v1149, 0.70710677
        %v1166 = vmul.f32 %v1150, 0.70710677
        %v1167 = vmul.f32 %v1151, 0.70710677
        %v1168 = vmul.f32 %v1152, 0.70710677
        %v1169 = vmul.f32 %v1153, 0.70710677
        %v1170 = vmul.f32 %v1154, 0.70710677
        %v1171 = vmul.f32 %v1155, 0.70710677
        %v1172 = vmul.f32 %v1156, 0.70710677
        %v1173 = verf.f32.pop %v1165
        %v1174 = verf.f32.pop %v1166
        %v1175 = verf.f32.pop %v1167
        %v1176 = verf.f32.pop %v1168
        %v1177 = verf.f32.pop %v1169
        %v1178 = verf.f32.pop %v1170
        %v1179 = verf.f32.pop %v1171
        %v1180 = verf.f32.pop %v1172
        %v1181 = vadd.f32 %v1173, 1.0
        %v1182 = vadd.f32 %v1174, 1.0
        %v1183 = vadd.f32 %v1175, 1.0
        %v1184 = vadd.f32 %v1176, 1.0
        %v1185 = vadd.f32 %v1177, 1.0
        %v1186 = vadd.f32 %v1178, 1.0
        %v1187 = vadd.f32 %v1179, 1.0
        %v1188 = vadd.f32 %v1180, 1.0
        %v1189 = vmul.f32 %v1157, %v1181
        %v1190 = vmul.f32 %v1158, %v1182
        %v1191 = vmul.f32 %v1159, %v1183
        %v1192 = vmul.f32 %v1160, %v1184
        %v1193 = vmul.f32 %v1161, %v1185
        %v1194 = vmul.f32 %v1162, %v1186
        %v1195 = vmul.f32 %v1163, %v1187
        %v1196 = vmul.f32 %v1164, %v1188
        %v1197 = vld [vmem:[#allocation8] sm:$0xff]
        %v1198 = vld [vmem:[#allocation8 + $0x8] sm:$0xff]
        %v1199 = vld [vmem:[#allocation8 + $0x10] sm:$0xff]
        %v1200 = vld [vmem:[#allocation8 + $0x18] sm:$0xff]
        %v1201 = vld [vmem:[#allocation8 + $0x20] sm:$0xff]
        %v1202 = vld [vmem:[#allocation8 + $0x28] sm:$0xff]
        %v1203 = vld [vmem:[#allocation8 + $0x30] sm:$0xff]
        %v1204 = vld [vmem:[#allocation8 + $0x38] sm:$0xff]
        %v1205 = vld [vmem:[#allocation8 + $0x40] sm:$0xff]
        %v1206 = vld [vmem:[#allocation8 + $0x48] sm:$0xff]
        %v1207 = vld [vmem:[#allocation8 + $0x50] sm:$0xff]
        %v1208 = vld [vmem:[#allocation8 + $0x58] sm:$0xff]
        %v1209 = vld [vmem:[#allocation8 + $0x60] sm:$0xff]
        %v1210 = vld [vmem:[#allocation8 + $0x68] sm:$0xff]
        %v1211 = vld [vmem:[#allocation8 + $0x70] sm:$0xff]
        %v1212 = vld [vmem:[#allocation8 + $0x78] sm:$0xff]
        %v1214 = vlaneseq
        %v1215 = vshrl.u32 %v1214, 7
        %v1216 = vsub.s32 0, %v1215
        %v1217 = vrot.slane %v513, %v1216
        %1219 = vmatprep.subr.mxu0 0.0
        %1220 = vmatpush1.msra.mxu0 %v1197
        %1221 = vmatprep.subr.mxu0 0.0
        %1222 = vmatpush1.msra.mxu0 %v1198
        %1223 = vmatprep.subr.mxu0 0.0
        %1224 = vmatpush1.msra.mxu0 %v1199
        %1225 = vmatprep.subr.mxu0 0.0
        %1226 = vmatpush1.msra.mxu0 %v1200
        %1227 = vmatprep.subr.mxu0 0.0
        %1228 = vmatpush1.msra.mxu0 %v1201
        %1229 = vmatprep.subr.mxu0 0.0
        %1230 = vmatpush1.msra.mxu0 %v1202
        %1231 = vmatprep.subr.mxu0 0.0
        %1232 = vmatpush1.msra.mxu0 %v1203
        %1233 = vmatprep.subr.mxu0 0.0
        %1234 = vmatpush1.msra.mxu0 %v1204
        %1235 = vmatprep.subr.mxu0 0.0
        %1236 = vmatpush1.msra.mxu0 %v1205
        %1237 = vmatprep.subr.mxu0 0.0
        %1238 = vmatpush1.msra.mxu0 %v1206
        %1239 = vmatprep.subr.mxu0 0.0
        %1240 = vmatpush1.msra.mxu0 %v1207
        %1241 = vmatprep.subr.mxu0 0.0
        %1242 = vmatpush1.msra.mxu0 %v1208
        %1243 = vmatprep.subr.mxu0 0.0
        %1244 = vmatpush1.msra.mxu0 %v1209
        %1245 = vmatprep.subr.mxu0 0.0
        %1246 = vmatpush1.msra.mxu0 %v1210
        %1247 = vmatprep.subr.mxu0 0.0
        %1248 = vmatpush1.msra.mxu0 %v1211
        %1249 = vmatprep.subr.mxu0 0.0
        %1250 = vmatpush1.msra.mxu0 %v1212
        %1251 = vmatprep.subr.mxu0 0.0
        %1252 = vmatpush1.msra.mxu0 0.0
        %1253 = vmatprep.subr.mxu0 0.0
        %1254 = vmatpush1.msra.mxu0 0.0
        %1255 = vmatprep.subr.mxu0 0.0
        %1256 = vmatpush1.msra.mxu0 0.0
        %1257 = vmatprep.subr.mxu0 0.0
        %1258 = vmatpush1.msra.mxu0 0.0
        %1259 = vmatprep.subr.mxu0 0.0
        %1260 = vmatpush1.msra.mxu0 0.0
        %1261 = vmatprep.subr.mxu0 0.0
        %1262 = vmatpush1.msra.mxu0 0.0
        %1263 = vmatprep.subr.mxu0 0.0
        %1264 = vmatpush1.msra.mxu0 0.0
        %1265 = vmatprep.subr.mxu0 0.0
        %1266 = vmatpush1.msra.mxu0 0.0
        %1267 = vmatprep.subr.mxu0 0.0
        %1268 = vmatpush1.msra.mxu0 0.0
        %1269 = vmatprep.subr.mxu0 0.0
        %1270 = vmatpush1.msra.mxu0 0.0
        %1271 = vmatprep.subr.mxu0 0.0
        %1272 = vmatpush1.msra.mxu0 0.0
        %1273 = vmatprep.subr.mxu0 0.0
        %1274 = vmatpush1.msra.mxu0 0.0
        %1275 = vmatprep.subr.mxu0 0.0
        %1276 = vmatpush1.msra.mxu0 0.0
        %1277 = vmatprep.subr.mxu0 0.0
        %1278 = vmatpush1.msra.mxu0 0.0
        %1279 = vmatprep.subr.mxu0 0.0
        %1280 = vmatpush1.msra.mxu0 0.0
        %1281 = vmatprep.subr.mxu0 0.0
        %1282 = vmatpush1.msra.mxu0 0.0
        %1283 = vmatprep.mubr.f32.mxu0 0.0
        %1284 = vmatmul.mubr.f32.gmra.mrb[0].mxu0 %v1189
        %v1285 = vpop.f32.mrb[0].mxu0
        %v1286 = vadd.f32 %v1217, %v1285
        %v1287 = vpop.f32.mrb[0].mxu0
        %1288 = vmatprep.mubr.f32.mxu0 0.0
        %1289 = vmatmul.mubr.f32.gmra.mrb[0].mxu0 %v1190
        %v1290 = vpop.f32.mrb[0].mxu0
        %v1291 = vadd.f32 %v1217, %v1290
        %v1292 = vpop.f32.mrb[0].mxu0
        %1293 = vmatprep.mubr.f32.mxu0 0.0
        %1294 = vmatmul.mubr.f32.gmra.mrb[0].mxu0 %v1191
        %v1295 = vpop.f32.mrb[0].mxu0
        %v1296 = vadd.f32 %v1217, %v1295
        %v1297 = vpop.f32.mrb[0].mxu0
        %1298 = vmatprep.mubr.f32.mxu0 0.0
        %1299 = vmatmul.mubr.f32.gmra.mrb[0].mxu0 %v1192
        %v1300 = vpop.f32.mrb[0].mxu0
        %v1301 = vadd.f32 %v1217, %v1300
        %v1302 = vpop.f32.mrb[0].mxu0
        %1303 = vmatprep.mubr.f32.mxu0 0.0
        %1304 = vmatmul.mubr.f32.gmra.mrb[0].mxu0 %v1193
        %v1305 = vpop.f32.mrb[0].mxu0
        %v1306 = vadd.f32 %v1217, %v1305
        %v1307 = vpop.f32.mrb[0].mxu0
        %1308 = vmatprep.mubr.f32.mxu0 0.0
        %1309 = vmatmul.mubr.f32.gmra.mrb[0].mxu0 %v1194
        %v1310 = vpop.f32.mrb[0].mxu0
        %v1311 = vadd.f32 %v1217, %v1310
        %v1312 = vpop.f32.mrb[0].mxu0
        %1313 = vmatprep.mubr.f32.mxu0 0.0
        %1314 = vmatmul.mubr.f32.gmra.mrb[0].mxu0 %v1195
        %v1315 = vpop.f32.mrb[0].mxu0
        %v1316 = vadd.f32 %v1217, %v1315
        %v1317 = vpop.f32.mrb[0].mxu0
        %1318 = vmatprep.mubr.f32.mxu0 0.0
        %1319 = vmatmul.mubr.f32.gmra.mrb[0].mxu0 %v1196
        %v1320 = vpop.f32.mrb[0].mxu0
        %v1321 = vadd.f32 %v1217, %v1320
        %v1322 = vpop.f32.mrb[0].mxu0
        %1323 = vdwg.mxu0
        %1324 = vst [vmem:[%s502] sm:$0xff] %v1286
        %1325 = vst [vmem:[%s502 + $0x8] sm:$0xff] %v1291
        %1326 = vst [vmem:[%s502 + $0x10] sm:$0xff] %v1296
        %1327 = vst [vmem:[%s502 + $0x18] sm:$0xff] %v1301
        %1328 = vst [vmem:[%s502 + $0x20] sm:$0xff] %v1306
        %1329 = vst [vmem:[%s502 + $0x28] sm:$0xff] %v1311
        %1330 = vst [vmem:[%s502 + $0x30] sm:$0xff] %v1316
        %1331 = vst [vmem:[%s502 + $0x38] sm:$0xff] %v1321
        %s1332 = sand.u32 %s318, 1
        %s1333 = scalar_lea.sflag [#allocation4], %s1332
        %s1334 = sand.u32 %s318, 1
        %s1335 = smul.addr %s1334, 64
        %s1336 = scalar_lea.vmem [#allocation10], %s1335
        // Predicated region
        $region89: #{tpu_custom_call.1} parent=71 // pred_check
          %p1337 = pneg %p328
        $region90: #{tpu_custom_call.1} parent=71 // pred_check_branch
          %1339 = sbr.rel (%p1337) target = $region92
        $region91: #{tpu_custom_call.1} parent=71 // pred_region
          %s1340 = smul.u32 8, %s32
          %s1342 = ssub.s32 1024, 1024
          %1343 = vsyncadd %s1333, %s1342
          %s1344 = smul.addr %s1340, 128
          %s1345 = scalar_lea.hbm %s13, %s1344
          %s1346 = sshll.u32 %s1336, 4
          %s1347 = int_to_ptr.vmem [resolvable:$true] %s1346
          %1352 = dma.vmem_to_hbm [thread:$0]  %s1347, 1024, %s1345, %s1333, 128, 128, 8
        $region92: #{tpu_custom_call.1} parent=71 // pred_fallthru
          _
      $region72: #{tpu_custom_call.1} parent=5 // pred_fallthru
        _
      %p1353 = scmp.le.s32.totalorder 2, %s27
      // Predicated region
      $region93: #{tpu_custom_call.1} parent=5 // pred_check
        %p1354 = pneg %p1353
      $region94: #{tpu_custom_call.1} parent=5 // pred_check_branch
        %1356 = sbr.rel (%p1354) target = $region96
      $region95: #{tpu_custom_call.1} parent=5 // pred_region
        %s1357 = ssub.s32 %s27, 2
        // Predicated region
        $region97: #{tpu_custom_call.1} parent=95 // pred_check
          %p1358 = pneg %p334
        $region98: #{tpu_custom_call.1} parent=95 // pred_check_branch
          %1360 = sbr.rel (%p1358) target = $region100
        $region99: #{tpu_custom_call.1} parent=95 // pred_region
          %s1361 = sand.u32 %s319, 1
          %s1362 = scalar_lea.sflag [#allocation4], %s1361
          %s1363 = sand.u32 %s319, 1
          %s1364 = smul.addr %s1363, 64
          %s1365 = scalar_lea.vmem [#allocation10], %s1364
          %1366 = dma.done %s1362, 1024
        $region100: #{tpu_custom_call.1} parent=95 // pred_fallthru
          _
      $region96: #{tpu_custom_call.1} parent=5 // pred_fallthru
        _
    $region6: #{tpu_custom_call.1} parent=1 // loop_footer
      %s31 = sadd.s32 1, %s27
    $region7: #{tpu_custom_call.1} parent=1 // loop_footer_branch
      %26 = sbr.rel target = $region3
    $region8: #{tpu_custom_call.1} parent=1 // loop_exit
      _
    %1367 = vsyncpa [#allocation3], 1
    %s1368 = scalar_lea.sflag [#allocation3], 1
    %1369 = vsyncpa %s1368, 1
    %1370 = vsyncpa [#allocation6], 1
    %1371 = vsyncpa [#allocation9], 1
    %1372 = vsyncpa [#allocation4], 1
    %s1373 = scalar_lea.sflag [#allocation4], 1
    %1374 = vsyncpa %s1373, 1

// kernel: tpu_custom_call.1
$region0: #{tpu_custom_call.1}
  #allocation0 [shape = 'u32[]', space=smem, size = 0x4, offset = 0x4, fixed_abs, tag = 'smem constant byte address 0x4 - core index']
  #allocation1 [shape = 'u32[144,128]{1,0:T(1,128)}', space=vmem, size = 0x12000, scoped, tag = 'internal scratch']
  %s0 = inlined_call_operand.hbm [shape: f32[128,128], index: 0, kind: input, shape index: {}]
  %s1 = inlined_call_operand.hbm [shape: f32[128,128], index: 1, kind: input, shape index: {}]
  %s2 = inlined_call_operand.vmem [shape: f32[1,128], index: 2, kind: input, shape index: {}]
  %s3 = inlined_call_operand.hbm [shape: f32[128,128], index: 3, kind: input, shape index: {}]
  %s4 = inlined_call_operand.vmem [shape: f32[1,128], index: 4, kind: input, shape index: {}]
  %s5 = inlined_call_operand.vmem [shape: f32[1,128], index: 5, kind: input, shape index: {}]
  %s6 = inlined_call_operand.vmem [shape: f32[1,128], index: 6, kind: input, shape index: {}]
  %s7 = inlined_call_operand.vmem [shape: f32[1,128], index: 7, kind: input, shape index: {}]
  %s8 = inlined_call_operand.vmem [shape: f32[1,128], index: 8, kind: input, shape index: {}]
  %s9 = inlined_call_operand.vmem [shape: f32[1,128], index: 9, kind: input, shape index: {}]
  %s10 = inlined_call_operand.vmem [shape: f32[1,128], index: 10, kind: input, shape index: {}]
  %s11 = inlined_call_operand.hbm [shape: f32[128,128], index: 11, kind: input, shape index: {}]
  %s12 = inlined_call_operand.vmem [shape: f32[1,128], index: 12, kind: input, shape index: {}]
  %s13 = inlined_call_operand.hbm [shape: f32[128,128], index: 13, kind: output, shape index: {}]
  %s14 = sld [smem:[#allocation0]]
  $region101: #{tpu_custom_call.1} parent=0
    _
  %s16 = ssub.s32 1, %s14
  %s17 = scalar_select 0, %s16, %s14
  $region1: #{tpu_custom_call.1} parent=0
    #allocation2 [shape = 'u8[65536]{0}', space=vmem, size = 0x10000, scoped, tag = 'input window, operand 0']
    #allocation3 [shape = 's32[2]{0}', space=sflag, size = 0x8, scoped, tag = 'scoped memory for tpu_custom_call.1']
    #allocation4 [shape = 's32[2]{0}', space=sflag, size = 0x8, scoped, tag = 'scoped memory for tpu_custom_call.1']
    #allocation5 [shape = 'u8[65536]{0}', space=vmem, size = 0x10000, scoped, tag = 'input window, operand 1, single buffered']
    #allocation6 [shape = 's32[1]{0}', space=sflag, size = 0x4, scoped, tag = 'scoped memory for tpu_custom_call.1']
    #allocation7 [shape = 'u8[65536]{0}', space=vmem, size = 0x10000, scoped, tag = 'input window, operand 3, single buffered']
    #allocation8 [shape = 'u8[65536]{0}', space=vmem, size = 0x10000, scoped, tag = 'input window, operand 11, single buffered']
    #allocation9 [shape = 's32[1]{0}', space=sflag, size = 0x4, scoped, tag = 'scoped memory for tpu_custom_call.1']
    #allocation10 [shape = 'u8[65536]{0}', space=vmem, size = 0x10000, scoped, tag = 'output window, operand 0']
    %18 = vsyncpa [#allocation3], 0
    %s19 = scalar_lea.sflag [#allocation3], 1
    %20 = vsyncpa %s19, 0
    %21 = vsyncpa [#allocation6], 0
    %22 = vsyncpa [#allocation9], 0
    %23 = vsyncpa [#allocation4], 0
    %s24 = scalar_lea.sflag [#allocation4], 1
    %25 = vsyncpa %s24, 0
    loop: start=0, step=1, limit=4
    $region2: #{tpu_custom_call.1} parent=1 // loop_pre_header
      _
    $region3: #{tpu_custom_call.1} parent=1 // loop_header
      %s27 = sphi 0, %s31
      %p28 = scmp.ge.s32.totalorder %s27, 4
      %s37 = sphi 0, %s39
      %s40 = sphi 0, %s37
      %s41 = sphi 0, %s40
      %s57 = sphi 0, %s41
      %s61 = sphi 0, %s61
      %s63 = sphi 0, %s61
      %s64 = sphi 0, %s63
      %s78 = sphi 0, %s64
      %s82 = sphi 0, %s82
      %s84 = sphi 0, %s82
      %s85 = sphi 0, %s84
      %s99 = sphi 0, %s85
      %s103 = sphi 0, %s103
      %s105 = sphi 0, %s103
      %s106 = sphi 0, %s105
      %s120 = sphi 0, %s106
      %s124 = sphi 0, %s124
      %s126 = sphi 0, %s124
      %s127 = sphi 0, %s126
      %s141 = sphi 0, %s127
      %s145 = sphi 0, %s145
      %s147 = sphi 0, %s145
      %s148 = sphi 0, %s147
      %s162 = sphi 0, %s148
      %s166 = sphi 0, %s166
      %s168 = sphi 0, %s166
      %s169 = sphi 0, %s168
      %s183 = sphi 0, %s169
      %s187 = sphi 0, %s187
      %s189 = sphi 0, %s187
      %s190 = sphi 0, %s189
      %s204 = sphi 0, %s190
      %s208 = sphi 0, %s208
      %s210 = sphi 0, %s208
      %s211 = sphi 0, %s210
      %s225 = sphi 0, %s211
      %s229 = sphi 0, %s229
      %s231 = sphi 0, %s229
      %s232 = sphi 0, %s231
      %s246 = sphi 0, %s232
      %s250 = sphi 0, %s250
      %s252 = sphi 0, %s250
      %s253 = sphi 0, %s252
      %s267 = sphi 0, %s253
      %s271 = sphi 0, %s271
      %s273 = sphi 0, %s271
      %s274 = sphi 0, %s273
      %s288 = sphi 0, %s274
      %s292 = sphi 0, %s292
      %s294 = sphi 0, %s292
      %s295 = sphi 0, %s294
      %s309 = sphi 0, %s295
      %s315 = sphi 0, %s317
      %s318 = sphi 0, %s315
      %s319 = sphi 0, %s318
      %s335 = sphi 0, %s319
    $region4: #{tpu_custom_call.1} parent=1 // loop_header_branch
      %30 = sbr.rel (%p28) target = $region8
    $region5: #{tpu_custom_call.1} parent=1 // loop_body
      %s32 = ssub.s32 %s27, 1
      %s33 = ssub.s32 %s27, 2
      %s34 = sadd.s32 %s27, 1
      %s35 = ssub.s32 %s27, %s34
      %p36 = scmp.eq.s32.totalorder %s35, 0
      %s38 = sadd.s32 %s37, 1
      %s39 = scalar_select %p36, %s37, %s38
      %p42 = pneg %p36
      %p43 = scmp.eq.s32.totalorder %s27, 1
      %p44 = por %p42, %p43
      %p45 = scmp.ne.s32.totalorder %s37, %s40
      %p46 = scmp.eq.s32.totalorder %s27, 0
      %p47 = por %p45, %p46
      %p48 = scmp.ne.s32.totalorder %s37, %s40
      %p49 = scmp.eq.s32.totalorder %s32, 1
      %p50 = por %p48, %p49
      %p51 = scmp.ne.s32.totalorder %s40, %s41
      %p52 = scmp.eq.s32.totalorder %s32, 0
      %p53 = por %p51, %p52
      %p54 = scmp.ne.s32.totalorder %s40, %s41
      %p55 = scmp.eq.s32.totalorder %s33, 1
      %p56 = por %p54, %p55
      %p58 = scmp.ne.s32.totalorder %s41, %s57
      %p59 = scmp.eq.s32.totalorder %s33, 0
      %p60 = por %p58, %p59
      %s62 = sadd.s32 %s61, 1
      %p65 = scmp.eq.s32.totalorder %s27, 1
      %p66 = scmp.ne.s32.totalorder %s61, %s63
      %p67 = scmp.eq.s32.totalorder %s27, 0
      %p68 = por %p66, %p67
      %p69 = scmp.ne.s32.totalorder %s61, %s63
      %p70 = scmp.eq.s32.totalorder %s32, 1
      %p71 = por %p69, %p70
      %p72 = scmp.ne.s32.totalorder %s63, %s64
      %p73 = scmp.eq.s32.totalorder %s32, 0
      %p74 = por %p72, %p73
      %p75 = scmp.ne.s32.totalorder %s63, %s64
      %p76 = scmp.eq.s32.totalorder %s33, 1
      %p77 = por %p75, %p76
      %p79 = scmp.ne.s32.totalorder %s64, %s78
      %p80 = scmp.eq.s32.totalorder %s33, 0
      %p81 = por %p79, %p80
      %s83 = sadd.s32 %s82, 1
      %p86 = scmp.eq.s32.totalorder %s27, 1
      %p87 = scmp.ne.s32.totalorder %s82, %s84
      %p88 = scmp.eq.s32.totalorder %s27, 0
      %p89 = por %p87, %p88
      %p90 = scmp.ne.s32.totalorder %s82, %s84
      %p91 = scmp.eq.s32.totalorder %s32, 1
      %p92 = por %p90, %p91
      %p93 = scmp.ne.s32.totalorder %s84, %s85
      %p94 = scmp.eq.s32.totalorder %s32, 0
      %p95 = por %p93, %p94
      %p96 = scmp.ne.s32.totalorder %s84, %s85
      %p97 = scmp.eq.s32.totalorder %s33, 1
      %p98 = por %p96, %p97
      %p100 = scmp.ne.s32.totalorder %s85, %s99
      %p101 = scmp.eq.s32.totalorder %s33, 0
      %p102 = por %p100, %p101
      %s104 = sadd.s32 %s103, 1
      %p107 = scmp.eq.s32.totalorder %s27, 1
      %p108 = scmp.ne.s32.totalorder %s103, %s105
      %p109 = scmp.eq.s32.totalorder %s27, 0
      %p110 = por %p108, %p109
      %p111 = scmp.ne.s32.totalorder %s103, %s105
      %p112 = scmp.eq.s32.totalorder %s32, 1
      %p113 = por %p111, %p112
      %p114 = scmp.ne.s32.totalorder %s105, %s106
      %p115 = scmp.eq.s32.totalorder %s32, 0
      %p116 = por %p114, %p115
      %p117 = scmp.ne.s32.totalorder %s105, %s106
      %p118 = scmp.eq.s32.totalorder %s33, 1
      %p119 = por %p117, %p118
      %p121 = scmp.ne.s32.totalorder %s106, %s120
      %p122 = scmp.eq.s32.totalorder %s33, 0
      %p123 = por %p121, %p122
      %s125 = sadd.s32 %s124, 1
      %p128 = scmp.eq.s32.totalorder %s27, 1
      %p129 = scmp.ne.s32.totalorder %s124, %s126
      %p130 = scmp.eq.s32.totalorder %s27, 0
      %p131 = por %p129, %p130
      %p132 = scmp.ne.s32.totalorder %s124, %s126
      %p133 = scmp.eq.s32.totalorder %s32, 1
      %p134 = por %p132, %p133
      %p135 = scmp.ne.s32.totalorder %s126, %s127
      %p136 = scmp.eq.s32.totalorder %s32, 0
      %p137 = por %p135, %p136
      %p138 = scmp.ne.s32.totalorder %s126, %s127
      %p139 = scmp.eq.s32.totalorder %s33, 1
      %p140 = por %p138, %p139
      %p142 = scmp.ne.s32.totalorder %s127, %s141
      %p143 = scmp.eq.s32.totalorder %s33, 0
      %p144 = por %p142, %p143
      %s146 = sadd.s32 %s145, 1
      %p149 = scmp.eq.s32.totalorder %s27, 1
      %p150 = scmp.ne.s32.totalorder %s145, %s147
      %p151 = scmp.eq.s32.totalorder %s27, 0
      %p152 = por %p150, %p151
      %p153 = scmp.ne.s32.totalorder %s145, %s147
      %p154 = scmp.eq.s32.totalorder %s32, 1
      %p155 = por %p153, %p154
      %p156 = scmp.ne.s32.totalorder %s147, %s148
      %p157 = scmp.eq.s32.totalorder %s32, 0
      %p158 = por %p156, %p157
      %p159 = scmp.ne.s32.totalorder %s147, %s148
      %p160 = scmp.eq.s32.totalorder %s33, 1
      %p161 = por %p159, %p160
      %p163 = scmp.ne.s32.totalorder %s148, %s162
      %p164 = scmp.eq.s32.totalorder %s33, 0
      %p165 = por %p163, %p164
      %s167 = sadd.s32 %s166, 1
      %p170 = scmp.eq.s32.totalorder %s27, 1
      %p171 = scmp.ne.s32.totalorder %s166, %s168
      %p172 = scmp.eq.s32.totalorder %s27, 0
      %p173 = por %p171, %p172
      %p174 = scmp.ne.s32.totalorder %s166, %s168
      %p175 = scmp.eq.s32.totalorder %s32, 1
      %p176 = por %p174, %p175
      %p177 = scmp.ne.s32.totalorder %s168, %s169
      %p178 = scmp.eq.s32.totalorder %s32, 0
      %p179 = por %p177, %p178
      %p180 = scmp.ne.s32.totalorder %s168, %s169
      %p181 = scmp.eq.s32.totalorder %s33, 1
      %p182 = por %p180, %p181
      %p184 = scmp.ne.s32.totalorder %s169, %s183
      %p185 = scmp.eq.s32.totalorder %s33, 0
      %p186 = por %p184, %p185
      %s188 = sadd.s32 %s187, 1
      %p191 = scmp.eq.s32.totalorder %s27, 1
      %p192 = scmp.ne.s32.totalorder %s187, %s189
      %p193 = scmp.eq.s32.totalorder %s27, 0
      %p194 = por %p192, %p193
      %p195 = scmp.ne.s32.totalorder %s187, %s189
      %p196 = scmp.eq.s32.totalorder %s32, 1
      %p197 = por %p195, %p196
      %p198 = scmp.ne.s32.totalorder %s189, %s190
      %p199 = scmp.eq.s32.totalorder %s32, 0
      %p200 = por %p198, %p199
      %p201 = scmp.ne.s32.totalorder %s189, %s190
      %p202 = scmp.eq.s32.totalorder %s33, 1
      %p203 = por %p201, %p202
      %p205 = scmp.ne.s32.totalorder %s190, %s204
      %p206 = scmp.eq.s32.totalorder %s33, 0
      %p207 = por %p205, %p206
      %s209 = sadd.s32 %s208, 1
      %p212 = scmp.eq.s32.totalorder %s27, 1
      %p213 = scmp.ne.s32.totalorder %s208, %s210
      %p214 = scmp.eq.s32.totalorder %s27, 0
      %p215 = por %p213, %p214
      %p216 = scmp.ne.s32.totalorder %s208, %s210
      %p217 = scmp.eq.s32.totalorder %s32, 1
      %p218 = por %p216, %p217
      %p219 = scmp.ne.s32.totalorder %s210, %s211
      %p220 = scmp.eq.s32.totalorder %s32, 0
      %p221 = por %p219, %p220
      %p222 = scmp.ne.s32.totalorder %s210, %s211
      %p223 = scmp.eq.s32.totalorder %s33, 1
      %p224 = por %p222, %p223
      %p226 = scmp.ne.s32.totalorder %s211, %s225
      %p227 = scmp.eq.s32.totalorder %s33, 0
      %p228 = por %p226, %p227
      %s230 = sadd.s32 %s229, 1
      %p233 = scmp.eq.s32.totalorder %s27, 1
      %p234 = scmp.ne.s32.totalorder %s229, %s231
      %p235 = scmp.eq.s32.totalorder %s27, 0
      %p236 = por %p234, %p235
      %p237 = scmp.ne.s32.totalorder %s229, %s231
      %p238 = scmp.eq.s32.totalorder %s32, 1
      %p239 = por %p237, %p238
      %p240 = scmp.ne.s32.totalorder %s231, %s232
      %p241 = scmp.eq.s32.totalorder %s32, 0
      %p242 = por %p240, %p241
      %p243 = scmp.ne.s32.totalorder %s231, %s232
      %p244 = scmp.eq.s32.totalorder %s33, 1
      %p245 = por %p243, %p244
      %p247 = scmp.ne.s32.totalorder %s232, %s246
      %p248 = scmp.eq.s32.totalorder %s33, 0
      %p249 = por %p247, %p248
      %s251 = sadd.s32 %s250, 1
      %p254 = scmp.eq.s32.totalorder %s27, 1
      %p255 = scmp.ne.s32.totalorder %s250, %s252
      %p256 = scmp.eq.s32.totalorder %s27, 0
      %p257 = por %p255, %p256
      %p258 = scmp.ne.s32.totalorder %s250, %s252
      %p259 = scmp.eq.s32.totalorder %s32, 1
      %p260 = por %p258, %p259
      %p261 = scmp.ne.s32.totalorder %s252, %s253
      %p262 = scmp.eq.s32.totalorder %s32, 0
      %p263 = por %p261, %p262
      %p264 = scmp.ne.s32.totalorder %s252, %s253
      %p265 = scmp.eq.s32.totalorder %s33, 1
      %p266 = por %p264, %p265
      %p268 = scmp.ne.s32.totalorder %s253, %s267
      %p269 = scmp.eq.s32.totalorder %s33, 0
      %p270 = por %p268, %p269
      %s272 = sadd.s32 %s271, 1
      %p275 = scmp.eq.s32.totalorder %s27, 1
      %p276 = scmp.ne.s32.totalorder %s271, %s273
      %p277 = scmp.eq.s32.totalorder %s27, 0
      %p278 = por %p276, %p277
      %p279 = scmp.ne.s32.totalorder %s271, %s273
      %p280 = scmp.eq.s32.totalorder %s32, 1
      %p281 = por %p279, %p280
      %p282 = scmp.ne.s32.totalorder %s273, %s274
      %p283 = scmp.eq.s32.totalorder %s32, 0
      %p284 = por %p282, %p283
      %p285 = scmp.ne.s32.totalorder %s273, %s274
      %p286 = scmp.eq.s32.totalorder %s33, 1
      %p287 = por %p285, %p286
      %p289 = scmp.ne.s32.totalorder %s274, %s288
      %p290 = scmp.eq.s32.totalorder %s33, 0
      %p291 = por %p289, %p290
      %s293 = sadd.s32 %s292, 1
      %p296 = scmp.eq.s32.totalorder %s27, 1
      %p297 = scmp.ne.s32.totalorder %s292, %s294
      %p298 = scmp.eq.s32.totalorder %s27, 0
      %p299 = por %p297, %p298
      %p300 = scmp.ne.s32.totalorder %s292, %s294
      %p301 = scmp.eq.s32.totalorder %s32, 1
      %p302 = por %p300, %p301
      %p303 = scmp.ne.s32.totalorder %s294, %s295
      %p304 = scmp.eq.s32.totalorder %s32, 0
      %p305 = por %p303, %p304
      %p306 = scmp.ne.s32.totalorder %s294, %s295
      %p307 = scmp.eq.s32.totalorder %s33, 1
      %p308 = por %p306, %p307
      %p310 = scmp.ne.s32.totalorder %s295, %s309
      %p311 = scmp.eq.s32.totalorder %s33, 0
      %p312 = por %p310, %p311
      %s313 = ssub.s32 %s27, %s34
      %p314 = scmp.eq.s32.totalorder %s313, 0
      %s316 = sadd.s32 %s315, 1
      %s317 = scalar_select %p314, %s315, %s316
      %p320 = pneg %p314
      %p321 = scmp.eq.s32.totalorder %s27, 1
      %p322 = por %p320, %p321
      %p323 = scmp.ne.s32.totalorder %s315, %s318
      %p324 = scmp.eq.s32.totalorder %s27, 0
      %p325 = por %p323, %p324
      %p326 = scmp.ne.s32.totalorder %s315, %s318
      %p327 = scmp.eq.s32.totalorder %s32, 1
      %p328 = por %p326, %p327
      %p329 = scmp.ne.s32.totalorder %s318, %s319
      %p330 = scmp.eq.s32.totalorder %s32, 0
      %p331 = por %p329, %p330
      %p332 = scmp.ne.s32.totalorder %s318, %s319
      %p333 = scmp.eq.s32.totalorder %s33, 1
      %p334 = por %p332, %p333
      %p336 = scmp.ne.s32.totalorder %s319, %s335
      %p337 = scmp.eq.s32.totalorder %s33, 0
      %p338 = por %p336, %p337
      %p339 = scmp.le.s32.totalorder 1, %s27
      %p340 = scmp.lt.s32.totalorder %s27, 3
      %p341 = pnand %p339, %p340
      %p342 = pneg %p341
      // Predicated region
      $region9: #{tpu_custom_call.1} parent=5 // pred_check
        _
      $region10: #{tpu_custom_call.1} parent=5 // pred_check_branch
        %344 = sbr.rel (%p341) target = $region12
      $region11: #{tpu_custom_call.1} parent=5 // pred_region
        %s345 = ssub.s32 %s27, 1
        // Predicated region
        $region13: #{tpu_custom_call.1} parent=11 // pred_check
          %p346 = pneg %p74
        $region14: #{tpu_custom_call.1} parent=11 // pred_check_branch
          %348 = sbr.rel (%p346) target = $region16
        $region15: #{tpu_custom_call.1} parent=11 // pred_region
          %s350 = ssub.s32 2048, 2048
          %351 = vsyncadd [#allocation6], %s350
          %s352 = sshll.u32 [#allocation5], 4
          %s353 = int_to_ptr.vmem [resolvable:$true] %s352
          %358 = dma.hbm_to_vmem [thread:$0]  %s1, 2048, %s353, [#allocation6], 128, 128, 8
        $region16: #{tpu_custom_call.1} parent=11 // pred_fallthru
          _
        // Predicated region
        $region17: #{tpu_custom_call.1} parent=11 // pred_check
          %p359 = pneg %p95
        $region18: #{tpu_custom_call.1} parent=11 // pred_check_branch
          %361 = sbr.rel (%p359) target = $region20
        $region19: #{tpu_custom_call.1} parent=11 // pred_region
          _
        $region20: #{tpu_custom_call.1} parent=11 // pred_fallthru
          _
        // Predicated region
        $region21: #{tpu_custom_call.1} parent=11 // pred_check
          %p362 = pneg %p116
        $region22: #{tpu_custom_call.1} parent=11 // pred_check_branch
          %364 = sbr.rel (%p362) target = $region24
        $region23: #{tpu_custom_call.1} parent=11 // pred_region
          %s366 = ssub.s32 2048, 2048
          %367 = vsyncadd [#allocation6], %s366
          %s368 = sshll.u32 [#allocation7], 4
          %s369 = int_to_ptr.vmem [resolvable:$true] %s368
          %374 = dma.hbm_to_vmem [thread:$0]  %s3, 2048, %s369, [#allocation6], 128, 128, 8
        $region24: #{tpu_custom_call.1} parent=11 // pred_fallthru
          _
        // Predicated region
        $region25: #{tpu_custom_call.1} parent=11 // pred_check
          %p375 = pneg %p137
        $region26: #{tpu_custom_call.1} parent=11 // pred_check_branch
          %377 = sbr.rel (%p375) target = $region28
        $region27: #{tpu_custom_call.1} parent=11 // pred_region
          _
        $region28: #{tpu_custom_call.1} parent=11 // pred_fallthru
          _
        // Predicated region
        $region29: #{tpu_custom_call.1} parent=11 // pred_check
          %p378 = pneg %p158
        $region30: #{tpu_custom_call.1} parent=11 // pred_check_branch
          %380 = sbr.rel (%p378) target = $region32
        $region31: #{tpu_custom_call.1} parent=11 // pred_region
          _
        $region32: #{tpu_custom_call.1} parent=11 // pred_fallthru
          _
        // Predicated region
        $region33: #{tpu_custom_call.1} parent=11 // pred_check
          %p381 = pneg %p179
        $region34: #{tpu_custom_call.1} parent=11 // pred_check_branch
          %383 = sbr.rel (%p381) target = $region36
        $region35: #{tpu_custom_call.1} parent=11 // pred_region
          _
        $region36: #{tpu_custom_call.1} parent=11 // pred_fallthru
          _
        // Predicated region
        $region37: #{tpu_custom_call.1} parent=11 // pred_check
          %p384 = pneg %p200
        $region38: #{tpu_custom_call.1} parent=11 // pred_check_branch
          %386 = sbr.rel (%p384) target = $region40
        $region39: #{tpu_custom_call.1} parent=11 // pred_region
          _
        $region40: #{tpu_custom_call.1} parent=11 // pred_fallthru
          _
        // Predicated region
        $region41: #{tpu_custom_call.1} parent=11 // pred_check
          %p387 = pneg %p221
        $region42: #{tpu_custom_call.1} parent=11 // pred_check_branch
          %389 = sbr.rel (%p387) target = $region44
        $region43: #{tpu_custom_call.1} parent=11 // pred_region
          _
        $region44: #{tpu_custom_call.1} parent=11 // pred_fallthru
          _
        // Predicated region
        $region45: #{tpu_custom_call.1} parent=11 // pred_check
          %p390 = pneg %p242
        $region46: #{tpu_custom_call.1} parent=11 // pred_check_branch
          %392 = sbr.rel (%p390) target = $region48
        $region47: #{tpu_custom_call.1} parent=11 // pred_region
          _
        $region48: #{tpu_custom_call.1} parent=11 // pred_fallthru
          _
        // Predicated region
        $region49: #{tpu_custom_call.1} parent=11 // pred_check
          %p393 = pneg %p263
        $region50: #{tpu_custom_call.1} parent=11 // pred_check_branch
          %395 = sbr.rel (%p393) target = $region52
        $region51: #{tpu_custom_call.1} parent=11 // pred_region
          _
        $region52: #{tpu_custom_call.1} parent=11 // pred_fallthru
          _
        // Predicated region
        $region53: #{tpu_custom_call.1} parent=11 // pred_check
          %p396 = pneg %p284
        $region54: #{tpu_custom_call.1} parent=11 // pred_check_branch
          %398 = sbr.rel (%p396) target = $region56
        $region55: #{tpu_custom_call.1} parent=11 // pred_region
          %s400 = ssub.s32 2048, 2048
          %401 = vsyncadd [#allocation9], %s400
          %s402 = sshll.u32 [#allocation8], 4
          %s403 = int_to_ptr.vmem [resolvable:$true] %s402
          %408 = dma.hbm_to_vmem [thread:$0]  %s11, 2048, %s403, [#allocation9], 128, 128, 8
        $region56: #{tpu_custom_call.1} parent=11 // pred_fallthru
          _
        // Predicated region
        $region57: #{tpu_custom_call.1} parent=11 // pred_check
          %p409 = pneg %p305
        $region58: #{tpu_custom_call.1} parent=11 // pred_check_branch
          %411 = sbr.rel (%p409) target = $region60
        $region59: #{tpu_custom_call.1} parent=11 // pred_region
          _
        $region60: #{tpu_custom_call.1} parent=11 // pred_fallthru
          _
      $region12: #{tpu_custom_call.1} parent=5 // pred_fallthru
        _
      %p412 = scmp.lt.s32.totalorder %s27, 2
      // Predicated region
      $region61: #{tpu_custom_call.1} parent=5 // pred_check
        %p413 = pneg %p412
      $region62: #{tpu_custom_call.1} parent=5 // pred_check_branch
        %415 = sbr.rel (%p413) target = $region64
      $region63: #{tpu_custom_call.1} parent=5 // pred_region
        // Predicated region
        $region65: #{tpu_custom_call.1} parent=63 // pred_check
          %p416 = pneg %p47
        $region66: #{tpu_custom_call.1} parent=63 // pred_check_branch
          %418 = sbr.rel (%p416) target = $region68
        $region67: #{tpu_custom_call.1} parent=63 // pred_region
          %s419 = sand.u32 %s37, 1
          %s420 = scalar_lea.sflag [#allocation3], %s419
          %s421 = sand.u32 %s37, 1
          %s422 = smul.addr %s421, 64
          %s423 = scalar_lea.vmem [#allocation2], %s422
          %s424 = smul.u32 8, %s27
          %s426 = ssub.s32 1024, 1024
          %427 = vsyncadd %s420, %s426
          %s428 = smul.addr %s424, 128
          %s429 = scalar_lea.hbm %s0, %s428
          %s430 = sshll.u32 %s423, 4
          %s431 = int_to_ptr.vmem [resolvable:$true] %s430
          %436 = dma.hbm_to_vmem [thread:$0]  %s429, 1024, %s431, %s420, 128, 128, 8
        $region68: #{tpu_custom_call.1} parent=63 // pred_fallthru
          _
      $region64: #{tpu_custom_call.1} parent=5 // pred_fallthru
        _
      %p437 = scmp.le.s32.totalorder 1, %s27
      %p438 = scmp.lt.s32.totalorder %s27, 3
      %p439 = pnand %p437, %p438
      %p440 = pneg %p439
      // Predicated region
      $region69: #{tpu_custom_call.1} parent=5 // pred_check
        _
      $region70: #{tpu_custom_call.1} parent=5 // pred_check_branch
        %442 = sbr.rel (%p439) target = $region72
      $region71: #{tpu_custom_call.1} parent=5 // pred_region
        %s443 = ssub.s32 %s27, 1
        %s444 = sand.u32 %s40, 1
        %s445 = scalar_lea.sflag [#allocation3], %s444
        %s446 = sand.u32 %s40, 1
        %s447 = smul.addr %s446, 64
        %s448 = scalar_lea.vmem [#allocation2], %s447
        // Predicated region
        $region73: #{tpu_custom_call.1} parent=71 // pred_check
          %p449 = pneg %p53
        $region74: #{tpu_custom_call.1} parent=71 // pred_check_branch
          %451 = sbr.rel (%p449) target = $region76
        $region75: #{tpu_custom_call.1} parent=71 // pred_region
          %452 = dma.done %s445, 1024
        $region76: #{tpu_custom_call.1} parent=71 // pred_fallthru
          _
        // Predicated region
        $region77: #{tpu_custom_call.1} parent=71 // pred_check
          %p453 = pneg %p74
        $region78: #{tpu_custom_call.1} parent=71 // pred_check_branch
          %455 = sbr.rel (%p453) target = $region80
        $region79: #{tpu_custom_call.1} parent=71 // pred_region
          %456 = dma.done [#allocation6], 2048
        $region80: #{tpu_custom_call.1} parent=71 // pred_fallthru
          _
        // Predicated region
        $region81: #{tpu_custom_call.1} parent=71 // pred_check
          %p457 = pneg %p116
        $region82: #{tpu_custom_call.1} parent=71 // pred_check_branch
          %459 = sbr.rel (%p457) target = $region84
        $region83: #{tpu_custom_call.1} parent=71 // pred_region
          %460 = dma.done [#allocation6], 2048
        $region84: #{tpu_custom_call.1} parent=71 // pred_fallthru
          _
        // Predicated region
        $region85: #{tpu_custom_call.1} parent=71 // pred_check
          %p461 = pneg %p284
        $region86: #{tpu_custom_call.1} parent=71 // pred_check_branch
          %463 = sbr.rel (%p461) target = $region88
        $region87: #{tpu_custom_call.1} parent=71 // pred_region
          %464 = dma.done [#allocation9], 2048
        $region88: #{tpu_custom_call.1} parent=71 // pred_fallthru
          _
        %s465 = sand.u32 %s40, 1
        %s466 = scalar_lea.sflag [#allocation3], %s465
        %s467 = sand.u32 %s40, 1
        %s468 = smul.addr %s467, 64
        %s469 = scalar_lea.vmem [#allocation2], %s468
        %p470 = pneg %p53
        %p471 = pneg %p50
        %p472 = pneg %p74
        %p473 = pneg %p71
        %p474 = pneg %p95
        %p475 = pneg %p92
        %p476 = pneg %p116
        %p477 = pneg %p113
        %p478 = pneg %p137
        %p479 = pneg %p134
        %p480 = pneg %p158
        %p481 = pneg %p155
        %p482 = pneg %p179
        %p483 = pneg %p176
        %p484 = pneg %p200
        %p485 = pneg %p197
        %p486 = pneg %p221
        %p487 = pneg %p218
        %p488 = pneg %p242
        %p489 = pneg %p239
        %p490 = pneg %p263
        %p491 = pneg %p260
        %p492 = pneg %p284
        %p493 = pneg %p281
        %p494 = pneg %p305
        %p495 = pneg %p302
        %p496 = pneg %p331
        %p497 = pneg %p328
        %s498 = sand.u32 %s318, 1
        %s499 = scalar_lea.sflag [#allocation4], %s498
        %s500 = sand.u32 %s318, 1
        %s501 = smul.addr %s500, 64
        %s502 = scalar_lea.vmem [#allocation10], %s501
        %s503 = smul.u32 8, %s32
        %s504 = smul.u32 8, %s32
        %v505 = vld [vmem:[%s2] sm:$0x1]
        %v506 = vld [vmem:[%s4] sm:$0x1]
        %v507 = vld [vmem:[%s5] sm:$0x1]
        %v508 = vld [vmem:[%s6] sm:$0x1]
        %v509 = vld [vmem:[%s7] sm:$0x1]
        %v510 = vld [vmem:[%s8] sm:$0x1]
        %v511 = vld [vmem:[%s9] sm:$0x1]
        %v512 = vld [vmem:[%s10] sm:$0x1]
        %v513 = vld [vmem:[%s12] sm:$0x1]
        %v514 = vld [vmem:[%s448] sm:$0xff]
        %v515 = vld [vmem:[%s448 + $0x8] sm:$0xff]
        %v516 = vld [vmem:[%s448 + $0x10] sm:$0xff]
        %v517 = vld [vmem:[%s448 + $0x18] sm:$0xff]
        %v518 = vld [vmem:[%s448 + $0x20] sm:$0xff]
        %v519 = vld [vmem:[%s448 + $0x28] sm:$0xff]
        %v520 = vld [vmem:[%s448 + $0x30] sm:$0xff]
        %v521 = vld [vmem:[%s448 + $0x38] sm:$0xff]
        %v522 = vld [vmem:[#allocation5] sm:$0xff]
        %v523 = vld [vmem:[#allocation5 + $0x8] sm:$0xff]
        %v524 = vld [vmem:[#allocation5 + $0x10] sm:$0xff]
        %v525 = vld [vmem:[#allocation5 + $0x18] sm:$0xff]
        %v526 = vld [vmem:[#allocation5 + $0x20] sm:$0xff]
        %v527 = vld [vmem:[#allocation5 + $0x28] sm:$0xff]
        %v528 = vld [vmem:[#allocation5 + $0x30] sm:$0xff]
        %v529 = vld [vmem:[#allocation5 + $0x38] sm:$0xff]
        %v530 = vld [vmem:[#allocation5 + $0x40] sm:$0xff]
        %v531 = vld [vmem:[#allocation5 + $0x48] sm:$0xff]
        %v532 = vld [vmem:[#allocation5 + $0x50] sm:$0xff]
        %v533 = vld [vmem:[#allocation5 + $0x58] sm:$0xff]
        %v534 = vld [vmem:[#allocation5 + $0x60] sm:$0xff]
        %v535 = vld [vmem:[#allocation5 + $0x68] sm:$0xff]
        %v536 = vld [vmem:[#allocation5 + $0x70] sm:$0xff]
        %v537 = vld [vmem:[#allocation5 + $0x78] sm:$0xff]
        %v539 = vlaneseq
        %v540 = vshrl.u32 %v539, 7
        %v541 = vsub.s32 0, %v540
        %v542 = vrot.slane %v505, %v541
        %544 = vmatprep.subr.mxu0 0.0
        %545 = vmatpush1.msra.mxu0 %v522
        %546 = vmatprep.subr.mxu0 0.0
        %547 = vmatpush1.msra.mxu0 %v523
        %548 = vmatprep.subr.mxu0 0.0
        %549 = vmatpush1.msra.mxu0 %v524
        %550 = vmatprep.subr.mxu0 0.0
        %551 = vmatpush1.msra.mxu0 %v525
        %552 = vmatprep.subr.mxu0 0.0
        %553 = vmatpush1.msra.mxu0 %v526
        %554 = vmatprep.subr.mxu0 0.0
        %555 = vmatpush1.msra.mxu0 %v527
        %556 = vmatprep.subr.mxu0 0.0
        %557 = vmatpush1.msra.mxu0 %v528
        %558 = vmatprep.subr.mxu0 0.0
        %559 = vmatpush1.msra.mxu0 %v529
        %560 = vmatprep.subr.mxu0 0.0
        %561 = vmatpush1.msra.mxu0 %v530
        %562 = vmatprep.subr.mxu0 0.0
        %563 = vmatpush1.msra.mxu0 %v531
        %564 = vmatprep.subr.mxu0 0.0
        %565 = vmatpush1.msra.mxu0 %v532
        %566 = vmatprep.subr.mxu0 0.0
        %567 = vmatpush1.msra.mxu0 %v533
        %568 = vmatprep.subr.mxu0 0.0
        %569 = vmatpush1.msra.mxu0 %v534
        %570 = vmatprep.subr.mxu0 0.0
        %571 = vmatpush1.msra.mxu0 %v535
        %572 = vmatprep.subr.mxu0 0.0
        %573 = vmatpush1.msra.mxu0 %v536
        %574 = vmatprep.subr.mxu0 0.0
        %575 = vmatpush1.msra.mxu0 %v537
        %576 = vmatprep.subr.mxu0 0.0
        %577 = vmatpush1.msra.mxu0 0.0
        %578 = vmatprep.subr.mxu0 0.0
        %579 = vmatpush1.msra.mxu0 0.0
        %580 = vmatprep.subr.mxu0 0.0
        %581 = vmatpush1.msra.mxu0 0.0
        %582 = vmatprep.subr.mxu0 0.0
        %583 = vmatpush1.msra.mxu0 0.0
        %584 = vmatprep.subr.mxu0 0.0
        %585 = vmatpush1.msra.mxu0 0.0
        %586 = vmatprep.subr.mxu0 0.0
        %587 = vmatpush1.msra.mxu0 0.0
        %588 = vmatprep.subr.mxu0 0.0
        %589 = vmatpush1.msra.mxu0 0.0
        %590 = vmatprep.subr.mxu0 0.0
        %591 = vmatpush1.msra.mxu0 0.0
        %592 = vmatprep.subr.mxu0 0.0
        %593 = vmatpush1.msra.mxu0 0.0
        %594 = vmatprep.subr.mxu0 0.0
        %595 = vmatpush1.msra.mxu0 0.0
        %596 = vmatprep.subr.mxu0 0.0
        %597 = vmatpush1.msra.mxu0 0.0
        %598 = vmatprep.subr.mxu0 0.0
        %599 = vmatpush1.msra.mxu0 0.0
        %600 = vmatprep.subr.mxu0 0.0
        %601 = vmatpush1.msra.mxu0 0.0
        %602 = vmatprep.subr.mxu0 0.0
        %603 = vmatpush1.msra.mxu0 0.0
        %604 = vmatprep.subr.mxu0 0.0
        %605 = vmatpush1.msra.mxu0 0.0
        %606 = vmatprep.subr.mxu0 0.0
        %607 = vmatpush1.msra.mxu0 0.0
        %608 = vmatprep.mubr.f32.mxu0 0.0
        %609 = vmatmul.mubr.f32.gmra.mrb[0].mxu0 %v514
        %v610 = vpop.f32.mrb[0].mxu0
        %v611 = vadd.f32 %v542, %v610
        %v612 = vpop.f32.mrb[0].mxu0
        %613 = vmatprep.mubr.f32.mxu0 0.0
        %614 = vmatmul.mubr.f32.gmra.mrb[0].mxu0 %v515
        %v615 = vpop.f32.mrb[0].mxu0
        %v616 = vadd.f32 %v542, %v615
        %v617 = vpop.f32.mrb[0].mxu0
        %618 = vmatprep.mubr.f32.mxu0 0.0
        %619 = vmatmul.mubr.f32.gmra.mrb[0].mxu0 %v516
        %v620 = vpop.f32.mrb[0].mxu0
        %v621 = vadd.f32 %v542, %v620
        %v622 = vpop.f32.mrb[0].mxu0
        %623 = vmatprep.mubr.f32.mxu0 0.0
        %624 = vmatmul.mubr.f32.gmra.mrb[0].mxu0 %v517
        %v625 = vpop.f32.mrb[0].mxu0
        %v626 = vadd.f32 %v542, %v625
        %v627 = vpop.f32.mrb[0].mxu0
        %628 = vmatprep.mubr.f32.mxu0 0.0
        %629 = vmatmul.mubr.f32.gmra.mrb[0].mxu0 %v518
        %v630 = vpop.f32.mrb[0].mxu0
        %v631 = vadd.f32 %v542, %v630
        %v632 = vpop.f32.mrb[0].mxu0
        %633 = vmatprep.mubr.f32.mxu0 0.0
        %634 = vmatmul.mubr.f32.gmra.mrb[0].mxu0 %v519
        %v635 = vpop.f32.mrb[0].mxu0
        %v636 = vadd.f32 %v542, %v635
        %v637 = vpop.f32.mrb[0].mxu0
        %638 = vmatprep.mubr.f32.mxu0 0.0
        %639 = vmatmul.mubr.f32.gmra.mrb[0].mxu0 %v520
        %v640 = vpop.f32.mrb[0].mxu0
        %v641 = vadd.f32 %v542, %v640
        %v642 = vpop.f32.mrb[0].mxu0
        %643 = vmatprep.mubr.f32.mxu0 0.0
        %644 = vmatmul.mubr.f32.gmra.mrb[0].mxu0 %v521
        %v645 = vpop.f32.mrb[0].mxu0
        %v646 = vadd.f32 %v542, %v645
        %v647 = vpop.f32.mrb[0].mxu0
        %648 = vdwg.mxu0
        %v649 = vld [vmem:[#allocation7] sm:$0xff]
        %v650 = vld [vmem:[#allocation7 + $0x8] sm:$0xff]
        %v651 = vld [vmem:[#allocation7 + $0x10] sm:$0xff]
        %v652 = vld [vmem:[#allocation7 + $0x18] sm:$0xff]
        %v653 = vld [vmem:[#allocation7 + $0x20] sm:$0xff]
        %v654 = vld [vmem:[#allocation7 + $0x28] sm:$0xff]
        %v655 = vld [vmem:[#allocation7 + $0x30] sm:$0xff]
        %v656 = vld [vmem:[#allocation7 + $0x38] sm:$0xff]
        %v657 = vld [vmem:[#allocation7 + $0x40] sm:$0xff]
        %v658 = vld [vmem:[#allocation7 + $0x48] sm:$0xff]
        %v659 = vld [vmem:[#allocation7 + $0x50] sm:$0xff]
        %v660 = vld [vmem:[#allocation7 + $0x58] sm:$0xff]
        %v661 = vld [vmem:[#allocation7 + $0x60] sm:$0xff]
        %v662 = vld [vmem:[#allocation7 + $0x68] sm:$0xff]
        %v663 = vld [vmem:[#allocation7 + $0x70] sm:$0xff]
        %v664 = vld [vmem:[#allocation7 + $0x78] sm:$0xff]
        %v666 = vlaneseq
        %v667 = vshrl.u32 %v666, 7
        %v668 = vsub.s32 0, %v667
        %v669 = vrot.slane %v506, %v668
        %671 = vmatprep.subr.mxu0 0.0
        %672 = vmatpush1.msra.mxu0 %v649
        %673 = vmatprep.subr.mxu0 0.0
        %674 = vmatpush1.msra.mxu0 %v650
        %675 = vmatprep.subr.mxu0 0.0
        %676 = vmatpush1.msra.mxu0 %v651
        %677 = vmatprep.subr.mxu0 0.0
        %678 = vmatpush1.msra.mxu0 %v652
        %679 = vmatprep.subr.mxu0 0.0
        %680 = vmatpush1.msra.mxu0 %v653
        %681 = vmatprep.subr.mxu0 0.0
        %682 = vmatpush1.msra.mxu0 %v654
        %683 = vmatprep.subr.mxu0 0.0
        %684 = vmatpush1.msra.mxu0 %v655
        %685 = vmatprep.subr.mxu0 0.0
        %686 = vmatpush1.msra.mxu0 %v656
        %687 = vmatprep.subr.mxu0 0.0
        %688 = vmatpush1.msra.mxu0 %v657
        %689 = vmatprep.subr.mxu0 0.0
        %690 = vmatpush1.msra.mxu0 %v658
        %691 = vmatprep.subr.mxu0 0.0
        %692 = vmatpush1.msra.mxu0 %v659
        %693 = vmatprep.subr.mxu0 0.0
        %694 = vmatpush1.msra.mxu0 %v660
        %695 = vmatprep.subr.mxu0 0.0
        %696 = vmatpush1.msra.mxu0 %v661
        %697 = vmatprep.subr.mxu0 0.0
        %698 = vmatpush1.msra.mxu0 %v662
        %699 = vmatprep.subr.mxu0 0.0
        %700 = vmatpush1.msra.mxu0 %v663
        %701 = vmatprep.subr.mxu0 0.0
        %702 = vmatpush1.msra.mxu0 %v664
        %703 = vmatprep.subr.mxu0 0.0
        %704 = vmatpush1.msra.mxu0 0.0
        %705 = vmatprep.subr.mxu0 0.0
        %706 = vmatpush1.msra.mxu0 0.0
        %707 = vmatprep.subr.mxu0 0.0
        %708 = vmatpush1.msra.mxu0 0.0
        %709 = vmatprep.subr.mxu0 0.0
        %710 = vmatpush1.msra.mxu0 0.0
        %711 = vmatprep.subr.mxu0 0.0
        %712 = vmatpush1.msra.mxu0 0.0
        %713 = vmatprep.subr.mxu0 0.0
        %714 = vmatpush1.msra.mxu0 0.0
        %715 = vmatprep.subr.mxu0 0.0
        %716 = vmatpush1.msra.mxu0 0.0
        %717 = vmatprep.subr.mxu0 0.0
        %718 = vmatpush1.msra.mxu0 0.0
        %719 = vmatprep.subr.mxu0 0.0
        %720 = vmatpush1.msra.mxu0 0.0
        %721 = vmatprep.subr.mxu0 0.0
        %722 = vmatpush1.msra.mxu0 0.0
        %723 = vmatprep.subr.mxu0 0.0
        %724 = vmatpush1.msra.mxu0 0.0
        %725 = vmatprep.subr.mxu0 0.0
        %726 = vmatpush1.msra.mxu0 0.0
        %727 = vmatprep.subr.mxu0 0.0
        %728 = vmatpush1.msra.mxu0 0.0
        %729 = vmatprep.subr.mxu0 0.0
        %730 = vmatpush1.msra.mxu0 0.0
        %731 = vmatprep.subr.mxu0 0.0
        %732 = vmatpush1.msra.mxu0 0.0
        %733 = vmatprep.subr.mxu0 0.0
        %734 = vmatpush1.msra.mxu0 0.0
        %735 = vmatprep.mubr.f32.mxu0 0.0
        %736 = vmatmul.mubr.f32.gmra.mrb[0].mxu0 %v611
        %v737 = vpop.f32.mrb[0].mxu0
        %v738 = vadd.f32 %v669, %v737
        %v739 = vpop.f32.mrb[0].mxu0
        %740 = vmatprep.mubr.f32.mxu0 0.0
        %741 = vmatmul.mubr.f32.gmra.mrb[0].mxu0 %v616
        %v742 = vpop.f32.mrb[0].mxu0
        %v743 = vadd.f32 %v669, %v742
        %v744 = vpop.f32.mrb[0].mxu0
        %745 = vmatprep.mubr.f32.mxu0 0.0
        %746 = vmatmul.mubr.f32.gmra.mrb[0].mxu0 %v621
        %v747 = vpop.f32.mrb[0].mxu0
        %v748 = vadd.f32 %v669, %v747
        %v749 = vpop.f32.mrb[0].mxu0
        %750 = vmatprep.mubr.f32.mxu0 0.0
        %751 = vmatmul.mubr.f32.gmra.mrb[0].mxu0 %v626
        %v752 = vpop.f32.mrb[0].mxu0
        %v753 = vadd.f32 %v669, %v752
        %v754 = vpop.f32.mrb[0].mxu0
        %755 = vmatprep.mubr.f32.mxu0 0.0
        %756 = vmatmul.mubr.f32.gmra.mrb[0].mxu0 %v631
        %v757 = vpop.f32.mrb[0].mxu0
        %v758 = vadd.f32 %v669, %v757
        %v759 = vpop.f32.mrb[0].mxu0
        %760 = vmatprep.mubr.f32.mxu0 0.0
        %761 = vmatmul.mubr.f32.gmra.mrb[0].mxu0 %v636
        %v762 = vpop.f32.mrb[0].mxu0
        %v763 = vadd.f32 %v669, %v762
        %v764 = vpop.f32.mrb[0].mxu0
        %765 = vmatprep.mubr.f32.mxu0 0.0
        %766 = vmatmul.mubr.f32.gmra.mrb[0].mxu0 %v641
        %v767 = vpop.f32.mrb[0].mxu0
        %v768 = vadd.f32 %v669, %v767
        %v769 = vpop.f32.mrb[0].mxu0
        %770 = vmatprep.mubr.f32.mxu0 0.0
        %771 = vmatmul.mubr.f32.gmra.mrb[0].mxu0 %v646
        %v772 = vpop.f32.mrb[0].mxu0
        %v773 = vadd.f32 %v669, %v772
        %v774 = vpop.f32.mrb[0].mxu0
        %775 = vdwg.mxu0
        %v776 = vadd.f32 %v738, %v611
        %v777 = vadd.f32 %v743, %v616
        %v778 = vadd.f32 %v748, %v621
        %v779 = vadd.f32 %v753, %v626
        %v780 = vadd.f32 %v758, %v631
        %v781 = vadd.f32 %v763, %v636
        %v782 = vadd.f32 %v768, %v641
        %v783 = vadd.f32 %v773, %v646
        %784 = vadd.xlane.f32.xlu0 %v776
        %v785 = vpop.xlane.xlu0 %784
        %786 = vadd.xlane.f32.xlu0 %v777
        %v787 = vpop.xlane.xlu0 %786
        %788 = vadd.xlane.f32.xlu0 %v778
        %v789 = vpop.xlane.xlu0 %788
        %790 = vadd.xlane.f32.xlu0 %v779
        %v791 = vpop.xlane.xlu0 %790
        %792 = vadd.xlane.f32.xlu0 %v780
        %v793 = vpop.xlane.xlu0 %792
        %794 = vadd.xlane.f32.xlu0 %v781
        %v795 = vpop.xlane.xlu0 %794
        %796 = vadd.xlane.f32.xlu0 %v782
        %v797 = vpop.xlane.xlu0 %796
        %798 = vadd.xlane.f32.xlu0 %v783
        %v799 = vpop.xlane.xlu0 %798
        %v800 = vrcp.pop 128.0
        %v801 = vmul.f32 %v785, %v800
        %v802 = vmul.f32 %v787, %v800
        %v803 = vmul.f32 %v789, %v800
        %v804 = vmul.f32 %v791, %v800
        %v805 = vmul.f32 %v793, %v800
        %v806 = vmul.f32 %v795, %v800
        %v807 = vmul.f32 %v797, %v800
        %v808 = vmul.f32 %v799, %v800
        %v809 = vsub.f32 %v776, %v801
        %v810 = vsub.f32 %v777, %v802
        %v811 = vsub.f32 %v778, %v803
        %v812 = vsub.f32 %v779, %v804
        %v813 = vsub.f32 %v780, %v805
        %v814 = vsub.f32 %v781, %v806
        %v815 = vsub.f32 %v782, %v807
        %v816 = vsub.f32 %v783, %v808
        %v817 = vmul.f32 %v809, %v809
        %v818 = vmul.f32 %v810, %v810
        %v819 = vmul.f32 %v811, %v811
        %v820 = vmul.f32 %v812, %v812
        %v821 = vmul.f32 %v813, %v813
        %v822 = vmul.f32 %v814, %v814
        %v823 = vmul.f32 %v815, %v815
        %v824 = vmul.f32 %v816, %v816
        %825 = vadd.xlane.f32.xlu0 %v817
        %v826 = vpop.xlane.xlu0 %825
        %827 = vadd.xlane.f32.xlu0 %v818
        %v828 = vpop.xlane.xlu0 %827
        %829 = vadd.xlane.f32.xlu0 %v819
        %v830 = vpop.xlane.xlu0 %829
        %831 = vadd.xlane.f32.xlu0 %v820
        %v832 = vpop.xlane.xlu0 %831
        %833 = vadd.xlane.f32.xlu0 %v821
        %v834 = vpop.xlane.xlu0 %833
        %835 = vadd.xlane.f32.xlu0 %v822
        %v836 = vpop.xlane.xlu0 %835
        %837 = vadd.xlane.f32.xlu0 %v823
        %v838 = vpop.xlane.xlu0 %837
        %839 = vadd.xlane.f32.xlu0 %v824
        %v840 = vpop.xlane.xlu0 %839
        %v841 = vmul.f32 %v826, %v800
        %v842 = vmul.f32 %v828, %v800
        %v843 = vmul.f32 %v830, %v800
        %v844 = vmul.f32 %v832, %v800
        %v845 = vmul.f32 %v834, %v800
        %v846 = vmul.f32 %v836, %v800
        %v847 = vmul.f32 %v838, %v800
        %v848 = vmul.f32 %v840, %v800
        %v849 = vadd.f32 %v841, 1e-05
        %v850 = vadd.f32 %v842, 1e-05
        %v851 = vadd.f32 %v843, 1e-05
        %v852 = vadd.f32 %v844, 1e-05
        %v853 = vadd.f32 %v845, 1e-05
        %v854 = vadd.f32 %v846, 1e-05
        %v855 = vadd.f32 %v847, 1e-05
        %v856 = vadd.f32 %v848, 1e-05
        %v857 = vrsqrt.pop %v849
        %v858 = vrsqrt.pop %v850
        %v859 = vrsqrt.pop %v851
        %v860 = vrsqrt.pop %v852
        %v861 = vrsqrt.pop %v853
        %v862 = vrsqrt.pop %v854
        %v863 = vrsqrt.pop %v855
        %v864 = vrsqrt.pop %v856
        %v865 = vmul.f32 %v809, %v857
        %v866 = vmul.f32 %v810, %v858
        %v867 = vmul.f32 %v811, %v859
        %v868 = vmul.f32 %v812, %v860
        %v869 = vmul.f32 %v813, %v861
        %v870 = vmul.f32 %v814, %v862
        %v871 = vmul.f32 %v815, %v863
        %v872 = vmul.f32 %v816, %v864
        %v874 = vlaneseq
        %v875 = vshrl.u32 %v874, 7
        %v876 = vsub.s32 0, %v875
        %v877 = vrot.slane %v507, %v876
        %v879 = vmul.f32 %v865, %v877
        %v880 = vmul.f32 %v866, %v877
        %v881 = vmul.f32 %v867, %v877
        %v882 = vmul.f32 %v868, %v877
        %v883 = vmul.f32 %v869, %v877
        %v884 = vmul.f32 %v870, %v877
        %v885 = vmul.f32 %v871, %v877
        %v886 = vmul.f32 %v872, %v877
        %v888 = vlaneseq
        %v889 = vshrl.u32 %v888, 7
        %v890 = vsub.s32 0, %v889
        %v891 = vrot.slane %v508, %v890
        %v893 = vadd.f32 %v879, %v891
        %v894 = vadd.f32 %v880, %v891
        %v895 = vadd.f32 %v881, %v891
        %v896 = vadd.f32 %v882, %v891
        %v897 = vadd.f32 %v883, %v891
        %v898 = vadd.f32 %v884, %v891
        %v899 = vadd.f32 %v885, %v891
        %v900 = vadd.f32 %v886, %v891
        %v901 = vadd.f32 %v893, %v611
        %v902 = vadd.f32 %v894, %v616
        %v903 = vadd.f32 %v895, %v621
        %v904 = vadd.f32 %v896, %v626
        %v905 = vadd.f32 %v897, %v631
        %v906 = vadd.f32 %v898, %v636
        %v907 = vadd.f32 %v899, %v641
        %v908 = vadd.f32 %v900, %v646
        %909 = vadd.xlane.f32.xlu0 %v901
        %v910 = vpop.xlane.xlu0 %909
        %911 = vadd.xlane.f32.xlu0 %v902
        %v912 = vpop.xlane.xlu0 %911
        %913 = vadd.xlane.f32.xlu0 %v903
        %v914 = vpop.xlane.xlu0 %913
        %915 = vadd.xlane.f32.xlu0 %v904
        %v916 = vpop.xlane.xlu0 %915
        %917 = vadd.xlane.f32.xlu0 %v905
        %v918 = vpop.xlane.xlu0 %917
        %919 = vadd.xlane.f32.xlu0 %v906
        %v920 = vpop.xlane.xlu0 %919
        %921 = vadd.xlane.f32.xlu0 %v907
        %v922 = vpop.xlane.xlu0 %921
        %923 = vadd.xlane.f32.xlu0 %v908
        %v924 = vpop.xlane.xlu0 %923
        %v925 = vmul.f32 %v910, %v800
        %v926 = vmul.f32 %v912, %v800
        %v927 = vmul.f32 %v914, %v800
        %v928 = vmul.f32 %v916, %v800
        %v929 = vmul.f32 %v918, %v800
        %v930 = vmul.f32 %v920, %v800
        %v931 = vmul.f32 %v922, %v800
        %v932 = vmul.f32 %v924, %v800
        %v933 = vsub.f32 %v901, %v925
        %v934 = vsub.f32 %v902, %v926
        %v935 = vsub.f32 %v903, %v927
        %v936 = vsub.f32 %v904, %v928
        %v937 = vsub.f32 %v905, %v929
        %v938 = vsub.f32 %v906, %v930
        %v939 = vsub.f32 %v907, %v931
        %v940 = vsub.f32 %v908, %v932
        %v941 = vmul.f32 %v933, %v933
        %v942 = vmul.f32 %v934, %v934
        %v943 = vmul.f32 %v935, %v935
        %v944 = vmul.f32 %v936, %v936
        %v945 = vmul.f32 %v937, %v937
        %v946 = vmul.f32 %v938, %v938
        %v947 = vmul.f32 %v939, %v939
        %v948 = vmul.f32 %v940, %v940
        %949 = vadd.xlane.f32.xlu0 %v941
        %v950 = vpop.xlane.xlu0 %949
        %951 = vadd.xlane.f32.xlu0 %v942
        %v952 = vpop.xlane.xlu0 %951
        %953 = vadd.xlane.f32.xlu0 %v943
        %v954 = vpop.xlane.xlu0 %953
        %955 = vadd.xlane.f32.xlu0 %v944
        %v956 = vpop.xlane.xlu0 %955
        %957 = vadd.xlane.f32.xlu0 %v945
        %v958 = vpop.xlane.xlu0 %957
        %959 = vadd.xlane.f32.xlu0 %v946
        %v960 = vpop.xlane.xlu0 %959
        %961 = vadd.xlane.f32.xlu0 %v947
        %v962 = vpop.xlane.xlu0 %961
        %963 = vadd.xlane.f32.xlu0 %v948
        %v964 = vpop.xlane.xlu0 %963
        %v965 = vmul.f32 %v950, %v800
        %v966 = vmul.f32 %v952, %v800
        %v967 = vmul.f32 %v954, %v800
        %v968 = vmul.f32 %v956, %v800
        %v969 = vmul.f32 %v958, %v800
        %v970 = vmul.f32 %v960, %v800
        %v971 = vmul.f32 %v962, %v800
        %v972 = vmul.f32 %v964, %v800
        %v973 = vadd.f32 %v965, 1e-05
        %v974 = vadd.f32 %v966, 1e-05
        %v975 = vadd.f32 %v967, 1e-05
        %v976 = vadd.f32 %v968, 1e-05
        %v977 = vadd.f32 %v969, 1e-05
        %v978 = vadd.f32 %v970, 1e-05
        %v979 = vadd.f32 %v971, 1e-05
        %v980 = vadd.f32 %v972, 1e-05
        %v981 = vrsqrt.pop %v973
        %v982 = vrsqrt.pop %v974
        %v983 = vrsqrt.pop %v975
        %v984 = vrsqrt.pop %v976
        %v985 = vrsqrt.pop %v977
        %v986 = vrsqrt.pop %v978
        %v987 = vrsqrt.pop %v979
        %v988 = vrsqrt.pop %v980
        %v989 = vmul.f32 %v933, %v981
        %v990 = vmul.f32 %v934, %v982
        %v991 = vmul.f32 %v935, %v983
        %v992 = vmul.f32 %v936, %v984
        %v993 = vmul.f32 %v937, %v985
        %v994 = vmul.f32 %v938, %v986
        %v995 = vmul.f32 %v939, %v987
        %v996 = vmul.f32 %v940, %v988
        %v998 = vlaneseq
        %v999 = vshrl.u32 %v998, 7
        %v1000 = vsub.s32 0, %v999
        %v1001 = vrot.slane %v509, %v1000
        %v1003 = vmul.f32 %v989, %v1001
        %v1004 = vmul.f32 %v990, %v1001
        %v1005 = vmul.f32 %v991, %v1001
        %v1006 = vmul.f32 %v992, %v1001
        %v1007 = vmul.f32 %v993, %v1001
        %v1008 = vmul.f32 %v994, %v1001
        %v1009 = vmul.f32 %v995, %v1001
        %v1010 = vmul.f32 %v996, %v1001
        %v1012 = vlaneseq
        %v1013 = vshrl.u32 %v1012, 7
        %v1014 = vsub.s32 0, %v1013
        %v1015 = vrot.slane %v510, %v1014
        %v1017 = vadd.f32 %v1003, %v1015
        %v1018 = vadd.f32 %v1004, %v1015
        %v1019 = vadd.f32 %v1005, %v1015
        %v1020 = vadd.f32 %v1006, %v1015
        %v1021 = vadd.f32 %v1007, %v1015
        %v1022 = vadd.f32 %v1008, %v1015
        %v1023 = vadd.f32 %v1009, %v1015
        %v1024 = vadd.f32 %v1010, %v1015
        %v1025 = vadd.f32 %v1017, %v611
        %v1026 = vadd.f32 %v1018, %v616
        %v1027 = vadd.f32 %v1019, %v621
        %v1028 = vadd.f32 %v1020, %v626
        %v1029 = vadd.f32 %v1021, %v631
        %v1030 = vadd.f32 %v1022, %v636
        %v1031 = vadd.f32 %v1023, %v641
        %v1032 = vadd.f32 %v1024, %v646
        %1033 = vadd.xlane.f32.xlu0 %v1025
        %v1034 = vpop.xlane.xlu0 %1033
        %1035 = vadd.xlane.f32.xlu0 %v1026
        %v1036 = vpop.xlane.xlu0 %1035
        %1037 = vadd.xlane.f32.xlu0 %v1027
        %v1038 = vpop.xlane.xlu0 %1037
        %1039 = vadd.xlane.f32.xlu0 %v1028
        %v1040 = vpop.xlane.xlu0 %1039
        %1041 = vadd.xlane.f32.xlu0 %v1029
        %v1042 = vpop.xlane.xlu0 %1041
        %1043 = vadd.xlane.f32.xlu0 %v1030
        %v1044 = vpop.xlane.xlu0 %1043
        %1045 = vadd.xlane.f32.xlu0 %v1031
        %v1046 = vpop.xlane.xlu0 %1045
        %1047 = vadd.xlane.f32.xlu0 %v1032
        %v1048 = vpop.xlane.xlu0 %1047
        %v1049 = vmul.f32 %v1034, %v800
        %v1050 = vmul.f32 %v1036, %v800
        %v1051 = vmul.f32 %v1038, %v800
        %v1052 = vmul.f32 %v1040, %v800
        %v1053 = vmul.f32 %v1042, %v800
        %v1054 = vmul.f32 %v1044, %v800
        %v1055 = vmul.f32 %v1046, %v800
        %v1056 = vmul.f32 %v1048, %v800
        %v1057 = vsub.f32 %v1025, %v1049
        %v1058 = vsub.f32 %v1026, %v1050
        %v1059 = vsub.f32 %v1027, %v1051
        %v1060 = vsub.f32 %v1028, %v1052
        %v1061 = vsub.f32 %v1029, %v1053
        %v1062 = vsub.f32 %v1030, %v1054
        %v1063 = vsub.f32 %v1031, %v1055
        %v1064 = vsub.f32 %v1032, %v1056
        %v1065 = vmul.f32 %v1057, %v1057
        %v1066 = vmul.f32 %v1058, %v1058
        %v1067 = vmul.f32 %v1059, %v1059
        %v1068 = vmul.f32 %v1060, %v1060
        %v1069 = vmul.f32 %v1061, %v1061
        %v1070 = vmul.f32 %v1062, %v1062
        %v1071 = vmul.f32 %v1063, %v1063
        %v1072 = vmul.f32 %v1064, %v1064
        %1073 = vadd.xlane.f32.xlu0 %v1065
        %v1074 = vpop.xlane.xlu0 %1073
        %1075 = vadd.xlane.f32.xlu0 %v1066
        %v1076 = vpop.xlane.xlu0 %1075
        %1077 = vadd.xlane.f32.xlu0 %v1067
        %v1078 = vpop.xlane.xlu0 %1077
        %1079 = vadd.xlane.f32.xlu0 %v1068
        %v1080 = vpop.xlane.xlu0 %1079
        %1081 = vadd.xlane.f32.xlu0 %v1069
        %v1082 = vpop.xlane.xlu0 %1081
        %1083 = vadd.xlane.f32.xlu0 %v1070
        %v1084 = vpop.xlane.xlu0 %1083
        %1085 = vadd.xlane.f32.xlu0 %v1071
        %v1086 = vpop.xlane.xlu0 %1085
        %1087 = vadd.xlane.f32.xlu0 %v1072
        %v1088 = vpop.xlane.xlu0 %1087
        %v1089 = vmul.f32 %v1074, %v800
        %v1090 = vmul.f32 %v1076, %v800
        %v1091 = vmul.f32 %v1078, %v800
        %v1092 = vmul.f32 %v1080, %v800
        %v1093 = vmul.f32 %v1082, %v800
        %v1094 = vmul.f32 %v1084, %v800
        %v1095 = vmul.f32 %v1086, %v800
        %v1096 = vmul.f32 %v1088, %v800
        %v1097 = vadd.f32 %v1089, 1e-05
        %v1098 = vadd.f32 %v1090, 1e-05
        %v1099 = vadd.f32 %v1091, 1e-05
        %v1100 = vadd.f32 %v1092, 1e-05
        %v1101 = vadd.f32 %v1093, 1e-05
        %v1102 = vadd.f32 %v1094, 1e-05
        %v1103 = vadd.f32 %v1095, 1e-05
        %v1104 = vadd.f32 %v1096, 1e-05
        %v1105 = vrsqrt.pop %v1097
        %v1106 = vrsqrt.pop %v1098
        %v1107 = vrsqrt.pop %v1099
        %v1108 = vrsqrt.pop %v1100
        %v1109 = vrsqrt.pop %v1101
        %v1110 = vrsqrt.pop %v1102
        %v1111 = vrsqrt.pop %v1103
        %v1112 = vrsqrt.pop %v1104
        %v1113 = vmul.f32 %v1057, %v1105
        %v1114 = vmul.f32 %v1058, %v1106
        %v1115 = vmul.f32 %v1059, %v1107
        %v1116 = vmul.f32 %v1060, %v1108
        %v1117 = vmul.f32 %v1061, %v1109
        %v1118 = vmul.f32 %v1062, %v1110
        %v1119 = vmul.f32 %v1063, %v1111
        %v1120 = vmul.f32 %v1064, %v1112
        %v1122 = vlaneseq
        %v1123 = vshrl.u32 %v1122, 7
        %v1124 = vsub.s32 0, %v1123
        %v1125 = vrot.slane %v511, %v1124
        %v1127 = vmul.f32 %v1113, %v1125
        %v1128 = vmul.f32 %v1114, %v1125
        %v1129 = vmul.f32 %v1115, %v1125
        %v1130 = vmul.f32 %v1116, %v1125
        %v1131 = vmul.f32 %v1117, %v1125
        %v1132 = vmul.f32 %v1118, %v1125
        %v1133 = vmul.f32 %v1119, %v1125
        %v1134 = vmul.f32 %v1120, %v1125
        %v1136 = vlaneseq
        %v1137 = vshrl.u32 %v1136, 7
        %v1138 = vsub.s32 0, %v1137
        %v1139 = vrot.slane %v512, %v1138
        %v1141 = vadd.f32 %v1127, %v1139
        %v1142 = vadd.f32 %v1128, %v1139
        %v1143 = vadd.f32 %v1129, %v1139
        %v1144 = vadd.f32 %v1130, %v1139
        %v1145 = vadd.f32 %v1131, %v1139
        %v1146 = vadd.f32 %v1132, %v1139
        %v1147 = vadd.f32 %v1133, %v1139
        %v1148 = vadd.f32 %v1134, %v1139
        %v1149 = vadd.f32 %v1141, %v611
        %v1150 = vadd.f32 %v1142, %v616
        %v1151 = vadd.f32 %v1143, %v621
        %v1152 = vadd.f32 %v1144, %v626
        %v1153 = vadd.f32 %v1145, %v631
        %v1154 = vadd.f32 %v1146, %v636
        %v1155 = vadd.f32 %v1147, %v641
        %v1156 = vadd.f32 %v1148, %v646
        %v1157 = vmul.f32 %v1149, 0.5
        %v1158 = vmul.f32 %v1150, 0.5
        %v1159 = vmul.f32 %v1151, 0.5
        %v1160 = vmul.f32 %v1152, 0.5
        %v1161 = vmul.f32 %v1153, 0.5
        %v1162 = vmul.f32 %v1154, 0.5
        %v1163 = vmul.f32 %v1155, 0.5
        %v1164 = vmul.f32 %v1156, 0.5
        %v1165 = vmul.f32 %v1149, 0.70710677
        %v1166 = vmul.f32 %v1150, 0.70710677
        %v1167 = vmul.f32 %v1151, 0.70710677
        %v1168 = vmul.f32 %v1152, 0.70710677
        %v1169 = vmul.f32 %v1153, 0.70710677
        %v1170 = vmul.f32 %v1154, 0.70710677
        %v1171 = vmul.f32 %v1155, 0.70710677
        %v1172 = vmul.f32 %v1156, 0.70710677
        %v1173 = verf.f32.pop %v1165
        %v1174 = verf.f32.pop %v1166
        %v1175 = verf.f32.pop %v1167
        %v1176 = verf.f32.pop %v1168
        %v1177 = verf.f32.pop %v1169
        %v1178 = verf.f32.pop %v1170
        %v1179 = verf.f32.pop %v1171
        %v1180 = verf.f32.pop %v1172
        %v1181 = vadd.f32 %v1173, 1.0
        %v1182 = vadd.f32 %v1174, 1.0
        %v1183 = vadd.f32 %v1175, 1.0
        %v1184 = vadd.f32 %v1176, 1.0
        %v1185 = vadd.f32 %v1177, 1.0
        %v1186 = vadd.f32 %v1178, 1.0
        %v1187 = vadd.f32 %v1179, 1.0
        %v1188 = vadd.f32 %v1180, 1.0
        %v1189 = vmul.f32 %v1157, %v1181
        %v1190 = vmul.f32 %v1158, %v1182
        %v1191 = vmul.f32 %v1159, %v1183
        %v1192 = vmul.f32 %v1160, %v1184
        %v1193 = vmul.f32 %v1161, %v1185
        %v1194 = vmul.f32 %v1162, %v1186
        %v1195 = vmul.f32 %v1163, %v1187
        %v1196 = vmul.f32 %v1164, %v1188
        %v1197 = vld [vmem:[#allocation8] sm:$0xff]
        %v1198 = vld [vmem:[#allocation8 + $0x8] sm:$0xff]
        %v1199 = vld [vmem:[#allocation8 + $0x10] sm:$0xff]
        %v1200 = vld [vmem:[#allocation8 + $0x18] sm:$0xff]
        %v1201 = vld [vmem:[#allocation8 + $0x20] sm:$0xff]
        %v1202 = vld [vmem:[#allocation8 + $0x28] sm:$0xff]
        %v1203 = vld [vmem:[#allocation8 + $0x30] sm:$0xff]
        %v1204 = vld [vmem:[#allocation8 + $0x38] sm:$0xff]
        %v1205 = vld [vmem:[#allocation8 + $0x40] sm:$0xff]
        %v1206 = vld [vmem:[#allocation8 + $0x48] sm:$0xff]
        %v1207 = vld [vmem:[#allocation8 + $0x50] sm:$0xff]
        %v1208 = vld [vmem:[#allocation8 + $0x58] sm:$0xff]
        %v1209 = vld [vmem:[#allocation8 + $0x60] sm:$0xff]
        %v1210 = vld [vmem:[#allocation8 + $0x68] sm:$0xff]
        %v1211 = vld [vmem:[#allocation8 + $0x70] sm:$0xff]
        %v1212 = vld [vmem:[#allocation8 + $0x78] sm:$0xff]
        %v1214 = vlaneseq
        %v1215 = vshrl.u32 %v1214, 7
        %v1216 = vsub.s32 0, %v1215
        %v1217 = vrot.slane %v513, %v1216
        %1219 = vmatprep.subr.mxu0 0.0
        %1220 = vmatpush1.msra.mxu0 %v1197
        %1221 = vmatprep.subr.mxu0 0.0
        %1222 = vmatpush1.msra.mxu0 %v1198
        %1223 = vmatprep.subr.mxu0 0.0
        %1224 = vmatpush1.msra.mxu0 %v1199
        %1225 = vmatprep.subr.mxu0 0.0
        %1226 = vmatpush1.msra.mxu0 %v1200
        %1227 = vmatprep.subr.mxu0 0.0
        %1228 = vmatpush1.msra.mxu0 %v1201
        %1229 = vmatprep.subr.mxu0 0.0
        %1230 = vmatpush1.msra.mxu0 %v1202
        %1231 = vmatprep.subr.mxu0 0.0
        %1232 = vmatpush1.msra.mxu0 %v1203
        %1233 = vmatprep.subr.mxu0 0.0
        %1234 = vmatpush1.msra.mxu0 %v1204
        %1235 = vmatprep.subr.mxu0 0.0
        %1236 = vmatpush1.msra.mxu0 %v1205
        %1237 = vmatprep.subr.mxu0 0.0
        %1238 = vmatpush1.msra.mxu0 %v1206
        %1239 = vmatprep.subr.mxu0 0.0
        %1240 = vmatpush1.msra.mxu0 %v1207
        %1241 = vmatprep.subr.mxu0 0.0
        %1242 = vmatpush1.msra.mxu0 %v1208
        %1243 = vmatprep.subr.mxu0 0.0
        %1244 = vmatpush1.msra.mxu0 %v1209
        %1245 = vmatprep.subr.mxu0 0.0
        %1246 = vmatpush1.msra.mxu0 %v1210
        %1247 = vmatprep.subr.mxu0 0.0
        %1248 = vmatpush1.msra.mxu0 %v1211
        %1249 = vmatprep.subr.mxu0 0.0
        %1250 = vmatpush1.msra.mxu0 %v1212
        %1251 = vmatprep.subr.mxu0 0.0
        %1252 = vmatpush1.msra.mxu0 0.0
        %1253 = vmatprep.subr.mxu0 0.0
        %1254 = vmatpush1.msra.mxu0 0.0
        %1255 = vmatprep.subr.mxu0 0.0
        %1256 = vmatpush1.msra.mxu0 0.0
        %1257 = vmatprep.subr.mxu0 0.0
        %1258 = vmatpush1.msra.mxu0 0.0
        %1259 = vmatprep.subr.mxu0 0.0
        %1260 = vmatpush1.msra.mxu0 0.0
        %1261 = vmatprep.subr.mxu0 0.0
        %1262 = vmatpush1.msra.mxu0 0.0
        %1263 = vmatprep.subr.mxu0 0.0
        %1264 = vmatpush1.msra.mxu0 0.0
        %1265 = vmatprep.subr.mxu0 0.0
        %1266 = vmatpush1.msra.mxu0 0.0
        %1267 = vmatprep.subr.mxu0 0.0
        %1268 = vmatpush1.msra.mxu0 0.0
        %1269 = vmatprep.subr.mxu0 0.0
        %1270 = vmatpush1.msra.mxu0 0.0
        %1271 = vmatprep.subr.mxu0 0.0
        %1272 = vmatpush1.msra.mxu0 0.0
        %1273 = vmatprep.subr.mxu0 0.0
        %1274 = vmatpush1.msra.mxu0 0.0
        %1275 = vmatprep.subr.mxu0 0.0
        %1276 = vmatpush1.msra.mxu0 0.0
        %1277 = vmatprep.subr.mxu0 0.0
        %1278 = vmatpush1.msra.mxu0 0.0
        %1279 = vmatprep.subr.mxu0 0.0
        %1280 = vmatpush1.msra.mxu0 0.0
        %1281 = vmatprep.subr.mxu0 0.0
        %1282 = vmatpush1.msra.mxu0 0.0
        %1283 = vmatprep.mubr.f32.mxu0 0.0
        %1284 = vmatmul.mubr.f32.gmra.mrb[0].mxu0 %v1189
        %v1285 = vpop.f32.mrb[0].mxu0
        %v1286 = vadd.f32 %v1217, %v1285
        %v1287 = vpop.f32.mrb[0].mxu0
        %1288 = vmatprep.mubr.f32.mxu0 0.0
        %1289 = vmatmul.mubr.f32.gmra.mrb[0].mxu0 %v1190
        %v1290 = vpop.f32.mrb[0].mxu0
        %v1291 = vadd.f32 %v1217, %v1290
        %v1292 = vpop.f32.mrb[0].mxu0
        %1293 = vmatprep.mubr.f32.mxu0 0.0
        %1294 = vmatmul.mubr.f32.gmra.mrb[0].mxu0 %v1191
        %v1295 = vpop.f32.mrb[0].mxu0
        %v1296 = vadd.f32 %v1217, %v1295
        %v1297 = vpop.f32.mrb[0].mxu0
        %1298 = vmatprep.mubr.f32.mxu0 0.0
        %1299 = vmatmul.mubr.f32.gmra.mrb[0].mxu0 %v1192
        %v1300 = vpop.f32.mrb[0].mxu0
        %v1301 = vadd.f32 %v1217, %v1300
        %v1302 = vpop.f32.mrb[0].mxu0
        %1303 = vmatprep.mubr.f32.mxu0 0.0
        %1304 = vmatmul.mubr.f32.gmra.mrb[0].mxu0 %v1193
        %v1305 = vpop.f32.mrb[0].mxu0
        %v1306 = vadd.f32 %v1217, %v1305
        %v1307 = vpop.f32.mrb[0].mxu0
        %1308 = vmatprep.mubr.f32.mxu0 0.0
        %1309 = vmatmul.mubr.f32.gmra.mrb[0].mxu0 %v1194
        %v1310 = vpop.f32.mrb[0].mxu0
        %v1311 = vadd.f32 %v1217, %v1310
        %v1312 = vpop.f32.mrb[0].mxu0
        %1313 = vmatprep.mubr.f32.mxu0 0.0
        %1314 = vmatmul.mubr.f32.gmra.mrb[0].mxu0 %v1195
        %v1315 = vpop.f32.mrb[0].mxu0
        %v1316 = vadd.f32 %v1217, %v1315
        %v1317 = vpop.f32.mrb[0].mxu0
        %1318 = vmatprep.mubr.f32.mxu0 0.0
        %1319 = vmatmul.mubr.f32.gmra.mrb[0].mxu0 %v1196
        %v1320 = vpop.f32.mrb[0].mxu0
        %v1321 = vadd.f32 %v1217, %v1320
        %v1322 = vpop.f32.mrb[0].mxu0
        %1323 = vdwg.mxu0
        %1324 = vst [vmem:[%s502] sm:$0xff] %v1286
        %1325 = vst [vmem:[%s502 + $0x8] sm:$0xff] %v1291
        %1326 = vst [vmem:[%s502 + $0x10] sm:$0xff] %v1296
        %1327 = vst [vmem:[%s502 + $0x18] sm:$0xff] %v1301
        %1328 = vst [vmem:[%s502 + $0x20] sm:$0xff] %v1306
        %1329 = vst [vmem:[%s502 + $0x28] sm:$0xff] %v1311
        %1330 = vst [vmem:[%s502 + $0x30] sm:$0xff] %v1316
        %1331 = vst [vmem:[%s502 + $0x38] sm:$0xff] %v1321
        %s1332 = sand.u32 %s318, 1
        %s1333 = scalar_lea.sflag [#allocation4], %s1332
        %s1334 = sand.u32 %s318, 1
        %s1335 = smul.addr %s1334, 64
        %s1336 = scalar_lea.vmem [#allocation10], %s1335
        // Predicated region
        $region89: #{tpu_custom_call.1} parent=71 // pred_check
          %p1337 = pneg %p328
        $region90: #{tpu_custom_call.1} parent=71 // pred_check_branch
          %1339 = sbr.rel (%p1337) target = $region92
        $region91: #{tpu_custom_call.1} parent=71 // pred_region
          %s1340 = smul.u32 8, %s32
          %s1342 = ssub.s32 1024, 1024
          %1343 = vsyncadd %s1333, %s1342
          %s1344 = smul.addr %s1340, 128
          %s1345 = scalar_lea.hbm %s13, %s1344
          %s1346 = sshll.u32 %s1336, 4
          %s1347 = int_to_ptr.vmem [resolvable:$true] %s1346
          %1352 = dma.vmem_to_hbm [thread:$0]  %s1347, 1024, %s1345, %s1333, 128, 128, 8
        $region92: #{tpu_custom_call.1} parent=71 // pred_fallthru
          _
      $region72: #{tpu_custom_call.1} parent=5 // pred_fallthru
        _
      %p1353 = scmp.le.s32.totalorder 2, %s27
      // Predicated region
      $region93: #{tpu_custom_call.1} parent=5 // pred_check
        %p1354 = pneg %p1353
      $region94: #{tpu_custom_call.1} parent=5 // pred_check_branch
        %1356 = sbr.rel (%p1354) target = $region96
      $region95: #{tpu_custom_call.1} parent=5 // pred_region
        %s1357 = ssub.s32 %s27, 2
        // Predicated region
        $region97: #{tpu_custom_call.1} parent=95 // pred_check
          %p1358 = pneg %p334
        $region98: #{tpu_custom_call.1} parent=95 // pred_check_branch
          %1360 = sbr.rel (%p1358) target = $region100
        $region99: #{tpu_custom_call.1} parent=95 // pred_region
          %s1361 = sand.u32 %s319, 1
          %s1362 = scalar_lea.sflag [#allocation4], %s1361
          %s1363 = sand.u32 %s319, 1
          %s1364 = smul.addr %s1363, 64
          %s1365 = scalar_lea.vmem [#allocation10], %s1364
          %1366 = dma.done %s1362, 1024
        $region100: #{tpu_custom_call.1} parent=95 // pred_fallthru
          _
      $region96: #{tpu_custom_call.1} parent=5 // pred_fallthru
        _
    $region6: #{tpu_custom_call.1} parent=1 // loop_footer
      %s31 = sadd.s32 1, %s27
    $region7: #{tpu_custom_call.1} parent=1 // loop_footer_branch
      %26 = sbr.rel target = $region3
    $region8: #{tpu_custom_call.1} parent=1 // loop_exit
      _
    %1367 = vsyncpa [#allocation3], 1
    %s1368 = scalar_lea.sflag [#allocation3], 1
    %1369 = vsyncpa %s1368, 1
    %1370 = vsyncpa [#allocation6], 1
    %1371 = vsyncpa [#allocation9], 1
    %1372 = vsyncpa [#allocation4], 1
    %s1373 = scalar_lea.sflag [#allocation4], 1
    %1374 = vsyncpa %s1373, 1

</llo_original>
